<compile_context>
chip_gen: v7x
topology: tpu7x:2x2x1
jax: 0.10.0
libtpu: 0.0.40
codegen_flags: <defaults>
</compile_context>

<pallas_src>
import functools

import jax
import jax.numpy as jnp
from jax.experimental import pallas as pl
from jax.experimental.pallas import tpu as pltpu

SCALE = 0.5 ** 0.5  # _ResLayer.scale


# ----------------------------------------------------------------------------
# Fused kernel: reduce_channels + all residual layers, one invocation.
# ----------------------------------------------------------------------------
def _fused_resnet_kernel(x_ref, wred_ref, bred_ref, wc1_ref, wmc_ref, bmc_ref,
                         wf1_ref, bf1_ref, wf2_ref, bf2_ref,
                         out_ref, xp_ref, col_ref,
                         *, N, Tt, Ts, mid, k, dilations, pad_max, add_up_scale):
    M = N * Tt * Ts

    # reduce_channels Linear + add_up initialization (one matmul over all rows).
    x = (jnp.dot(x_ref[...], wred_ref[...], preferred_element_type=jnp.float32)
         + bred_ref[...])                                   # (M, C)
    add_up = add_up_scale * x

    # Zero the padded conv staging buffer ONCE.  Every layer overwrites the same
    # interior window [pad_max:pad_max+Tt, pad_max:pad_max+Ts]; the margins are
    # never written, so they stay zero for every dilation used below.
    xp_ref[...] = jnp.zeros(xp_ref.shape, xp_ref.dtype)

    # Static unroll over layers -> all slice offsets below are compile-time ints.
    for layer, d in enumerate(dilations):
        # conv1: 1x1 conv == per-position matmul C -> mid (bias=False).
        h = jnp.dot(x, wc1_ref[layer], preferred_element_type=jnp.float32)  # (M, mid)
        xp_ref[:, pad_max:pad_max + Tt, pad_max:pad_max + Ts, :] = (
            h.reshape(N, Tt, Ts, mid))

        # im2col of the (k//2+1) x k target-causal dilated taps -> one MXU matmul.
        for kh in range(k // 2 + 1):
            r0 = pad_max - d + kh * d
            for kw in range(k):
                c0 = pad_max - d + kw * d
                t = kh * k + kw
                col_ref[:, t * mid:(t + 1) * mid] = (
                    xp_ref[:, r0:r0 + Tt, c0:c0 + Ts, :].reshape(M, mid))
        acc = (jnp.dot(col_ref[...], wmc_ref[layer],
                       preferred_element_type=jnp.float32) + bmc_ref[layer])

        # First residual connection.
        xm = SCALE * (acc + x)

        # FFN: fc1 -> relu -> fc2.
        h1 = jnp.maximum(
            jnp.dot(xm, wf1_ref[layer], preferred_element_type=jnp.float32)
            + bf1_ref[layer], 0.0)
        h2 = (jnp.dot(h1, wf2_ref[layer], preferred_element_type=jnp.float32)
              + bf2_ref[layer])

        # Second residual connection.
        x = SCALE * (h2 + xm)
        add_up = add_up + add_up_scale * x

    out_ref[...] = add_up


# ----------------------------------------------------------------------------
# Wrapper
# ----------------------------------------------------------------------------
def dilated_resnet2_forward(x, params, cfg):
    N, Tt, Ts, C_in = x.shape
    k = cfg['kernel_size']
    L = cfg['num_layers']
    aus = cfg['add_up_scale']
    dilations = tuple(1 + i % 3 for i in range(L))   # source/target dilation pattern
    pad_max = max(dilations) * (k - 1) // 2
    n_taps = (k // 2 + 1) * k

    if params.get('reduce') is not None:
        w_red, b_red = params['reduce']
    else:  # divide_channels == 1: identity "reduce" keeps the same math
        w_red = jnp.eye(C_in, dtype=jnp.float32)
        b_red = jnp.zeros((1, C_in), jnp.float32)
    C = w_red.shape[1]
    mid = params['layers'][0]['w_conv1'].shape[1]

    # Stack per-layer weights: one array (one DMA) per tensor type.
    Wc1 = jnp.stack([p['w_conv1'] for p in params['layers']])                      # (L, C, mid)
    Wmc = jnp.stack([p['w_mconv'].reshape(n_taps * mid, C)
                     for p in params['layers']])                                   # (L, n_taps*mid, C)
    Bmc = jnp.stack([p['b_mconv'] for p in params['layers']])                      # (L, 1, C)
    Wf1 = jnp.stack([p['w_fc1'] for p in params['layers']])                        # (L, C, ffn)
    Bf1 = jnp.stack([p['b_fc1'] for p in params['layers']])                        # (L, 1, ffn)
    Wf2 = jnp.stack([p['w_fc2'] for p in params['layers']])                        # (L, ffn, C)
    Bf2 = jnp.stack([p['b_fc2'] for p in params['layers']])                        # (L, 1, C)

    M = N * Tt * Ts
    kernel = functools.partial(
        _fused_resnet_kernel, N=N, Tt=Tt, Ts=Ts, mid=mid, k=k,
        dilations=dilations, pad_max=pad_max, add_up_scale=aus)

    out = pl.pallas_call(
        kernel,
        out_shape=jax.ShapeDtypeStruct((M, C), jnp.float32),
        scratch_shapes=[
            # padded conv staging buffer, sized for the maximum dilation
            pltpu.VMEM((N, Tt + pad_max, Ts + 2 * pad_max, mid), jnp.float32),
            # im2col matrix: (M, n_taps * mid)
            pltpu.VMEM((M, n_taps * mid), jnp.float32),
        ],
    )(x.reshape(M, C_in), w_red, b_red, Wc1, Wmc, Bmc, Wf1, Bf1, Wf2, Bf2)
    return out.reshape(N, Tt, Ts, C)


# ----------------------------------------------------------------------------
# Pure-JAX reference (same math, for a sanity check)
# ----------------------------------------------------------------------------
def ref_forward(x, params, cfg):
    k = cfg['kernel_size']
    aus = cfg['add_up_scale']
    w, b = params['reduce']
    N, Tt, Ts, Cin = x.shape
    C = w.shape[1]
    x = (x.reshape(-1, Cin) @ w + b).reshape(N, Tt, Ts, C)
    add_up = aus * x
    for i, p in enumerate(params['layers']):
        d = 1 + i % 3
        pad_t = d * (k - 1) // 2
        pad_s = d * (k - 1) // 2
        residual = x
        h = jnp.einsum('ntsc,cm->ntsm', x, p['w_conv1'])
        hp = jnp.pad(h, ((0, 0), (pad_t, 0), (pad_s, pad_s), (0, 0)))
        acc = jnp.zeros((N, Tt, Ts, C), jnp.float32)
        for kh in range(k // 2 + 1):
            for kw in range(k):
                acc = acc + jnp.einsum(
                    'ntsm,mc->ntsc',
                    hp[:, kh * d:kh * d + Tt, kw * d:kw * d + Ts, :],
                    p['w_mconv'][kh, kw])
        acc = acc + p['b_mconv'].reshape(1, 1, 1, C)
        xm = SCALE * (acc + residual)
        h1 = jax.nn.relu(jnp.einsum('ntsc,cf->ntsf', xm, p['w_fc1'])
                         + p['b_fc1'].reshape(1, 1, 1, -1))
        h2 = jnp.einsum('ntsf,fc->ntsc', h1, p['w_fc2']) + p['b_fc2'].reshape(1, 1, 1, C)
        x = SCALE * (h2 + xm)
        add_up = add_up + aus * x
    return add_up


# ----------------------------------------------------------------------------
# Deterministic parameter init (shapes per the module __init__)
# ----------------------------------------------------------------------------
def init_params(key, C_in, cfg):
    C = C_in // cfg['divide_channels']
    mid = cfg['reduce_dim']
    ffn = cfg['ffn_dim']
    k = cfg['kernel_size']
    n_kh = k // 2 + 1

    def xavier(kk, shape, fan_in, fan_out):
        lim = (6.0 / (fan_in + fan_out)) ** 0.5
        return jax.random.uniform(kk, shape, jnp.float32, -lim, lim)

    keys = jax.random.split(key, 1 + 5 * cfg['num_layers'])
    params = {
        'reduce': (xavier(keys[0], (C_in, C), C_in, C),
                   jnp.zeros((1, C), jnp.float32)),   # Linear bias init = 0
        'layers': [],
    }
    for i in range(cfg['num_layers']):
        ks = jax.random.split(keys[1 + i], 5)
        params['layers'].append(dict(
            w_conv1=xavier(ks[0], (C, mid), C, mid),                       # conv1 (bias=False)
            w_mconv=xavier(ks[1], (n_kh, k, mid, C), mid * k * k, C),      # causal taps only
            b_mconv=0.01 * jax.random.normal(ks[2], (1, C), jnp.float32),
            w_fc1=xavier(ks[3], (C, ffn), C, ffn),
            b_fc1=jnp.zeros((1, ffn), jnp.float32),
            w_fc2=xavier(ks[4], (ffn, C), ffn, C),
            b_fc2=jnp.zeros((1, C), jnp.float32),
        ))
    return params


if __name__ == "__main__":
    cfg = dict(num_layers=3, kernel_size=3, divide_channels=2, reduce_dim=16,
               ffn_dim=32, conv_stride=1, maintain_resolution=1,
               convolution_dropout=0.0)
    cfg['add_up_scale'] = 1.0 / (cfg['num_layers'] + 1)

    N, Tt, Ts, C_in = 2, 8, 8, 32   # Input: N, Tt, Ts, C
    key = jax.random.PRNGKey(0)
    kx, kp = jax.random.split(key)
    x = jax.random.normal(kx, (N, Tt, Ts, C_in), jnp.float32)
    params = init_params(kp, C_in, cfg)

    fwd = jax.jit(lambda xx, pp: dilated_resnet2_forward(xx, pp, cfg))
    out = jax.block_until_ready(fwd(x, params))

    ref = ref_forward(x, params, cfg)
    assert out.shape == (N, Tt, Ts, C_in // cfg['divide_channels']), out.shape
    max_err = float(jnp.max(jnp.abs(out - ref)))
    assert jnp.allclose(out, ref, atol=5e-4, rtol=5e-4), max_err
    print("KERNEL_OK")
</pallas_src>

<mosaic_0001>
module attributes {stable_mosaic.version = 11 : i64} {
  func.func @_fused_resnet_kernel(%arg0: memref<128x32xf32, #tpu.memory_space<vmem>>, %arg1: memref<32x16xf32, #tpu.memory_space<vmem>>, %arg2: memref<1x16xf32, #tpu.memory_space<vmem>>, %arg3: memref<3x16x16xf32, #tpu.memory_space<vmem>>, %arg4: memref<3x96x16xf32, #tpu.memory_space<vmem>>, %arg5: memref<3x1x16xf32, #tpu.memory_space<vmem>>, %arg6: memref<3x16x32xf32, #tpu.memory_space<vmem>>, %arg7: memref<3x1x32xf32, #tpu.memory_space<vmem>>, %arg8: memref<3x32x16xf32, #tpu.memory_space<vmem>>, %arg9: memref<3x1x16xf32, #tpu.memory_space<vmem>>, %arg10: memref<128x16xf32, #tpu.memory_space<vmem>>, %arg11: memref<2x11x14x16xf32, #tpu.memory_space<vmem>>, %arg12: memref<128x96xf32, #tpu.memory_space<vmem>>) attributes {dimension_semantics = [], scalar_prefetch = 0 : i64, scratch_operands = 2 : i64, tpu.core_type = #tpu.core_type<tc>} {
    %c0 = arith.constant 0 : index
    %c0_0 = arith.constant 0 : index
    %0 = vector.load %arg0[%c0, %c0_0] : memref<128x32xf32, #tpu.memory_space<vmem>>, vector<128x32xf32>
    %c0_1 = arith.constant 0 : index
    %c0_2 = arith.constant 0 : index
    %1 = vector.load %arg1[%c0_1, %c0_2] : memref<32x16xf32, #tpu.memory_space<vmem>>, vector<32x16xf32>
    %cst = arith.constant dense<0.000000e+00> : vector<128x16xf32>
    %2 = tpu.matmul %0, %1, %cst {dimension_numbers = #tpu.dot_dimension_numbers<[1], [0], [0], [1], [0, 0, 1, 1], [], []>} : vector<128x32xf32>, vector<32x16xf32>, vector<128x16xf32> -> vector<128x16xf32>
    %c0_3 = arith.constant 0 : index
    %c0_4 = arith.constant 0 : index
    %3 = vector.load %arg2[%c0_3, %c0_4] : memref<1x16xf32, #tpu.memory_space<vmem>>, vector<1x16xf32>
    %4 = vector.broadcast %3 : vector<1x16xf32> to vector<128x16xf32>
    %5 = arith.addf %2, %4 : vector<128x16xf32>
    %cst_5 = arith.constant 2.500000e-01 : f32
    %6 = vector.broadcast %cst_5 : f32 to vector<128x16xf32>
    %7 = arith.mulf %6, %5 : vector<128x16xf32>
    %cst_6 = arith.constant 0.000000e+00 : f32
    %8 = vector.broadcast %cst_6 : f32 to vector<2x11x14x16xf32>
    %c0_7 = arith.constant 0 : index
    %c0_8 = arith.constant 0 : index
    %c0_9 = arith.constant 0 : index
    %c0_10 = arith.constant 0 : index
    %9 = vector.load %arg11[%c0_7, %c0_8, %c0_9, %c0_10] : memref<2x11x14x16xf32, #tpu.memory_space<vmem>>, vector<2x11x14x16xf32>
    tpu.vector_store %arg11[%c0_7, %c0_8, %c0_9, %c0_10], %8 {strides = array<i32>} : memref<2x11x14x16xf32, #tpu.memory_space<vmem>>, vector<2x11x14x16xf32>,
    %c0_11 = arith.constant 0 : index
    %c0_12 = arith.constant 0 : index
    %c0_13 = arith.constant 0 : index
    %10 = vector.load %arg3[%c0_11, %c0_12, %c0_13] : memref<3x16x16xf32, #tpu.memory_space<vmem>>, vector<1x16x16xf32>
    %11 = vector.shape_cast %10 : vector<1x16x16xf32> to vector<16x16xf32>
    %cst_14 = arith.constant dense<0.000000e+00> : vector<128x16xf32>
    %12 = tpu.matmul %5, %11, %cst_14 {dimension_numbers = #tpu.dot_dimension_numbers<[1], [0], [0], [1], [0, 0, 1, 1], [], []>} : vector<128x16xf32>, vector<16x16xf32>, vector<128x16xf32> -> vector<128x16xf32>
    %13 = vector.shape_cast %12 : vector<128x16xf32> to vector<2x8x8x16xf32>
    %c0_15 = arith.constant 0 : index
    %c3 = arith.constant 3 : index
    %c3_16 = arith.constant 3 : index
    %c0_17 = arith.constant 0 : index
    %14 = vector.load %arg11[%c0_15, %c3, %c3_16, %c0_17] : memref<2x11x14x16xf32, #tpu.memory_space<vmem>>, vector<2x8x8x16xf32>
    tpu.vector_store %arg11[%c0_15, %c3, %c3_16, %c0_17], %13 {strides = array<i32>} : memref<2x11x14x16xf32, #tpu.memory_space<vmem>>, vector<2x8x8x16xf32>,
    %c0_18 = arith.constant 0 : index
    %c2 = arith.constant 2 : index
    %c2_19 = arith.constant 2 : index
    %c0_20 = arith.constant 0 : index
    %15 = vector.load %arg11[%c0_18, %c2, %c2_19, %c0_20] : memref<2x11x14x16xf32, #tpu.memory_space<vmem>>, vector<2x8x8x16xf32>
    %16 = vector.shape_cast %15 : vector<2x8x8x16xf32> to vector<128x16xf32>
    %c0_21 = arith.constant 0 : index
    %c0_22 = arith.constant 0 : index
    %17 = vector.load %arg12[%c0_21, %c0_22] : memref<128x96xf32, #tpu.memory_space<vmem>>, vector<128x16xf32>
    tpu.vector_store %arg12[%c0_21, %c0_22], %16 {strides = array<i32>} : memref<128x96xf32, #tpu.memory_space<vmem>>, vector<128x16xf32>,
    %c0_23 = arith.constant 0 : index
    %c2_24 = arith.constant 2 : index
    %c3_25 = arith.constant 3 : index
    %c0_26 = arith.constant 0 : index
    %18 = vector.load %arg11[%c0_23, %c2_24, %c3_25, %c0_26] : memref<2x11x14x16xf32, #tpu.memory_space<vmem>>, vector<2x8x8x16xf32>
    %19 = vector.shape_cast %18 : vector<2x8x8x16xf32> to vector<128x16xf32>
    %c0_27 = arith.constant 0 : index
    %c16 = arith.constant 16 : index
    %20 = vector.load %arg12[%c0_27, %c16] : memref<128x96xf32, #tpu.memory_space<vmem>>, vector<128x16xf32>
    tpu.vector_store %arg12[%c0_27, %c16], %19 {strides = array<i32>} : memref<128x96xf32, #tpu.memory_space<vmem>>, vector<128x16xf32>,
    %c0_28 = arith.constant 0 : index
    %c2_29 = arith.constant 2 : index
    %c4 = arith.constant 4 : index
    %c0_30 = arith.constant 0 : index
    %21 = vector.load %arg11[%c0_28, %c2_29, %c4, %c0_30] : memref<2x11x14x16xf32, #tpu.memory_space<vmem>>, vector<2x8x8x16xf32>
    %22 = vector.shape_cast %21 : vector<2x8x8x16xf32> to vector<128x16xf32>
    %c0_31 = arith.constant 0 : index
    %c32 = arith.constant 32 : index
    %23 = vector.load %arg12[%c0_31, %c32] : memref<128x96xf32, #tpu.memory_space<vmem>>, vector<128x16xf32>
    tpu.vector_store %arg12[%c0_31, %c32], %22 {strides = array<i32>} : memref<128x96xf32, #tpu.memory_space<vmem>>, vector<128x16xf32>,
    %c0_32 = arith.constant 0 : index
    %c3_33 = arith.constant 3 : index
    %c2_34 = arith.constant 2 : index
    %c0_35 = arith.constant 0 : index
    %24 = vector.load %arg11[%c0_32, %c3_33, %c2_34, %c0_35] : memref<2x11x14x16xf32, #tpu.memory_space<vmem>>, vector<2x8x8x16xf32>
    %25 = vector.shape_cast %24 : vector<2x8x8x16xf32> to vector<128x16xf32>
    %c0_36 = arith.constant 0 : index
    %c48 = arith.constant 48 : index
    %26 = vector.load %arg12[%c0_36, %c48] : memref<128x96xf32, #tpu.memory_space<vmem>>, vector<128x16xf32>
    tpu.vector_store %arg12[%c0_36, %c48], %25 {strides = array<i32>} : memref<128x96xf32, #tpu.memory_space<vmem>>, vector<128x16xf32>,
    %c0_37 = arith.constant 0 : index
    %c3_38 = arith.constant 3 : index
    %c3_39 = arith.constant 3 : index
    %c0_40 = arith.constant 0 : index
    %27 = vector.load %arg11[%c0_37, %c3_38, %c3_39, %c0_40] : memref<2x11x14x16xf32, #tpu.memory_space<vmem>>, vector<2x8x8x16xf32>
    %28 = vector.shape_cast %27 : vector<2x8x8x16xf32> to vector<128x16xf32>
    %c0_41 = arith.constant 0 : index
    %c64 = arith.constant 64 : index
    %29 = vector.load %arg12[%c0_41, %c64] : memref<128x96xf32, #tpu.memory_space<vmem>>, vector<128x16xf32>
    tpu.vector_store %arg12[%c0_41, %c64], %28 {strides = array<i32>} : memref<128x96xf32, #tpu.memory_space<vmem>>, vector<128x16xf32>,
    %c0_42 = arith.constant 0 : index
    %c3_43 = arith.constant 3 : index
    %c4_44 = arith.constant 4 : index
    %c0_45 = arith.constant 0 : index
    %30 = vector.load %arg11[%c0_42, %c3_43, %c4_44, %c0_45] : memref<2x11x14x16xf32, #tpu.memory_space<vmem>>, vector<2x8x8x16xf32>
    %31 = vector.shape_cast %30 : vector<2x8x8x16xf32> to vector<128x16xf32>
    %c0_46 = arith.constant 0 : index
    %c80 = arith.constant 80 : index
    %32 = vector.load %arg12[%c0_46, %c80] : memref<128x96xf32, #tpu.memory_space<vmem>>, vector<128x16xf32>
    tpu.vector_store %arg12[%c0_46, %c80], %31 {strides = array<i32>} : memref<128x96xf32, #tpu.memory_space<vmem>>, vector<128x16xf32>,
    %c0_47 = arith.constant 0 : index
    %c0_48 = arith.constant 0 : index
    %33 = vector.load %arg12[%c0_47, %c0_48] : memref<128x96xf32, #tpu.memory_space<vmem>>, vector<128x96xf32>
    %c0_49 = arith.constant 0 : index
    %c0_50 = arith.constant 0 : index
    %c0_51 = arith.constant 0 : index
    %34 = vector.load %arg4[%c0_49, %c0_50, %c0_51] : memref<3x96x16xf32, #tpu.memory_space<vmem>>, vector<1x96x16xf32>
    %35 = vector.shape_cast %34 : vector<1x96x16xf32> to vector<96x16xf32>
    %cst_52 = arith.constant dense<0.000000e+00> : vector<128x16xf32>
    %36 = tpu.matmul %33, %35, %cst_52 {dimension_numbers = #tpu.dot_dimension_numbers<[1], [0], [0], [1], [0, 0, 1, 1], [], []>} : vector<128x96xf32>, vector<96x16xf32>, vector<128x16xf32> -> vector<128x16xf32>
    %c0_53 = arith.constant 0 : index
    %c0_54 = arith.constant 0 : index
    %c0_55 = arith.constant 0 : index
    %37 = vector.load %arg5[%c0_53, %c0_54, %c0_55] : memref<3x1x16xf32, #tpu.memory_space<vmem>>, vector<1x1x16xf32>
    %38 = vector.shape_cast %37 : vector<1x1x16xf32> to vector<1x16xf32>
    %39 = vector.broadcast %38 : vector<1x16xf32> to vector<128x16xf32>
    %40 = arith.addf %36, %39 : vector<128x16xf32>
    %41 = arith.addf %40, %5 : vector<128x16xf32>
    %cst_56 = arith.constant 0.707106769 : f32
    %42 = vector.broadcast %cst_56 : f32 to vector<128x16xf32>
    %43 = arith.mulf %42, %41 : vector<128x16xf32>
    %c0_57 = arith.constant 0 : index
    %c0_58 = arith.constant 0 : index
    %c0_59 = arith.constant 0 : index
    %44 = vector.load %arg6[%c0_57, %c0_58, %c0_59] : memref<3x16x32xf32, #tpu.memory_space<vmem>>, vector<1x16x32xf32>
    %45 = vector.shape_cast %44 : vector<1x16x32xf32> to vector<16x32xf32>
    %cst_60 = arith.constant dense<0.000000e+00> : vector<128x32xf32>
    %46 = tpu.matmul %43, %45, %cst_60 {dimension_numbers = #tpu.dot_dimension_numbers<[1], [0], [0], [1], [0, 0, 1, 1], [], []>} : vector<128x16xf32>, vector<16x32xf32>, vector<128x32xf32> -> vector<128x32xf32>
    %c0_61 = arith.constant 0 : index
    %c0_62 = arith.constant 0 : index
    %c0_63 = arith.constant 0 : index
    %47 = vector.load %arg7[%c0_61, %c0_62, %c0_63] : memref<3x1x32xf32, #tpu.memory_space<vmem>>, vector<1x1x32xf32>
    %48 = vector.shape_cast %47 : vector<1x1x32xf32> to vector<1x32xf32>
    %49 = vector.broadcast %48 : vector<1x32xf32> to vector<128x32xf32>
    %50 = arith.addf %46, %49 : vector<128x32xf32>
    %cst_64 = arith.constant 0.000000e+00 : f32
    %51 = vector.broadcast %cst_64 : f32 to vector<128x32xf32>
    %52 = arith.maximumf %50, %51 : vector<128x32xf32>
    %c0_65 = arith.constant 0 : index
    %c0_66 = arith.constant 0 : index
    %c0_67 = arith.constant 0 : index
    %53 = vector.load %arg8[%c0_65, %c0_66, %c0_67] : memref<3x32x16xf32, #tpu.memory_space<vmem>>, vector<1x32x16xf32>
    %54 = vector.shape_cast %53 : vector<1x32x16xf32> to vector<32x16xf32>
    %cst_68 = arith.constant dense<0.000000e+00> : vector<128x16xf32>
    %55 = tpu.matmul %52, %54, %cst_68 {dimension_numbers = #tpu.dot_dimension_numbers<[1], [0], [0], [1], [0, 0, 1, 1], [], []>} : vector<128x32xf32>, vector<32x16xf32>, vector<128x16xf32> -> vector<128x16xf32>
    %c0_69 = arith.constant 0 : index
    %c0_70 = arith.constant 0 : index
    %c0_71 = arith.constant 0 : index
    %56 = vector.load %arg9[%c0_69, %c0_70, %c0_71] : memref<3x1x16xf32, #tpu.memory_space<vmem>>, vector<1x1x16xf32>
    %57 = vector.shape_cast %56 : vector<1x1x16xf32> to vector<1x16xf32>
    %58 = vector.broadcast %57 : vector<1x16xf32> to vector<128x16xf32>
    %59 = arith.addf %55, %58 : vector<128x16xf32>
    %60 = arith.addf %59, %43 : vector<128x16xf32>
    %cst_72 = arith.constant 0.707106769 : f32
    %61 = vector.broadcast %cst_72 : f32 to vector<128x16xf32>
    %62 = arith.mulf %61, %60 : vector<128x16xf32>
    %cst_73 = arith.constant 2.500000e-01 : f32
    %63 = vector.broadcast %cst_73 : f32 to vector<128x16xf32>
    %64 = arith.mulf %63, %62 : vector<128x16xf32>
    %65 = arith.addf %7, %64 : vector<128x16xf32>
    %c1 = arith.constant 1 : index
    %c0_74 = arith.constant 0 : index
    %c0_75 = arith.constant 0 : index
    %66 = vector.load %arg3[%c1, %c0_74, %c0_75] : memref<3x16x16xf32, #tpu.memory_space<vmem>>, vector<1x16x16xf32>
    %67 = vector.shape_cast %66 : vector<1x16x16xf32> to vector<16x16xf32>
    %cst_76 = arith.constant dense<0.000000e+00> : vector<128x16xf32>
    %68 = tpu.matmul %62, %67, %cst_76 {dimension_numbers = #tpu.dot_dimension_numbers<[1], [0], [0], [1], [0, 0, 1, 1], [], []>} : vector<128x16xf32>, vector<16x16xf32>, vector<128x16xf32> -> vector<128x16xf32>
    %69 = vector.shape_cast %68 : vector<128x16xf32> to vector<2x8x8x16xf32>
    %c0_77 = arith.constant 0 : index
    %c3_78 = arith.constant 3 : index
    %c3_79 = arith.constant 3 : index
    %c0_80 = arith.constant 0 : index
    %70 = vector.load %arg11[%c0_77, %c3_78, %c3_79, %c0_80] : memref<2x11x14x16xf32, #tpu.memory_space<vmem>>, vector<2x8x8x16xf32>
    tpu.vector_store %arg11[%c0_77, %c3_78, %c3_79, %c0_80], %69 {strides = array<i32>} : memref<2x11x14x16xf32, #tpu.memory_space<vmem>>, vector<2x8x8x16xf32>,
    %c0_81 = arith.constant 0 : index
    %c1_82 = arith.constant 1 : index
    %c1_83 = arith.constant 1 : index
    %c0_84 = arith.constant 0 : index
    %71 = vector.load %arg11[%c0_81, %c1_82, %c1_83, %c0_84] : memref<2x11x14x16xf32, #tpu.memory_space<vmem>>, vector<2x8x8x16xf32>
    %72 = vector.shape_cast %71 : vector<2x8x8x16xf32> to vector<128x16xf32>
    %c0_85 = arith.constant 0 : index
    %c0_86 = arith.constant 0 : index
    %73 = vector.load %arg12[%c0_85, %c0_86] : memref<128x96xf32, #tpu.memory_space<vmem>>, vector<128x16xf32>
    tpu.vector_store %arg12[%c0_85, %c0_86], %72 {strides = array<i32>} : memref<128x96xf32, #tpu.memory_space<vmem>>, vector<128x16xf32>,
    %c0_87 = arith.constant 0 : index
    %c1_88 = arith.constant 1 : index
    %c3_89 = arith.constant 3 : index
    %c0_90 = arith.constant 0 : index
    %74 = vector.load %arg11[%c0_87, %c1_88, %c3_89, %c0_90] : memref<2x11x14x16xf32, #tpu.memory_space<vmem>>, vector<2x8x8x16xf32>
    %75 = vector.shape_cast %74 : vector<2x8x8x16xf32> to vector<128x16xf32>
    %c0_91 = arith.constant 0 : index
    %c16_92 = arith.constant 16 : index
    %76 = vector.load %arg12[%c0_91, %c16_92] : memref<128x96xf32, #tpu.memory_space<vmem>>, vector<128x16xf32>
    tpu.vector_store %arg12[%c0_91, %c16_92], %75 {strides = array<i32>} : memref<128x96xf32, #tpu.memory_space<vmem>>, vector<128x16xf32>,
    %c0_93 = arith.constant 0 : index
    %c1_94 = arith.constant 1 : index
    %c5 = arith.constant 5 : index
    %c0_95 = arith.constant 0 : index
    %77 = vector.load %arg11[%c0_93, %c1_94, %c5, %c0_95] : memref<2x11x14x16xf32, #tpu.memory_space<vmem>>, vector<2x8x8x16xf32>
    %78 = vector.shape_cast %77 : vector<2x8x8x16xf32> to vector<128x16xf32>
    %c0_96 = arith.constant 0 : index
    %c32_97 = arith.constant 32 : index
    %79 = vector.load %arg12[%c0_96, %c32_97] : memref<128x96xf32, #tpu.memory_space<vmem>>, vector<128x16xf32>
    tpu.vector_store %arg12[%c0_96, %c32_97], %78 {strides = array<i32>} : memref<128x96xf32, #tpu.memory_space<vmem>>, vector<128x16xf32>,
    %c0_98 = arith.constant 0 : index
    %c3_99 = arith.constant 3 : index
    %c1_100 = arith.constant 1 : index
    %c0_101 = arith.constant 0 : index
    %80 = vector.load %arg11[%c0_98, %c3_99, %c1_100, %c0_101] : memref<2x11x14x16xf32, #tpu.memory_space<vmem>>, vector<2x8x8x16xf32>
    %81 = vector.shape_cast %80 : vector<2x8x8x16xf32> to vector<128x16xf32>
    %c0_102 = arith.constant 0 : index
    %c48_103 = arith.constant 48 : index
    %82 = vector.load %arg12[%c0_102, %c48_103] : memref<128x96xf32, #tpu.memory_space<vmem>>, vector<128x16xf32>
    tpu.vector_store %arg12[%c0_102, %c48_103], %81 {strides = array<i32>} : memref<128x96xf32, #tpu.memory_space<vmem>>, vector<128x16xf32>,
    %c0_104 = arith.constant 0 : index
    %c3_105 = arith.constant 3 : index
    %c3_106 = arith.constant 3 : index
    %c0_107 = arith.constant 0 : index
    %83 = vector.load %arg11[%c0_104, %c3_105, %c3_106, %c0_107] : memref<2x11x14x16xf32, #tpu.memory_space<vmem>>, vector<2x8x8x16xf32>
    %84 = vector.shape_cast %83 : vector<2x8x8x16xf32> to vector<128x16xf32>
    %c0_108 = arith.constant 0 : index
    %c64_109 = arith.constant 64 : index
    %85 = vector.load %arg12[%c0_108, %c64_109] : memref<128x96xf32, #tpu.memory_space<vmem>>, vector<128x16xf32>
    tpu.vector_store %arg12[%c0_108, %c64_109], %84 {strides = array<i32>} : memref<128x96xf32, #tpu.memory_space<vmem>>, vector<128x16xf32>,
    %c0_110 = arith.constant 0 : index
    %c3_111 = arith.constant 3 : index
    %c5_112 = arith.constant 5 : index
    %c0_113 = arith.constant 0 : index
    %86 = vector.load %arg11[%c0_110, %c3_111, %c5_112, %c0_113] : memref<2x11x14x16xf32, #tpu.memory_space<vmem>>, vector<2x8x8x16xf32>
    %87 = vector.shape_cast %86 : vector<2x8x8x16xf32> to vector<128x16xf32>
    %c0_114 = arith.constant 0 : index
    %c80_115 = arith.constant 80 : index
    %88 = vector.load %arg12[%c0_114, %c80_115] : memref<128x96xf32, #tpu.memory_space<vmem>>, vector<128x16xf32>
    tpu.vector_store %arg12[%c0_114, %c80_115], %87 {strides = array<i32>} : memref<128x96xf32, #tpu.memory_space<vmem>>, vector<128x16xf32>,
    %c0_116 = arith.constant 0 : index
    %c0_117 = arith.constant 0 : index
    %89 = vector.load %arg12[%c0_116, %c0_117] : memref<128x96xf32, #tpu.memory_space<vmem>>, vector<128x96xf32>
    %c1_118 = arith.constant 1 : index
    %c0_119 = arith.constant 0 : index
    %c0_120 = arith.constant 0 : index
    %90 = vector.load %arg4[%c1_118, %c0_119, %c0_120] : memref<3x96x16xf32, #tpu.memory_space<vmem>>, vector<1x96x16xf32>
    %91 = vector.shape_cast %90 : vector<1x96x16xf32> to vector<96x16xf32>
    %cst_121 = arith.constant dense<0.000000e+00> : vector<128x16xf32>
    %92 = tpu.matmul %89, %91, %cst_121 {dimension_numbers = #tpu.dot_dimension_numbers<[1], [0], [0], [1], [0, 0, 1, 1], [], []>} : vector<128x96xf32>, vector<96x16xf32>, vector<128x16xf32> -> vector<128x16xf32>
    %c1_122 = arith.constant 1 : index
    %c0_123 = arith.constant 0 : index
    %c0_124 = arith.constant 0 : index
    %93 = vector.load %arg5[%c1_122, %c0_123, %c0_124] : memref<3x1x16xf32, #tpu.memory_space<vmem>>, vector<1x1x16xf32>
    %94 = vector.shape_cast %93 : vector<1x1x16xf32> to vector<1x16xf32>
    %95 = vector.broadcast %94 : vector<1x16xf32> to vector<128x16xf32>
    %96 = arith.addf %92, %95 : vector<128x16xf32>
    %97 = arith.addf %96, %62 : vector<128x16xf32>
    %cst_125 = arith.constant 0.707106769 : f32
    %98 = vector.broadcast %cst_125 : f32 to vector<128x16xf32>
    %99 = arith.mulf %98, %97 : vector<128x16xf32>
    %c1_126 = arith.constant 1 : index
    %c0_127 = arith.constant 0 : index
    %c0_128 = arith.constant 0 : index
    %100 = vector.load %arg6[%c1_126, %c0_127, %c0_128] : memref<3x16x32xf32, #tpu.memory_space<vmem>>, vector<1x16x32xf32>
    %101 = vector.shape_cast %100 : vector<1x16x32xf32> to vector<16x32xf32>
    %cst_129 = arith.constant dense<0.000000e+00> : vector<128x32xf32>
    %102 = tpu.matmul %99, %101, %cst_129 {dimension_numbers = #tpu.dot_dimension_numbers<[1], [0], [0], [1], [0, 0, 1, 1], [], []>} : vector<128x16xf32>, vector<16x32xf32>, vector<128x32xf32> -> vector<128x32xf32>
    %c1_130 = arith.constant 1 : index
    %c0_131 = arith.constant 0 : index
    %c0_132 = arith.constant 0 : index
    %103 = vector.load %arg7[%c1_130, %c0_131, %c0_132] : memref<3x1x32xf32, #tpu.memory_space<vmem>>, vector<1x1x32xf32>
    %104 = vector.shape_cast %103 : vector<1x1x32xf32> to vector<1x32xf32>
    %105 = vector.broadcast %104 : vector<1x32xf32> to vector<128x32xf32>
    %106 = arith.addf %102, %105 : vector<128x32xf32>
    %cst_133 = arith.constant 0.000000e+00 : f32
    %107 = vector.broadcast %cst_133 : f32 to vector<128x32xf32>
    %108 = arith.maximumf %106, %107 : vector<128x32xf32>
    %c1_134 = arith.constant 1 : index
    %c0_135 = arith.constant 0 : index
    %c0_136 = arith.constant 0 : index
    %109 = vector.load %arg8[%c1_134, %c0_135, %c0_136] : memref<3x32x16xf32, #tpu.memory_space<vmem>>, vector<1x32x16xf32>
    %110 = vector.shape_cast %109 : vector<1x32x16xf32> to vector<32x16xf32>
    %cst_137 = arith.constant dense<0.000000e+00> : vector<128x16xf32>
    %111 = tpu.matmul %108, %110, %cst_137 {dimension_numbers = #tpu.dot_dimension_numbers<[1], [0], [0], [1], [0, 0, 1, 1], [], []>} : vector<128x32xf32>, vector<32x16xf32>, vector<128x16xf32> -> vector<128x16xf32>
    %c1_138 = arith.constant 1 : index
    %c0_139 = arith.constant 0 : index
    %c0_140 = arith.constant 0 : index
    %112 = vector.load %arg9[%c1_138, %c0_139, %c0_140] : memref<3x1x16xf32, #tpu.memory_space<vmem>>, vector<1x1x16xf32>
    %113 = vector.shape_cast %112 : vector<1x1x16xf32> to vector<1x16xf32>
    %114 = vector.broadcast %113 : vector<1x16xf32> to vector<128x16xf32>
    %115 = arith.addf %111, %114 : vector<128x16xf32>
    %116 = arith.addf %115, %99 : vector<128x16xf32>
    %cst_141 = arith.constant 0.707106769 : f32
    %117 = vector.broadcast %cst_141 : f32 to vector<128x16xf32>
    %118 = arith.mulf %117, %116 : vector<128x16xf32>
    %cst_142 = arith.constant 2.500000e-01 : f32
    %119 = vector.broadcast %cst_142 : f32 to vector<128x16xf32>
    %120 = arith.mulf %119, %118 : vector<128x16xf32>
    %121 = arith.addf %65, %120 : vector<128x16xf32>
    %c2_143 = arith.constant 2 : index
    %c0_144 = arith.constant 0 : index
    %c0_145 = arith.constant 0 : index
    %122 = vector.load %arg3[%c2_143, %c0_144, %c0_145] : memref<3x16x16xf32, #tpu.memory_space<vmem>>, vector<1x16x16xf32>
    %123 = vector.shape_cast %122 : vector<1x16x16xf32> to vector<16x16xf32>
    %cst_146 = arith.constant dense<0.000000e+00> : vector<128x16xf32>
    %124 = tpu.matmul %118, %123, %cst_146 {dimension_numbers = #tpu.dot_dimension_numbers<[1], [0], [0], [1], [0, 0, 1, 1], [], []>} : vector<128x16xf32>, vector<16x16xf32>, vector<128x16xf32> -> vector<128x16xf32>
    %125 = vector.shape_cast %124 : vector<128x16xf32> to vector<2x8x8x16xf32>
    %c0_147 = arith.constant 0 : index
    %c3_148 = arith.constant 3 : index
    %c3_149 = arith.constant 3 : index
    %c0_150 = arith.constant 0 : index
    %126 = vector.load %arg11[%c0_147, %c3_148, %c3_149, %c0_150] : memref<2x11x14x16xf32, #tpu.memory_space<vmem>>, vector<2x8x8x16xf32>
    tpu.vector_store %arg11[%c0_147, %c3_148, %c3_149, %c0_150], %125 {strides = array<i32>} : memref<2x11x14x16xf32, #tpu.memory_space<vmem>>, vector<2x8x8x16xf32>,
    %c0_151 = arith.constant 0 : index
    %c0_152 = arith.constant 0 : index
    %c0_153 = arith.constant 0 : index
    %c0_154 = arith.constant 0 : index
    %127 = vector.load %arg11[%c0_151, %c0_152, %c0_153, %c0_154] : memref<2x11x14x16xf32, #tpu.memory_space<vmem>>, vector<2x8x8x16xf32>
    %128 = vector.shape_cast %127 : vector<2x8x8x16xf32> to vector<128x16xf32>
    %c0_155 = arith.constant 0 : index
    %c0_156 = arith.constant 0 : index
    %129 = vector.load %arg12[%c0_155, %c0_156] : memref<128x96xf32, #tpu.memory_space<vmem>>, vector<128x16xf32>
    tpu.vector_store %arg12[%c0_155, %c0_156], %128 {strides = array<i32>} : memref<128x96xf32, #tpu.memory_space<vmem>>, vector<128x16xf32>,
    %c0_157 = arith.constant 0 : index
    %c0_158 = arith.constant 0 : index
    %c3_159 = arith.constant 3 : index
    %c0_160 = arith.constant 0 : index
    %130 = vector.load %arg11[%c0_157, %c0_158, %c3_159, %c0_160] : memref<2x11x14x16xf32, #tpu.memory_space<vmem>>, vector<2x8x8x16xf32>
    %131 = vector.shape_cast %130 : vector<2x8x8x16xf32> to vector<128x16xf32>
    %c0_161 = arith.constant 0 : index
    %c16_162 = arith.constant 16 : index
    %132 = vector.load %arg12[%c0_161, %c16_162] : memref<128x96xf32, #tpu.memory_space<vmem>>, vector<128x16xf32>
    tpu.vector_store %arg12[%c0_161, %c16_162], %131 {strides = array<i32>} : memref<128x96xf32, #tpu.memory_space<vmem>>, vector<128x16xf32>,
    %c0_163 = arith.constant 0 : index
    %c0_164 = arith.constant 0 : index
    %c6 = arith.constant 6 : index
    %c0_165 = arith.constant 0 : index
    %133 = vector.load %arg11[%c0_163, %c0_164, %c6, %c0_165] : memref<2x11x14x16xf32, #tpu.memory_space<vmem>>, vector<2x8x8x16xf32>
    %134 = vector.shape_cast %133 : vector<2x8x8x16xf32> to vector<128x16xf32>
    %c0_166 = arith.constant 0 : index
    %c32_167 = arith.constant 32 : index
    %135 = vector.load %arg12[%c0_166, %c32_167] : memref<128x96xf32, #tpu.memory_space<vmem>>, vector<128x16xf32>
    tpu.vector_store %arg12[%c0_166, %c32_167], %134 {strides = array<i32>} : memref<128x96xf32, #tpu.memory_space<vmem>>, vector<128x16xf32>,
    %c0_168 = arith.constant 0 : index
    %c3_169 = arith.constant 3 : index
    %c0_170 = arith.constant 0 : index
    %c0_171 = arith.constant 0 : index
    %136 = vector.load %arg11[%c0_168, %c3_169, %c0_170, %c0_171] : memref<2x11x14x16xf32, #tpu.memory_space<vmem>>, vector<2x8x8x16xf32>
    %137 = vector.shape_cast %136 : vector<2x8x8x16xf32> to vector<128x16xf32>
    %c0_172 = arith.constant 0 : index
    %c48_173 = arith.constant 48 : index
    %138 = vector.load %arg12[%c0_172, %c48_173] : memref<128x96xf32, #tpu.memory_space<vmem>>, vector<128x16xf32>
    tpu.vector_store %arg12[%c0_172, %c48_173], %137 {strides = array<i32>} : memref<128x96xf32, #tpu.memory_space<vmem>>, vector<128x16xf32>,
    %c0_174 = arith.constant 0 : index
    %c3_175 = arith.constant 3 : index
    %c3_176 = arith.constant 3 : index
    %c0_177 = arith.constant 0 : index
    %139 = vector.load %arg11[%c0_174, %c3_175, %c3_176, %c0_177] : memref<2x11x14x16xf32, #tpu.memory_space<vmem>>, vector<2x8x8x16xf32>
    %140 = vector.shape_cast %139 : vector<2x8x8x16xf32> to vector<128x16xf32>
    %c0_178 = arith.constant 0 : index
    %c64_179 = arith.constant 64 : index
    %141 = vector.load %arg12[%c0_178, %c64_179] : memref<128x96xf32, #tpu.memory_space<vmem>>, vector<128x16xf32>
    tpu.vector_store %arg12[%c0_178, %c64_179], %140 {strides = array<i32>} : memref<128x96xf32, #tpu.memory_space<vmem>>, vector<128x16xf32>,
    %c0_180 = arith.constant 0 : index
    %c3_181 = arith.constant 3 : index
    %c6_182 = arith.constant 6 : index
    %c0_183 = arith.constant 0 : index
    %142 = vector.load %arg11[%c0_180, %c3_181, %c6_182, %c0_183] : memref<2x11x14x16xf32, #tpu.memory_space<vmem>>, vector<2x8x8x16xf32>
    %143 = vector.shape_cast %142 : vector<2x8x8x16xf32> to vector<128x16xf32>
    %c0_184 = arith.constant 0 : index
    %c80_185 = arith.constant 80 : index
    %144 = vector.load %arg12[%c0_184, %c80_185] : memref<128x96xf32, #tpu.memory_space<vmem>>, vector<128x16xf32>
    tpu.vector_store %arg12[%c0_184, %c80_185], %143 {strides = array<i32>} : memref<128x96xf32, #tpu.memory_space<vmem>>, vector<128x16xf32>,
    %c0_186 = arith.constant 0 : index
    %c0_187 = arith.constant 0 : index
    %145 = vector.load %arg12[%c0_186, %c0_187] : memref<128x96xf32, #tpu.memory_space<vmem>>, vector<128x96xf32>
    %c2_188 = arith.constant 2 : index
    %c0_189 = arith.constant 0 : index
    %c0_190 = arith.constant 0 : index
    %146 = vector.load %arg4[%c2_188, %c0_189, %c0_190] : memref<3x96x16xf32, #tpu.memory_space<vmem>>, vector<1x96x16xf32>
    %147 = vector.shape_cast %146 : vector<1x96x16xf32> to vector<96x16xf32>
    %cst_191 = arith.constant dense<0.000000e+00> : vector<128x16xf32>
    %148 = tpu.matmul %145, %147, %cst_191 {dimension_numbers = #tpu.dot_dimension_numbers<[1], [0], [0], [1], [0, 0, 1, 1], [], []>} : vector<128x96xf32>, vector<96x16xf32>, vector<128x16xf32> -> vector<128x16xf32>
    %c2_192 = arith.constant 2 : index
    %c0_193 = arith.constant 0 : index
    %c0_194 = arith.constant 0 : index
    %149 = vector.load %arg5[%c2_192, %c0_193, %c0_194] : memref<3x1x16xf32, #tpu.memory_space<vmem>>, vector<1x1x16xf32>
    %150 = vector.shape_cast %149 : vector<1x1x16xf32> to vector<1x16xf32>
    %151 = vector.broadcast %150 : vector<1x16xf32> to vector<128x16xf32>
    %152 = arith.addf %148, %151 : vector<128x16xf32>
    %153 = arith.addf %152, %118 : vector<128x16xf32>
    %cst_195 = arith.constant 0.707106769 : f32
    %154 = vector.broadcast %cst_195 : f32 to vector<128x16xf32>
    %155 = arith.mulf %154, %153 : vector<128x16xf32>
    %c2_196 = arith.constant 2 : index
    %c0_197 = arith.constant 0 : index
    %c0_198 = arith.constant 0 : index
    %156 = vector.load %arg6[%c2_196, %c0_197, %c0_198] : memref<3x16x32xf32, #tpu.memory_space<vmem>>, vector<1x16x32xf32>
    %157 = vector.shape_cast %156 : vector<1x16x32xf32> to vector<16x32xf32>
    %cst_199 = arith.constant dense<0.000000e+00> : vector<128x32xf32>
    %158 = tpu.matmul %155, %157, %cst_199 {dimension_numbers = #tpu.dot_dimension_numbers<[1], [0], [0], [1], [0, 0, 1, 1], [], []>} : vector<128x16xf32>, vector<16x32xf32>, vector<128x32xf32> -> vector<128x32xf32>
    %c2_200 = arith.constant 2 : index
    %c0_201 = arith.constant 0 : index
    %c0_202 = arith.constant 0 : index
    %159 = vector.load %arg7[%c2_200, %c0_201, %c0_202] : memref<3x1x32xf32, #tpu.memory_space<vmem>>, vector<1x1x32xf32>
    %160 = vector.shape_cast %159 : vector<1x1x32xf32> to vector<1x32xf32>
    %161 = vector.broadcast %160 : vector<1x32xf32> to vector<128x32xf32>
    %162 = arith.addf %158, %161 : vector<128x32xf32>
    %cst_203 = arith.constant 0.000000e+00 : f32
    %163 = vector.broadcast %cst_203 : f32 to vector<128x32xf32>
    %164 = arith.maximumf %162, %163 : vector<128x32xf32>
    %c2_204 = arith.constant 2 : index
    %c0_205 = arith.constant 0 : index
    %c0_206 = arith.constant 0 : index
    %165 = vector.load %arg8[%c2_204, %c0_205, %c0_206] : memref<3x32x16xf32, #tpu.memory_space<vmem>>, vector<1x32x16xf32>
    %166 = vector.shape_cast %165 : vector<1x32x16xf32> to vector<32x16xf32>
    %cst_207 = arith.constant dense<0.000000e+00> : vector<128x16xf32>
    %167 = tpu.matmul %164, %166, %cst_207 {dimension_numbers = #tpu.dot_dimension_numbers<[1], [0], [0], [1], [0, 0, 1, 1], [], []>} : vector<128x32xf32>, vector<32x16xf32>, vector<128x16xf32> -> vector<128x16xf32>
    %c2_208 = arith.constant 2 : index
    %c0_209 = arith.constant 0 : index
    %c0_210 = arith.constant 0 : index
    %168 = vector.load %arg9[%c2_208, %c0_209, %c0_210] : memref<3x1x16xf32, #tpu.memory_space<vmem>>, vector<1x1x16xf32>
    %169 = vector.shape_cast %168 : vector<1x1x16xf32> to vector<1x16xf32>
    %170 = vector.broadcast %169 : vector<1x16xf32> to vector<128x16xf32>
    %171 = arith.addf %167, %170 : vector<128x16xf32>
    %172 = arith.addf %171, %155 : vector<128x16xf32>
    %cst_211 = arith.constant 0.707106769 : f32
    %173 = vector.broadcast %cst_211 : f32 to vector<128x16xf32>
    %174 = arith.mulf %173, %172 : vector<128x16xf32>
    %cst_212 = arith.constant 2.500000e-01 : f32
    %175 = vector.broadcast %cst_212 : f32 to vector<128x16xf32>
    %176 = arith.mulf %175, %174 : vector<128x16xf32>
    %177 = arith.addf %121, %176 : vector<128x16xf32>
    %c0_213 = arith.constant 0 : index
    %c0_214 = arith.constant 0 : index
    %178 = vector.load %arg10[%c0_213, %c0_214] : memref<128x16xf32, #tpu.memory_space<vmem>>, vector<128x16xf32>
    tpu.vector_store %arg10[%c0_213, %c0_214], %177 {strides = array<i32>} : memref<128x16xf32, #tpu.memory_space<vmem>>, vector<128x16xf32>,
    return
  }
}

</mosaic_0001>

<llo_original>
// kernel: _lambda_.1
$region0: #{_lambda_.1}
  #allocation0 [shape = 'u32[]', space=smem, size = 0x4, offset = 0x4, fixed_abs, tag = 'smem constant byte address 0x4 - core index']
  #allocation1 [shape = 'u32[144,128]{1,0:T(1,128)}', space=vmem, size = 0x12000, scoped, tag = 'internal scratch']
  #allocation2 [shape = 'f32[2,11,14,16]{3,2,1,0:T(8,128)}', space=vmem, size = 0x2c000, scoped, tag = 'scratch operand']
  #allocation3 [shape = 'f32[128,96]{1,0:T(8,128)}', space=vmem, size = 0x10000, scoped, tag = 'scratch operand']
  %s0 = inlined_call_operand.vmem [shape: f32[128,32], index: 0, kind: input, shape index: {}]
  %s1 = inlined_call_operand.vmem [shape: f32[32,16], index: 1, kind: input, shape index: {}]
  %s2 = inlined_call_operand.vmem [shape: f32[1,16], index: 2, kind: input, shape index: {}]
  %s3 = inlined_call_operand.vmem [shape: f32[3,16,16], index: 3, kind: input, shape index: {}]
  %s4 = inlined_call_operand.vmem [shape: f32[3,96,16], index: 4, kind: input, shape index: {}]
  %s5 = inlined_call_operand.vmem [shape: f32[3,1,16], index: 5, kind: input, shape index: {}]
  %s6 = inlined_call_operand.vmem [shape: f32[3,16,32], index: 6, kind: input, shape index: {}]
  %s7 = inlined_call_operand.vmem [shape: f32[3,1,32], index: 7, kind: input, shape index: {}]
  %s8 = inlined_call_operand.vmem [shape: f32[3,32,16], index: 8, kind: input, shape index: {}]
  %s9 = inlined_call_operand.vmem [shape: f32[3,1,16], index: 9, kind: input, shape index: {}]
  %s10 = inlined_call_operand.hbm [shape: f32[128,16], index: 10, kind: output, shape index: {}]
  %s11 = sld [smem:[#allocation0]]
  $region50: #{_lambda_.1} parent=0
    _
  %s13 = ssub.s32 1, %s11
  %s14 = scalar_select 0, %s13, %s11
  $region1: #{_lambda_.1} parent=0
    #allocation4 [shape = 'u8[65536]{0}', space=vmem, size = 0x10000, scoped, tag = 'output window, operand 0, single buffered']
    #allocation5 [shape = 's32[1]{0}', space=sflag, size = 0x4, scoped, tag = 'scoped memory for _lambda_.1']
    %15 = vsyncpa [#allocation5], 0
    // Predicated region
    $region2: #{_lambda_.1} parent=1 // pred_check
      _
    $region3: #{_lambda_.1} parent=1 // pred_check_branch
      %17 = sbr.rel (0) target = $region5
    $region4: #{_lambda_.1} parent=1 // pred_region
      _
    $region5: #{_lambda_.1} parent=1 // pred_fallthru
      _
    // Predicated region
    $region6: #{_lambda_.1} parent=1 // pred_check
      _
    $region7: #{_lambda_.1} parent=1 // pred_check_branch
      %19 = sbr.rel (0) target = $region9
    $region8: #{_lambda_.1} parent=1 // pred_region
      _
    $region9: #{_lambda_.1} parent=1 // pred_fallthru
      _
    // Predicated region
    $region10: #{_lambda_.1} parent=1 // pred_check
      _
    $region11: #{_lambda_.1} parent=1 // pred_check_branch
      %21 = sbr.rel (0) target = $region13
    $region12: #{_lambda_.1} parent=1 // pred_region
      _
    $region13: #{_lambda_.1} parent=1 // pred_fallthru
      _
    // Predicated region
    $region14: #{_lambda_.1} parent=1 // pred_check
      _
    $region15: #{_lambda_.1} parent=1 // pred_check_branch
      %23 = sbr.rel (0) target = $region17
    $region16: #{_lambda_.1} parent=1 // pred_region
      _
    $region17: #{_lambda_.1} parent=1 // pred_fallthru
      _
    // Predicated region
    $region18: #{_lambda_.1} parent=1 // pred_check
      _
    $region19: #{_lambda_.1} parent=1 // pred_check_branch
      %25 = sbr.rel (0) target = $region21
    $region20: #{_lambda_.1} parent=1 // pred_region
      _
    $region21: #{_lambda_.1} parent=1 // pred_fallthru
      _
    // Predicated region
    $region22: #{_lambda_.1} parent=1 // pred_check
      _
    $region23: #{_lambda_.1} parent=1 // pred_check_branch
      %27 = sbr.rel (0) target = $region25
    $region24: #{_lambda_.1} parent=1 // pred_region
      _
    $region25: #{_lambda_.1} parent=1 // pred_fallthru
      _
    // Predicated region
    $region26: #{_lambda_.1} parent=1 // pred_check
      _
    $region27: #{_lambda_.1} parent=1 // pred_check_branch
      %29 = sbr.rel (0) target = $region29
    $region28: #{_lambda_.1} parent=1 // pred_region
      _
    $region29: #{_lambda_.1} parent=1 // pred_fallthru
      _
    // Predicated region
    $region30: #{_lambda_.1} parent=1 // pred_check
      _
    $region31: #{_lambda_.1} parent=1 // pred_check_branch
      %31 = sbr.rel (0) target = $region33
    $region32: #{_lambda_.1} parent=1 // pred_region
      _
    $region33: #{_lambda_.1} parent=1 // pred_fallthru
      _
    // Predicated region
    $region34: #{_lambda_.1} parent=1 // pred_check
      _
    $region35: #{_lambda_.1} parent=1 // pred_check_branch
      %33 = sbr.rel (0) target = $region37
    $region36: #{_lambda_.1} parent=1 // pred_region
      _
    $region37: #{_lambda_.1} parent=1 // pred_fallthru
      _
    // Predicated region
    $region38: #{_lambda_.1} parent=1 // pred_check
      _
    $region39: #{_lambda_.1} parent=1 // pred_check_branch
      %35 = sbr.rel (0) target = $region41
    $region40: #{_lambda_.1} parent=1 // pred_region
      _
    $region41: #{_lambda_.1} parent=1 // pred_fallthru
      _
    %v36 = vld [vmem:[%s0] sm:$0xff]
    %v37 = vld [vmem:[%s0 + $0x8] sm:$0xff]
    %v38 = vld [vmem:[%s0 + $0x10] sm:$0xff]
    %v39 = vld [vmem:[%s0 + $0x18] sm:$0xff]
    %v40 = vld [vmem:[%s0 + $0x20] sm:$0xff]
    %v41 = vld [vmem:[%s0 + $0x28] sm:$0xff]
    %v42 = vld [vmem:[%s0 + $0x30] sm:$0xff]
    %v43 = vld [vmem:[%s0 + $0x38] sm:$0xff]
    %v44 = vld [vmem:[%s0 + $0x40] sm:$0xff]
    %v45 = vld [vmem:[%s0 + $0x48] sm:$0xff]
    %v46 = vld [vmem:[%s0 + $0x50] sm:$0xff]
    %v47 = vld [vmem:[%s0 + $0x58] sm:$0xff]
    %v48 = vld [vmem:[%s0 + $0x60] sm:$0xff]
    %v49 = vld [vmem:[%s0 + $0x68] sm:$0xff]
    %v50 = vld [vmem:[%s0 + $0x70] sm:$0xff]
    %v51 = vld [vmem:[%s0 + $0x78] sm:$0xff]
    %v52 = vld [vmem:[%s1] sm:$0xff]
    %v53 = vld [vmem:[%s1 + $0x8] sm:$0xff]
    %v54 = vld [vmem:[%s1 + $0x10] sm:$0xff]
    %v55 = vld [vmem:[%s1 + $0x18] sm:$0xff]
    %v56 = vld [vmem:[%s2] sm:$0x1]
    %v58 = vlaneseq
    %v59 = vshrl.u32 %v58, 7
    %v60 = vsub.s32 0, %v59
    %v61 = vrot.slane %v56, %v60
    %vm63 = vcmask 261120
    %v65 = vsel %vm63, %v36, 0
    %v68 = vsel %vm63, %v37, 0
    %v71 = vsel %vm63, %v38, 0
    %v74 = vsel %vm63, %v39, 0
    %v77 = vsel %vm63, %v40, 0
    %v80 = vsel %vm63, %v41, 0
    %v83 = vsel %vm63, %v42, 0
    %v86 = vsel %vm63, %v43, 0
    %v89 = vsel %vm63, %v44, 0
    %v92 = vsel %vm63, %v45, 0
    %v95 = vsel %vm63, %v46, 0
    %v98 = vsel %vm63, %v47, 0
    %v101 = vsel %vm63, %v48, 0
    %v104 = vsel %vm63, %v49, 0
    %v107 = vsel %vm63, %v50, 0
    %v110 = vsel %vm63, %v51, 0
    %112 = vmatprep.subr.mxu0 0.0
    %113 = vmatpush1.msra.mxu0 %v52
    %114 = vmatprep.subr.mxu0 0.0
    %115 = vmatpush1.msra.mxu0 %v53
    %116 = vmatprep.subr.mxu0 0.0
    %117 = vmatpush1.msra.mxu0 %v54
    %118 = vmatprep.subr.mxu0 0.0
    %119 = vmatpush1.msra.mxu0 %v55
    %120 = vmatprep.subr.mxu0 0.0
    %121 = vmatpush1.msra.mxu0 0.0
    %122 = vmatprep.subr.mxu0 0.0
    %123 = vmatpush1.msra.mxu0 0.0
    %124 = vmatprep.subr.mxu0 0.0
    %125 = vmatpush1.msra.mxu0 0.0
    %126 = vmatprep.subr.mxu0 0.0
    %127 = vmatpush1.msra.mxu0 0.0
    %128 = vmatprep.subr.mxu0 0.0
    %129 = vmatpush1.msra.mxu0 0.0
    %130 = vmatprep.subr.mxu0 0.0
    %131 = vmatpush1.msra.mxu0 0.0
    %132 = vmatprep.subr.mxu0 0.0
    %133 = vmatpush1.msra.mxu0 0.0
    %134 = vmatprep.subr.mxu0 0.0
    %135 = vmatpush1.msra.mxu0 0.0
    %136 = vmatprep.subr.mxu0 0.0
    %137 = vmatpush1.msra.mxu0 0.0
    %138 = vmatprep.subr.mxu0 0.0
    %139 = vmatpush1.msra.mxu0 0.0
    %140 = vmatprep.subr.mxu0 0.0
    %141 = vmatpush1.msra.mxu0 0.0
    %142 = vmatprep.subr.mxu0 0.0
    %143 = vmatpush1.msra.mxu0 0.0
    %144 = vmatprep.subr.mxu0 0.0
    %145 = vmatpush1.msra.mxu0 0.0
    %146 = vmatprep.subr.mxu0 0.0
    %147 = vmatpush1.msra.mxu0 0.0
    %148 = vmatprep.subr.mxu0 0.0
    %149 = vmatpush1.msra.mxu0 0.0
    %150 = vmatprep.subr.mxu0 0.0
    %151 = vmatpush1.msra.mxu0 0.0
    %152 = vmatprep.subr.mxu0 0.0
    %153 = vmatpush1.msra.mxu0 0.0
    %154 = vmatprep.subr.mxu0 0.0
    %155 = vmatpush1.msra.mxu0 0.0
    %156 = vmatprep.subr.mxu0 0.0
    %157 = vmatpush1.msra.mxu0 0.0
    %158 = vmatprep.subr.mxu0 0.0
    %159 = vmatpush1.msra.mxu0 0.0
    %160 = vmatprep.subr.mxu0 0.0
    %161 = vmatpush1.msra.mxu0 0.0
    %162 = vmatprep.subr.mxu0 0.0
    %163 = vmatpush1.msra.mxu0 0.0
    %164 = vmatprep.subr.mxu0 0.0
    %165 = vmatpush1.msra.mxu0 0.0
    %166 = vmatprep.subr.mxu0 0.0
    %167 = vmatpush1.msra.mxu0 0.0
    %168 = vmatprep.subr.mxu0 0.0
    %169 = vmatpush1.msra.mxu0 0.0
    %170 = vmatprep.subr.mxu0 0.0
    %171 = vmatpush1.msra.mxu0 0.0
    %172 = vmatprep.subr.mxu0 0.0
    %173 = vmatpush1.msra.mxu0 0.0
    %174 = vmatprep.subr.mxu0 0.0
    %175 = vmatpush1.msra.mxu0 0.0
    %176 = vmatprep.mubr.f32.mxu0 0.0
    %177 = vmatmul.mubr.f32.gmra.mrb[0].mxu0 %v65
    %v178 = vpop.f32.mrb[0].mxu0
    %v179 = vadd.f32 %v61, %v178
    %v180 = vpop.f32.mrb[0].mxu0
    %181 = vmatprep.mubr.f32.mxu0 0.0
    %182 = vmatmul.mubr.f32.gmra.mrb[0].mxu0 %v68
    %v183 = vpop.f32.mrb[0].mxu0
    %v184 = vadd.f32 %v61, %v183
    %v185 = vpop.f32.mrb[0].mxu0
    %186 = vmatprep.mubr.f32.mxu0 0.0
    %187 = vmatmul.mubr.f32.gmra.mrb[0].mxu0 %v71
    %v188 = vpop.f32.mrb[0].mxu0
    %v189 = vadd.f32 %v61, %v188
    %v190 = vpop.f32.mrb[0].mxu0
    %191 = vmatprep.mubr.f32.mxu0 0.0
    %192 = vmatmul.mubr.f32.gmra.mrb[0].mxu0 %v74
    %v193 = vpop.f32.mrb[0].mxu0
    %v194 = vadd.f32 %v61, %v193
    %v195 = vpop.f32.mrb[0].mxu0
    %196 = vmatprep.mubr.f32.mxu0 0.0
    %197 = vmatmul.mubr.f32.gmra.mrb[0].mxu0 %v77
    %v198 = vpop.f32.mrb[0].mxu0
    %v199 = vadd.f32 %v61, %v198
    %v200 = vpop.f32.mrb[0].mxu0
    %201 = vmatprep.mubr.f32.mxu0 0.0
    %202 = vmatmul.mubr.f32.gmra.mrb[0].mxu0 %v80
    %v203 = vpop.f32.mrb[0].mxu0
    %v204 = vadd.f32 %v61, %v203
    %v205 = vpop.f32.mrb[0].mxu0
    %206 = vmatprep.mubr.f32.mxu0 0.0
    %207 = vmatmul.mubr.f32.gmra.mrb[0].mxu0 %v83
    %v208 = vpop.f32.mrb[0].mxu0
    %v209 = vadd.f32 %v61, %v208
    %v210 = vpop.f32.mrb[0].mxu0
    %211 = vmatprep.mubr.f32.mxu0 0.0
    %212 = vmatmul.mubr.f32.gmra.mrb[0].mxu0 %v86
    %v213 = vpop.f32.mrb[0].mxu0
    %v214 = vadd.f32 %v61, %v213
    %v215 = vpop.f32.mrb[0].mxu0
    %216 = vmatprep.mubr.f32.mxu0 0.0
    %217 = vmatmul.mubr.f32.gmra.mrb[0].mxu0 %v89
    %v218 = vpop.f32.mrb[0].mxu0
    %v219 = vadd.f32 %v61, %v218
    %v220 = vpop.f32.mrb[0].mxu0
    %221 = vmatprep.mubr.f32.mxu0 0.0
    %222 = vmatmul.mubr.f32.gmra.mrb[0].mxu0 %v92
    %v223 = vpop.f32.mrb[0].mxu0
    %v224 = vadd.f32 %v61, %v223
    %v225 = vpop.f32.mrb[0].mxu0
    %226 = vmatprep.mubr.f32.mxu0 0.0
    %227 = vmatmul.mubr.f32.gmra.mrb[0].mxu0 %v95
    %v228 = vpop.f32.mrb[0].mxu0
    %v229 = vadd.f32 %v61, %v228
    %v230 = vpop.f32.mrb[0].mxu0
    %231 = vmatprep.mubr.f32.mxu0 0.0
    %232 = vmatmul.mubr.f32.gmra.mrb[0].mxu0 %v98
    %v233 = vpop.f32.mrb[0].mxu0
    %v234 = vadd.f32 %v61, %v233
    %v235 = vpop.f32.mrb[0].mxu0
    %236 = vmatprep.mubr.f32.mxu0 0.0
    %237 = vmatmul.mubr.f32.gmra.mrb[0].mxu0 %v101
    %v238 = vpop.f32.mrb[0].mxu0
    %v239 = vadd.f32 %v61, %v238
    %v240 = vpop.f32.mrb[0].mxu0
    %241 = vmatprep.mubr.f32.mxu0 0.0
    %242 = vmatmul.mubr.f32.gmra.mrb[0].mxu0 %v104
    %v243 = vpop.f32.mrb[0].mxu0
    %v244 = vadd.f32 %v61, %v243
    %v245 = vpop.f32.mrb[0].mxu0
    %246 = vmatprep.mubr.f32.mxu0 0.0
    %247 = vmatmul.mubr.f32.gmra.mrb[0].mxu0 %v107
    %v248 = vpop.f32.mrb[0].mxu0
    %v249 = vadd.f32 %v61, %v248
    %v250 = vpop.f32.mrb[0].mxu0
    %251 = vmatprep.mubr.f32.mxu0 0.0
    %252 = vmatmul.mubr.f32.gmra.mrb[0].mxu0 %v110
    %v253 = vpop.f32.mrb[0].mxu0
    %v254 = vadd.f32 %v61, %v253
    %v255 = vpop.f32.mrb[0].mxu0
    %256 = vdwg.mxu0
    %v257 = vmul.f32 %v179, 0.25
    %v258 = vmul.f32 %v184, 0.25
    %v259 = vmul.f32 %v189, 0.25
    %v260 = vmul.f32 %v194, 0.25
    %v261 = vmul.f32 %v199, 0.25
    %v262 = vmul.f32 %v204, 0.25
    %v263 = vmul.f32 %v209, 0.25
    %v264 = vmul.f32 %v214, 0.25
    %v265 = vmul.f32 %v219, 0.25
    %v266 = vmul.f32 %v224, 0.25
    %v267 = vmul.f32 %v229, 0.25
    %v268 = vmul.f32 %v234, 0.25
    %v269 = vmul.f32 %v239, 0.25
    %v270 = vmul.f32 %v244, 0.25
    %v271 = vmul.f32 %v249, 0.25
    %v272 = vmul.f32 %v254, 0.25
    %vm273 = vcmask 130048
    %274 = vst.msk [vmem:[#allocation2] sm:$0xff] %vm273, 0.0
    %vm275 = vcmask 128000
    %276 = vst.msk [vmem:[#allocation2 + $0x8] sm:$0x3f] %vm275, 0.0
    %277 = vst.msk [vmem:[#allocation2 + $0x10] sm:$0xff] %vm273, 0.0
    %278 = vst.msk [vmem:[#allocation2 + $0x18] sm:$0x3f] %vm275, 0.0
    %279 = vst.msk [vmem:[#allocation2 + $0x20] sm:$0xff] %vm273, 0.0
    %280 = vst.msk [vmem:[#allocation2 + $0x28] sm:$0x3f] %vm275, 0.0
    %281 = vst.msk [vmem:[#allocation2 + $0x30] sm:$0xff] %vm273, 0.0
    %282 = vst.msk [vmem:[#allocation2 + $0x38] sm:$0x3f] %vm275, 0.0
    %283 = vst.msk [vmem:[#allocation2 + $0x40] sm:$0xff] %vm273, 0.0
    %284 = vst.msk [vmem:[#allocation2 + $0x48] sm:$0x3f] %vm275, 0.0
    %285 = vst.msk [vmem:[#allocation2 + $0x50] sm:$0xff] %vm273, 0.0
    %286 = vst.msk [vmem:[#allocation2 + $0x58] sm:$0x3f] %vm275, 0.0
    %287 = vst.msk [vmem:[#allocation2 + $0x60] sm:$0xff] %vm273, 0.0
    %288 = vst.msk [vmem:[#allocation2 + $0x68] sm:$0x3f] %vm275, 0.0
    %289 = vst.msk [vmem:[#allocation2 + $0x70] sm:$0xff] %vm273, 0.0
    %290 = vst.msk [vmem:[#allocation2 + $0x78] sm:$0x3f] %vm275, 0.0
    %291 = vst.msk [vmem:[#allocation2 + $0x80] sm:$0xff] %vm273, 0.0
    %292 = vst.msk [vmem:[#allocation2 + $0x88] sm:$0x3f] %vm275, 0.0
    %293 = vst.msk [vmem:[#allocation2 + $0x90] sm:$0xff] %vm273, 0.0
    %294 = vst.msk [vmem:[#allocation2 + $0x98] sm:$0x3f] %vm275, 0.0
    %295 = vst.msk [vmem:[#allocation2 + $0xa0] sm:$0xff] %vm273, 0.0
    %296 = vst.msk [vmem:[#allocation2 + $0xa8] sm:$0x3f] %vm275, 0.0
    %297 = vst.msk [vmem:[#allocation2 + $0xb0] sm:$0xff] %vm273, 0.0
    %298 = vst.msk [vmem:[#allocation2 + $0xb8] sm:$0x3f] %vm275, 0.0
    %299 = vst.msk [vmem:[#allocation2 + $0xc0] sm:$0xff] %vm273, 0.0
    %300 = vst.msk [vmem:[#allocation2 + $0xc8] sm:$0x3f] %vm275, 0.0
    %301 = vst.msk [vmem:[#allocation2 + $0xd0] sm:$0xff] %vm273, 0.0
    %302 = vst.msk [vmem:[#allocation2 + $0xd8] sm:$0x3f] %vm275, 0.0
    %303 = vst.msk [vmem:[#allocation2 + $0xe0] sm:$0xff] %vm273, 0.0
    %304 = vst.msk [vmem:[#allocation2 + $0xe8] sm:$0x3f] %vm275, 0.0
    %305 = vst.msk [vmem:[#allocation2 + $0xf0] sm:$0xff] %vm273, 0.0
    %306 = vst.msk [vmem:[#allocation2 + $0xf8] sm:$0x3f] %vm275, 0.0
    %307 = vst.msk [vmem:[#allocation2 + $0x100] sm:$0xff] %vm273, 0.0
    %308 = vst.msk [vmem:[#allocation2 + $0x108] sm:$0x3f] %vm275, 0.0
    %309 = vst.msk [vmem:[#allocation2 + $0x110] sm:$0xff] %vm273, 0.0
    %310 = vst.msk [vmem:[#allocation2 + $0x118] sm:$0x3f] %vm275, 0.0
    %311 = vst.msk [vmem:[#allocation2 + $0x120] sm:$0xff] %vm273, 0.0
    %312 = vst.msk [vmem:[#allocation2 + $0x128] sm:$0x3f] %vm275, 0.0
    %313 = vst.msk [vmem:[#allocation2 + $0x130] sm:$0xff] %vm273, 0.0
    %314 = vst.msk [vmem:[#allocation2 + $0x138] sm:$0x3f] %vm275, 0.0
    %315 = vst.msk [vmem:[#allocation2 + $0x140] sm:$0xff] %vm273, 0.0
    %316 = vst.msk [vmem:[#allocation2 + $0x148] sm:$0x3f] %vm275, 0.0
    %317 = vst.msk [vmem:[#allocation2 + $0x150] sm:$0xff] %vm273, 0.0
    %318 = vst.msk [vmem:[#allocation2 + $0x158] sm:$0x3f] %vm275, 0.0
    %v319 = vld [vmem:[%s3] sm:$0xff]
    %v320 = vld [vmem:[%s3 + $0x8] sm:$0xff]
    %v322 = vsel %vm273, %v179, 0
    %v325 = vsel %vm273, %v184, 0
    %v328 = vsel %vm273, %v189, 0
    %v331 = vsel %vm273, %v194, 0
    %v334 = vsel %vm273, %v199, 0
    %v337 = vsel %vm273, %v204, 0
    %v340 = vsel %vm273, %v209, 0
    %v343 = vsel %vm273, %v214, 0
    %v346 = vsel %vm273, %v219, 0
    %v349 = vsel %vm273, %v224, 0
    %v352 = vsel %vm273, %v229, 0
    %v355 = vsel %vm273, %v234, 0
    %v358 = vsel %vm273, %v239, 0
    %v361 = vsel %vm273, %v244, 0
    %v364 = vsel %vm273, %v249, 0
    %v367 = vsel %vm273, %v254, 0
    %369 = vmatprep.subr.mxu0 0.0
    %370 = vmatpush1.msra.mxu0 %v319
    %371 = vmatprep.subr.mxu0 0.0
    %372 = vmatpush1.msra.mxu0 %v320
    %373 = vmatprep.subr.mxu0 0.0
    %374 = vmatpush1.msra.mxu0 0.0
    %375 = vmatprep.subr.mxu0 0.0
    %376 = vmatpush1.msra.mxu0 0.0
    %377 = vmatprep.subr.mxu0 0.0
    %378 = vmatpush1.msra.mxu0 0.0
    %379 = vmatprep.subr.mxu0 0.0
    %380 = vmatpush1.msra.mxu0 0.0
    %381 = vmatprep.subr.mxu0 0.0
    %382 = vmatpush1.msra.mxu0 0.0
    %383 = vmatprep.subr.mxu0 0.0
    %384 = vmatpush1.msra.mxu0 0.0
    %385 = vmatprep.subr.mxu0 0.0
    %386 = vmatpush1.msra.mxu0 0.0
    %387 = vmatprep.subr.mxu0 0.0
    %388 = vmatpush1.msra.mxu0 0.0
    %389 = vmatprep.subr.mxu0 0.0
    %390 = vmatpush1.msra.mxu0 0.0
    %391 = vmatprep.subr.mxu0 0.0
    %392 = vmatpush1.msra.mxu0 0.0
    %393 = vmatprep.subr.mxu0 0.0
    %394 = vmatpush1.msra.mxu0 0.0
    %395 = vmatprep.subr.mxu0 0.0
    %396 = vmatpush1.msra.mxu0 0.0
    %397 = vmatprep.subr.mxu0 0.0
    %398 = vmatpush1.msra.mxu0 0.0
    %399 = vmatprep.subr.mxu0 0.0
    %400 = vmatpush1.msra.mxu0 0.0
    %401 = vmatprep.subr.mxu0 0.0
    %402 = vmatpush1.msra.mxu0 0.0
    %403 = vmatprep.subr.mxu0 0.0
    %404 = vmatpush1.msra.mxu0 0.0
    %405 = vmatprep.subr.mxu0 0.0
    %406 = vmatpush1.msra.mxu0 0.0
    %407 = vmatprep.subr.mxu0 0.0
    %408 = vmatpush1.msra.mxu0 0.0
    %409 = vmatprep.subr.mxu0 0.0
    %410 = vmatpush1.msra.mxu0 0.0
    %411 = vmatprep.subr.mxu0 0.0
    %412 = vmatpush1.msra.mxu0 0.0
    %413 = vmatprep.subr.mxu0 0.0
    %414 = vmatpush1.msra.mxu0 0.0
    %415 = vmatprep.subr.mxu0 0.0
    %416 = vmatpush1.msra.mxu0 0.0
    %417 = vmatprep.subr.mxu0 0.0
    %418 = vmatpush1.msra.mxu0 0.0
    %419 = vmatprep.subr.mxu0 0.0
    %420 = vmatpush1.msra.mxu0 0.0
    %421 = vmatprep.subr.mxu0 0.0
    %422 = vmatpush1.msra.mxu0 0.0
    %423 = vmatprep.subr.mxu0 0.0
    %424 = vmatpush1.msra.mxu0 0.0
    %425 = vmatprep.subr.mxu0 0.0
    %426 = vmatpush1.msra.mxu0 0.0
    %427 = vmatprep.subr.mxu0 0.0
    %428 = vmatpush1.msra.mxu0 0.0
    %429 = vmatprep.subr.mxu0 0.0
    %430 = vmatpush1.msra.mxu0 0.0
    %431 = vmatprep.subr.mxu0 0.0
    %432 = vmatpush1.msra.mxu0 0.0
    %433 = vmatprep.mubr.f32.mxu0 0.0
    %434 = vmatmul.mubr.f32.gmra.mrb[0].mxu0 %v322
    %v435 = vpop.f32.mrb[0].mxu0
    %v436 = vadd.f32 0.0, %v435
    %v437 = vpop.f32.mrb[0].mxu0
    %438 = vmatprep.mubr.f32.mxu0 0.0
    %439 = vmatmul.mubr.f32.gmra.mrb[0].mxu0 %v325
    %v440 = vpop.f32.mrb[0].mxu0
    %v441 = vadd.f32 0.0, %v440
    %v442 = vpop.f32.mrb[0].mxu0
    %443 = vmatprep.mubr.f32.mxu0 0.0
    %444 = vmatmul.mubr.f32.gmra.mrb[0].mxu0 %v328
    %v445 = vpop.f32.mrb[0].mxu0
    %v446 = vadd.f32 0.0, %v445
    %v447 = vpop.f32.mrb[0].mxu0
    %448 = vmatprep.mubr.f32.mxu0 0.0
    %449 = vmatmul.mubr.f32.gmra.mrb[0].mxu0 %v331
    %v450 = vpop.f32.mrb[0].mxu0
    %v451 = vadd.f32 0.0, %v450
    %v452 = vpop.f32.mrb[0].mxu0
    %453 = vmatprep.mubr.f32.mxu0 0.0
    %454 = vmatmul.mubr.f32.gmra.mrb[0].mxu0 %v334
    %v455 = vpop.f32.mrb[0].mxu0
    %v456 = vadd.f32 0.0, %v455
    %v457 = vpop.f32.mrb[0].mxu0
    %458 = vmatprep.mubr.f32.mxu0 0.0
    %459 = vmatmul.mubr.f32.gmra.mrb[0].mxu0 %v337
    %v460 = vpop.f32.mrb[0].mxu0
    %v461 = vadd.f32 0.0, %v460
    %v462 = vpop.f32.mrb[0].mxu0
    %463 = vmatprep.mubr.f32.mxu0 0.0
    %464 = vmatmul.mubr.f32.gmra.mrb[0].mxu0 %v340
    %v465 = vpop.f32.mrb[0].mxu0
    %v466 = vadd.f32 0.0, %v465
    %v467 = vpop.f32.mrb[0].mxu0
    %468 = vmatprep.mubr.f32.mxu0 0.0
    %469 = vmatmul.mubr.f32.gmra.mrb[0].mxu0 %v343
    %v470 = vpop.f32.mrb[0].mxu0
    %v471 = vadd.f32 0.0, %v470
    %v472 = vpop.f32.mrb[0].mxu0
    %473 = vmatprep.mubr.f32.mxu0 0.0
    %474 = vmatmul.mubr.f32.gmra.mrb[0].mxu0 %v346
    %v475 = vpop.f32.mrb[0].mxu0
    %v476 = vadd.f32 0.0, %v475
    %v477 = vpop.f32.mrb[0].mxu0
    %478 = vmatprep.mubr.f32.mxu0 0.0
    %479 = vmatmul.mubr.f32.gmra.mrb[0].mxu0 %v349
    %v480 = vpop.f32.mrb[0].mxu0
    %v481 = vadd.f32 0.0, %v480
    %v482 = vpop.f32.mrb[0].mxu0
    %483 = vmatprep.mubr.f32.mxu0 0.0
    %484 = vmatmul.mubr.f32.gmra.mrb[0].mxu0 %v352
    %v485 = vpop.f32.mrb[0].mxu0
    %v486 = vadd.f32 0.0, %v485
    %v487 = vpop.f32.mrb[0].mxu0
    %488 = vmatprep.mubr.f32.mxu0 0.0
    %489 = vmatmul.mubr.f32.gmra.mrb[0].mxu0 %v355
    %v490 = vpop.f32.mrb[0].mxu0
    %v491 = vadd.f32 0.0, %v490
    %v492 = vpop.f32.mrb[0].mxu0
    %493 = vmatprep.mubr.f32.mxu0 0.0
    %494 = vmatmul.mubr.f32.gmra.mrb[0].mxu0 %v358
    %v495 = vpop.f32.mrb[0].mxu0
    %v496 = vadd.f32 0.0, %v495
    %v497 = vpop.f32.mrb[0].mxu0
    %498 = vmatprep.mubr.f32.mxu0 0.0
    %499 = vmatmul.mubr.f32.gmra.mrb[0].mxu0 %v361
    %v500 = vpop.f32.mrb[0].mxu0
    %v501 = vadd.f32 0.0, %v500
    %v502 = vpop.f32.mrb[0].mxu0
    %503 = vmatprep.mubr.f32.mxu0 0.0
    %504 = vmatmul.mubr.f32.gmra.mrb[0].mxu0 %v364
    %v505 = vpop.f32.mrb[0].mxu0
    %v506 = vadd.f32 0.0, %v505
    %v507 = vpop.f32.mrb[0].mxu0
    %508 = vmatprep.mubr.f32.mxu0 0.0
    %509 = vmatmul.mubr.f32.gmra.mrb[0].mxu0 %v367
    %v510 = vpop.f32.mrb[0].mxu0
    %v511 = vadd.f32 0.0, %v510
    %v512 = vpop.f32.mrb[0].mxu0
    %513 = vdwg.mxu0
    %s514 = scalar_lea.vmem [#allocation2], 48
    %515 = vst.msk [vmem:[%s514 + $0x3] sm:$0xff] %vm273, %v436
    %516 = vst.msk [vmem:[%s514 + $0x13] sm:$0xff] %vm273, %v441
    %517 = vst.msk [vmem:[%s514 + $0x23] sm:$0xff] %vm273, %v446
    %518 = vst.msk [vmem:[%s514 + $0x33] sm:$0xff] %vm273, %v451
    %519 = vst.msk [vmem:[%s514 + $0x43] sm:$0xff] %vm273, %v456
    %520 = vst.msk [vmem:[%s514 + $0x53] sm:$0xff] %vm273, %v461
    %521 = vst.msk [vmem:[%s514 + $0x63] sm:$0xff] %vm273, %v466
    %522 = vst.msk [vmem:[%s514 + $0x73] sm:$0xff] %vm273, %v471
    %523 = vst.msk [vmem:[%s514 + $0xb3] sm:$0xff] %vm273, %v476
    %524 = vst.msk [vmem:[%s514 + $0xc3] sm:$0xff] %vm273, %v481
    %525 = vst.msk [vmem:[%s514 + $0xd3] sm:$0xff] %vm273, %v486
    %526 = vst.msk [vmem:[%s514 + $0xe3] sm:$0xff] %vm273, %v491
    %527 = vst.msk [vmem:[%s514 + $0xf3] sm:$0xff] %vm273, %v496
    %528 = vst.msk [vmem:[%s514 + $0x103] sm:$0xff] %vm273, %v501
    %529 = vst.msk [vmem:[%s514 + $0x113] sm:$0xff] %vm273, %v506
    %530 = vst.msk [vmem:[%s514 + $0x123] sm:$0xff] %vm273, %v511
    %s531 = scalar_lea.vmem [#allocation2], 32
    %v532 = vld [vmem:[%s531 + $0x2] sm:$0xff]
    %v533 = vld [vmem:[%s531 + $0x12] sm:$0xff]
    %v534 = vld [vmem:[%s531 + $0x22] sm:$0xff]
    %v535 = vld [vmem:[%s531 + $0x32] sm:$0xff]
    %v536 = vld [vmem:[%s531 + $0x42] sm:$0xff]
    %v537 = vld [vmem:[%s531 + $0x52] sm:$0xff]
    %v538 = vld [vmem:[%s531 + $0x62] sm:$0xff]
    %v539 = vld [vmem:[%s531 + $0x72] sm:$0xff]
    %v540 = vld [vmem:[%s531 + $0xb2] sm:$0xff]
    %v541 = vld [vmem:[%s531 + $0xc2] sm:$0xff]
    %v542 = vld [vmem:[%s531 + $0xd2] sm:$0xff]
    %v543 = vld [vmem:[%s531 + $0xe2] sm:$0xff]
    %v544 = vld [vmem:[%s531 + $0xf2] sm:$0xff]
    %v545 = vld [vmem:[%s531 + $0x102] sm:$0xff]
    %v546 = vld [vmem:[%s531 + $0x112] sm:$0xff]
    %v547 = vld [vmem:[%s531 + $0x122] sm:$0xff]
    %548 = vst.msk [vmem:[#allocation3] sm:$0xff] %vm273, %v532
    %549 = vst.msk [vmem:[#allocation3 + $0x8] sm:$0xff] %vm273, %v533
    %550 = vst.msk [vmem:[#allocation3 + $0x10] sm:$0xff] %vm273, %v534
    %551 = vst.msk [vmem:[#allocation3 + $0x18] sm:$0xff] %vm273, %v535
    %552 = vst.msk [vmem:[#allocation3 + $0x20] sm:$0xff] %vm273, %v536
    %553 = vst.msk [vmem:[#allocation3 + $0x28] sm:$0xff] %vm273, %v537
    %554 = vst.msk [vmem:[#allocation3 + $0x30] sm:$0xff] %vm273, %v538
    %555 = vst.msk [vmem:[#allocation3 + $0x38] sm:$0xff] %vm273, %v539
    %556 = vst.msk [vmem:[#allocation3 + $0x40] sm:$0xff] %vm273, %v540
    %557 = vst.msk [vmem:[#allocation3 + $0x48] sm:$0xff] %vm273, %v541
    %558 = vst.msk [vmem:[#allocation3 + $0x50] sm:$0xff] %vm273, %v542
    %559 = vst.msk [vmem:[#allocation3 + $0x58] sm:$0xff] %vm273, %v543
    %560 = vst.msk [vmem:[#allocation3 + $0x60] sm:$0xff] %vm273, %v544
    %561 = vst.msk [vmem:[#allocation3 + $0x68] sm:$0xff] %vm273, %v545
    %562 = vst.msk [vmem:[#allocation3 + $0x70] sm:$0xff] %vm273, %v546
    %563 = vst.msk [vmem:[#allocation3 + $0x78] sm:$0xff] %vm273, %v547
    %v564 = vld [vmem:[%s531 + $0x3] sm:$0xff]
    %v565 = vld [vmem:[%s531 + $0x13] sm:$0xff]
    %v566 = vld [vmem:[%s531 + $0x23] sm:$0xff]
    %v567 = vld [vmem:[%s531 + $0x33] sm:$0xff]
    %v568 = vld [vmem:[%s531 + $0x43] sm:$0xff]
    %v569 = vld [vmem:[%s531 + $0x53] sm:$0xff]
    %v570 = vld [vmem:[%s531 + $0x63] sm:$0xff]
    %v571 = vld [vmem:[%s531 + $0x73] sm:$0xff]
    %v572 = vld [vmem:[%s531 + $0xb3] sm:$0xff]
    %v573 = vld [vmem:[%s531 + $0xc3] sm:$0xff]
    %v574 = vld [vmem:[%s531 + $0xd3] sm:$0xff]
    %v575 = vld [vmem:[%s531 + $0xe3] sm:$0xff]
    %v576 = vld [vmem:[%s531 + $0xf3] sm:$0xff]
    %v577 = vld [vmem:[%s531 + $0x103] sm:$0xff]
    %v578 = vld [vmem:[%s531 + $0x113] sm:$0xff]
    %v579 = vld [vmem:[%s531 + $0x123] sm:$0xff]
    %596 = vrot.lane.b32.xlu0 %v564, 16
    %v597 = vpop.permute.xlu0 %596
    %598 = vrot.lane.b32.xlu0 %v565, 16
    %v599 = vpop.permute.xlu0 %598
    %600 = vrot.lane.b32.xlu0 %v566, 16
    %v601 = vpop.permute.xlu0 %600
    %602 = vrot.lane.b32.xlu0 %v567, 16
    %v603 = vpop.permute.xlu0 %602
    %604 = vrot.lane.b32.xlu0 %v568, 16
    %v605 = vpop.permute.xlu0 %604
    %606 = vrot.lane.b32.xlu0 %v569, 16
    %v607 = vpop.permute.xlu0 %606
    %608 = vrot.lane.b32.xlu0 %v570, 16
    %v609 = vpop.permute.xlu0 %608
    %610 = vrot.lane.b32.xlu0 %v571, 16
    %v611 = vpop.permute.xlu0 %610
    %612 = vrot.lane.b32.xlu0 %v572, 16
    %v613 = vpop.permute.xlu0 %612
    %614 = vrot.lane.b32.xlu0 %v573, 16
    %v615 = vpop.permute.xlu0 %614
    %616 = vrot.lane.b32.xlu0 %v574, 16
    %v617 = vpop.permute.xlu0 %616
    %618 = vrot.lane.b32.xlu0 %v575, 16
    %v619 = vpop.permute.xlu0 %618
    %620 = vrot.lane.b32.xlu0 %v576, 16
    %v621 = vpop.permute.xlu0 %620
    %622 = vrot.lane.b32.xlu0 %v577, 16
    %v623 = vpop.permute.xlu0 %622
    %624 = vrot.lane.b32.xlu0 %v578, 16
    %v625 = vpop.permute.xlu0 %624
    %626 = vrot.lane.b32.xlu0 %v579, 16
    %v627 = vpop.permute.xlu0 %626
    %vm644 = vcmask 261248
    %645 = vst.msk [vmem:[#allocation3] sm:$0xff] %vm644, %v597
    %646 = vst.msk [vmem:[#allocation3 + $0x8] sm:$0xff] %vm644, %v599
    %647 = vst.msk [vmem:[#allocation3 + $0x10] sm:$0xff] %vm644, %v601
    %648 = vst.msk [vmem:[#allocation3 + $0x18] sm:$0xff] %vm644, %v603
    %649 = vst.msk [vmem:[#allocation3 + $0x20] sm:$0xff] %vm644, %v605
    %650 = vst.msk [vmem:[#allocation3 + $0x28] sm:$0xff] %vm644, %v607
    %651 = vst.msk [vmem:[#allocation3 + $0x30] sm:$0xff] %vm644, %v609
    %652 = vst.msk [vmem:[#allocation3 + $0x38] sm:$0xff] %vm644, %v611
    %653 = vst.msk [vmem:[#allocation3 + $0x40] sm:$0xff] %vm644, %v613
    %654 = vst.msk [vmem:[#allocation3 + $0x48] sm:$0xff] %vm644, %v615
    %655 = vst.msk [vmem:[#allocation3 + $0x50] sm:$0xff] %vm644, %v617
    %656 = vst.msk [vmem:[#allocation3 + $0x58] sm:$0xff] %vm644, %v619
    %657 = vst.msk [vmem:[#allocation3 + $0x60] sm:$0xff] %vm644, %v621
    %658 = vst.msk [vmem:[#allocation3 + $0x68] sm:$0xff] %vm644, %v623
    %659 = vst.msk [vmem:[#allocation3 + $0x70] sm:$0xff] %vm644, %v625
    %660 = vst.msk [vmem:[#allocation3 + $0x78] sm:$0xff] %vm644, %v627
    %v661 = vld [vmem:[%s531 + $0x4] sm:$0xff]
    %v662 = vld [vmem:[%s531 + $0x14] sm:$0xff]
    %v663 = vld [vmem:[%s531 + $0x24] sm:$0xff]
    %v664 = vld [vmem:[%s531 + $0x34] sm:$0xff]
    %v665 = vld [vmem:[%s531 + $0x44] sm:$0xff]
    %v666 = vld [vmem:[%s531 + $0x54] sm:$0xff]
    %v667 = vld [vmem:[%s531 + $0x64] sm:$0xff]
    %v668 = vld [vmem:[%s531 + $0x74] sm:$0xff]
    %v669 = vld [vmem:[%s531 + $0xb4] sm:$0xff]
    %v670 = vld [vmem:[%s531 + $0xc4] sm:$0xff]
    %v671 = vld [vmem:[%s531 + $0xd4] sm:$0xff]
    %v672 = vld [vmem:[%s531 + $0xe4] sm:$0xff]
    %v673 = vld [vmem:[%s531 + $0xf4] sm:$0xff]
    %v674 = vld [vmem:[%s531 + $0x104] sm:$0xff]
    %v675 = vld [vmem:[%s531 + $0x114] sm:$0xff]
    %v676 = vld [vmem:[%s531 + $0x124] sm:$0xff]
    %693 = vrot.lane.b32.xlu0 %v661, 32
    %v694 = vpop.permute.xlu0 %693
    %695 = vrot.lane.b32.xlu0 %v662, 32
    %v696 = vpop.permute.xlu0 %695
    %697 = vrot.lane.b32.xlu0 %v663, 32
    %v698 = vpop.permute.xlu0 %697
    %699 = vrot.lane.b32.xlu0 %v664, 32
    %v700 = vpop.permute.xlu0 %699
    %701 = vrot.lane.b32.xlu0 %v665, 32
    %v702 = vpop.permute.xlu0 %701
    %703 = vrot.lane.b32.xlu0 %v666, 32
    %v704 = vpop.permute.xlu0 %703
    %705 = vrot.lane.b32.xlu0 %v667, 32
    %v706 = vpop.permute.xlu0 %705
    %707 = vrot.lane.b32.xlu0 %v668, 32
    %v708 = vpop.permute.xlu0 %707
    %709 = vrot.lane.b32.xlu0 %v669, 32
    %v710 = vpop.permute.xlu0 %709
    %711 = vrot.lane.b32.xlu0 %v670, 32
    %v712 = vpop.permute.xlu0 %711
    %713 = vrot.lane.b32.xlu0 %v671, 32
    %v714 = vpop.permute.xlu0 %713
    %715 = vrot.lane.b32.xlu0 %v672, 32
    %v716 = vpop.permute.xlu0 %715
    %717 = vrot.lane.b32.xlu0 %v673, 32
    %v718 = vpop.permute.xlu0 %717
    %719 = vrot.lane.b32.xlu0 %v674, 32
    %v720 = vpop.permute.xlu0 %719
    %721 = vrot.lane.b32.xlu0 %v675, 32
    %v722 = vpop.permute.xlu0 %721
    %723 = vrot.lane.b32.xlu0 %v676, 32
    %v724 = vpop.permute.xlu0 %723
    %vm741 = vcmask 392448
    %742 = vst.msk [vmem:[#allocation3] sm:$0xff] %vm741, %v694
    %743 = vst.msk [vmem:[#allocation3 + $0x8] sm:$0xff] %vm741, %v696
    %744 = vst.msk [vmem:[#allocation3 + $0x10] sm:$0xff] %vm741, %v698
    %745 = vst.msk [vmem:[#allocation3 + $0x18] sm:$0xff] %vm741, %v700
    %746 = vst.msk [vmem:[#allocation3 + $0x20] sm:$0xff] %vm741, %v702
    %747 = vst.msk [vmem:[#allocation3 + $0x28] sm:$0xff] %vm741, %v704
    %748 = vst.msk [vmem:[#allocation3 + $0x30] sm:$0xff] %vm741, %v706
    %749 = vst.msk [vmem:[#allocation3 + $0x38] sm:$0xff] %vm741, %v708
    %750 = vst.msk [vmem:[#allocation3 + $0x40] sm:$0xff] %vm741, %v710
    %751 = vst.msk [vmem:[#allocation3 + $0x48] sm:$0xff] %vm741, %v712
    %752 = vst.msk [vmem:[#allocation3 + $0x50] sm:$0xff] %vm741, %v714
    %753 = vst.msk [vmem:[#allocation3 + $0x58] sm:$0xff] %vm741, %v716
    %754 = vst.msk [vmem:[#allocation3 + $0x60] sm:$0xff] %vm741, %v718
    %755 = vst.msk [vmem:[#allocation3 + $0x68] sm:$0xff] %vm741, %v720
    %756 = vst.msk [vmem:[#allocation3 + $0x70] sm:$0xff] %vm741, %v722
    %757 = vst.msk [vmem:[#allocation3 + $0x78] sm:$0xff] %vm741, %v724
    %v758 = vld [vmem:[%s514 + $0x2] sm:$0xff]
    %v759 = vld [vmem:[%s514 + $0x12] sm:$0xff]
    %v760 = vld [vmem:[%s514 + $0x22] sm:$0xff]
    %v761 = vld [vmem:[%s514 + $0x32] sm:$0xff]
    %v762 = vld [vmem:[%s514 + $0x42] sm:$0xff]
    %v763 = vld [vmem:[%s514 + $0x52] sm:$0xff]
    %v764 = vld [vmem:[%s514 + $0x62] sm:$0xff]
    %v765 = vld [vmem:[%s514 + $0x72] sm:$0xff]
    %v766 = vld [vmem:[%s514 + $0xb2] sm:$0xff]
    %v767 = vld [vmem:[%s514 + $0xc2] sm:$0xff]
    %v768 = vld [vmem:[%s514 + $0xd2] sm:$0xff]
    %v769 = vld [vmem:[%s514 + $0xe2] sm:$0xff]
    %v770 = vld [vmem:[%s514 + $0xf2] sm:$0xff]
    %v771 = vld [vmem:[%s514 + $0x102] sm:$0xff]
    %v772 = vld [vmem:[%s514 + $0x112] sm:$0xff]
    %v773 = vld [vmem:[%s514 + $0x122] sm:$0xff]
    %790 = vrot.lane.b32.xlu0 %v758, 48
    %v791 = vpop.permute.xlu0 %790
    %792 = vrot.lane.b32.xlu0 %v759, 48
    %v793 = vpop.permute.xlu0 %792
    %794 = vrot.lane.b32.xlu0 %v760, 48
    %v795 = vpop.permute.xlu0 %794
    %796 = vrot.lane.b32.xlu0 %v761, 48
    %v797 = vpop.permute.xlu0 %796
    %798 = vrot.lane.b32.xlu0 %v762, 48
    %v799 = vpop.permute.xlu0 %798
    %800 = vrot.lane.b32.xlu0 %v763, 48
    %v801 = vpop.permute.xlu0 %800
    %802 = vrot.lane.b32.xlu0 %v764, 48
    %v803 = vpop.permute.xlu0 %802
    %804 = vrot.lane.b32.xlu0 %v765, 48
    %v805 = vpop.permute.xlu0 %804
    %806 = vrot.lane.b32.xlu0 %v766, 48
    %v807 = vpop.permute.xlu0 %806
    %808 = vrot.lane.b32.xlu0 %v767, 48
    %v809 = vpop.permute.xlu0 %808
    %810 = vrot.lane.b32.xlu0 %v768, 48
    %v811 = vpop.permute.xlu0 %810
    %812 = vrot.lane.b32.xlu0 %v769, 48
    %v813 = vpop.permute.xlu0 %812
    %814 = vrot.lane.b32.xlu0 %v770, 48
    %v815 = vpop.permute.xlu0 %814
    %816 = vrot.lane.b32.xlu0 %v771, 48
    %v817 = vpop.permute.xlu0 %816
    %818 = vrot.lane.b32.xlu0 %v772, 48
    %v819 = vpop.permute.xlu0 %818
    %820 = vrot.lane.b32.xlu0 %v773, 48
    %v821 = vpop.permute.xlu0 %820
    %vm838 = vcmask 523648
    %839 = vst.msk [vmem:[#allocation3] sm:$0xff] %vm838, %v791
    %840 = vst.msk [vmem:[#allocation3 + $0x8] sm:$0xff] %vm838, %v793
    %841 = vst.msk [vmem:[#allocation3 + $0x10] sm:$0xff] %vm838, %v795
    %842 = vst.msk [vmem:[#allocation3 + $0x18] sm:$0xff] %vm838, %v797
    %843 = vst.msk [vmem:[#allocation3 + $0x20] sm:$0xff] %vm838, %v799
    %844 = vst.msk [vmem:[#allocation3 + $0x28] sm:$0xff] %vm838, %v801
    %845 = vst.msk [vmem:[#allocation3 + $0x30] sm:$0xff] %vm838, %v803
    %846 = vst.msk [vmem:[#allocation3 + $0x38] sm:$0xff] %vm838, %v805
    %847 = vst.msk [vmem:[#allocation3 + $0x40] sm:$0xff] %vm838, %v807
    %848 = vst.msk [vmem:[#allocation3 + $0x48] sm:$0xff] %vm838, %v809
    %849 = vst.msk [vmem:[#allocation3 + $0x50] sm:$0xff] %vm838, %v811
    %850 = vst.msk [vmem:[#allocation3 + $0x58] sm:$0xff] %vm838, %v813
    %851 = vst.msk [vmem:[#allocation3 + $0x60] sm:$0xff] %vm838, %v815
    %852 = vst.msk [vmem:[#allocation3 + $0x68] sm:$0xff] %vm838, %v817
    %853 = vst.msk [vmem:[#allocation3 + $0x70] sm:$0xff] %vm838, %v819
    %854 = vst.msk [vmem:[#allocation3 + $0x78] sm:$0xff] %vm838, %v821
    %v855 = vld [vmem:[%s514 + $0x3] sm:$0xff]
    %v856 = vld [vmem:[%s514 + $0x13] sm:$0xff]
    %v857 = vld [vmem:[%s514 + $0x23] sm:$0xff]
    %v858 = vld [vmem:[%s514 + $0x33] sm:$0xff]
    %v859 = vld [vmem:[%s514 + $0x43] sm:$0xff]
    %v860 = vld [vmem:[%s514 + $0x53] sm:$0xff]
    %v861 = vld [vmem:[%s514 + $0x63] sm:$0xff]
    %v862 = vld [vmem:[%s514 + $0x73] sm:$0xff]
    %v863 = vld [vmem:[%s514 + $0xb3] sm:$0xff]
    %v864 = vld [vmem:[%s514 + $0xc3] sm:$0xff]
    %v865 = vld [vmem:[%s514 + $0xd3] sm:$0xff]
    %v866 = vld [vmem:[%s514 + $0xe3] sm:$0xff]
    %v867 = vld [vmem:[%s514 + $0xf3] sm:$0xff]
    %v868 = vld [vmem:[%s514 + $0x103] sm:$0xff]
    %v869 = vld [vmem:[%s514 + $0x113] sm:$0xff]
    %v870 = vld [vmem:[%s514 + $0x123] sm:$0xff]
    %887 = vrot.lane.b32.xlu0 %v855, 64
    %v888 = vpop.permute.xlu0 %887
    %889 = vrot.lane.b32.xlu0 %v856, 64
    %v890 = vpop.permute.xlu0 %889
    %891 = vrot.lane.b32.xlu0 %v857, 64
    %v892 = vpop.permute.xlu0 %891
    %893 = vrot.lane.b32.xlu0 %v858, 64
    %v894 = vpop.permute.xlu0 %893
    %895 = vrot.lane.b32.xlu0 %v859, 64
    %v896 = vpop.permute.xlu0 %895
    %897 = vrot.lane.b32.xlu0 %v860, 64
    %v898 = vpop.permute.xlu0 %897
    %899 = vrot.lane.b32.xlu0 %v861, 64
    %v900 = vpop.permute.xlu0 %899
    %901 = vrot.lane.b32.xlu0 %v862, 64
    %v902 = vpop.permute.xlu0 %901
    %903 = vrot.lane.b32.xlu0 %v863, 64
    %v904 = vpop.permute.xlu0 %903
    %905 = vrot.lane.b32.xlu0 %v864, 64
    %v906 = vpop.permute.xlu0 %905
    %907 = vrot.lane.b32.xlu0 %v865, 64
    %v908 = vpop.permute.xlu0 %907
    %909 = vrot.lane.b32.xlu0 %v866, 64
    %v910 = vpop.permute.xlu0 %909
    %911 = vrot.lane.b32.xlu0 %v867, 64
    %v912 = vpop.permute.xlu0 %911
    %913 = vrot.lane.b32.xlu0 %v868, 64
    %v914 = vpop.permute.xlu0 %913
    %915 = vrot.lane.b32.xlu0 %v869, 64
    %v916 = vpop.permute.xlu0 %915
    %917 = vrot.lane.b32.xlu0 %v870, 64
    %v918 = vpop.permute.xlu0 %917
    %vm935 = vcmask 654848
    %936 = vst.msk [vmem:[#allocation3] sm:$0xff] %vm935, %v888
    %937 = vst.msk [vmem:[#allocation3 + $0x8] sm:$0xff] %vm935, %v890
    %938 = vst.msk [vmem:[#allocation3 + $0x10] sm:$0xff] %vm935, %v892
    %939 = vst.msk [vmem:[#allocation3 + $0x18] sm:$0xff] %vm935, %v894
    %940 = vst.msk [vmem:[#allocation3 + $0x20] sm:$0xff] %vm935, %v896
    %941 = vst.msk [vmem:[#allocation3 + $0x28] sm:$0xff] %vm935, %v898
    %942 = vst.msk [vmem:[#allocation3 + $0x30] sm:$0xff] %vm935, %v900
    %943 = vst.msk [vmem:[#allocation3 + $0x38] sm:$0xff] %vm935, %v902
    %944 = vst.msk [vmem:[#allocation3 + $0x40] sm:$0xff] %vm935, %v904
    %945 = vst.msk [vmem:[#allocation3 + $0x48] sm:$0xff] %vm935, %v906
    %946 = vst.msk [vmem:[#allocation3 + $0x50] sm:$0xff] %vm935, %v908
    %947 = vst.msk [vmem:[#allocation3 + $0x58] sm:$0xff] %vm935, %v910
    %948 = vst.msk [vmem:[#allocation3 + $0x60] sm:$0xff] %vm935, %v912
    %949 = vst.msk [vmem:[#allocation3 + $0x68] sm:$0xff] %vm935, %v914
    %950 = vst.msk [vmem:[#allocation3 + $0x70] sm:$0xff] %vm935, %v916
    %951 = vst.msk [vmem:[#allocation3 + $0x78] sm:$0xff] %vm935, %v918
    %v952 = vld [vmem:[%s514 + $0x4] sm:$0xff]
    %v953 = vld [vmem:[%s514 + $0x14] sm:$0xff]
    %v954 = vld [vmem:[%s514 + $0x24] sm:$0xff]
    %v955 = vld [vmem:[%s514 + $0x34] sm:$0xff]
    %v956 = vld [vmem:[%s514 + $0x44] sm:$0xff]
    %v957 = vld [vmem:[%s514 + $0x54] sm:$0xff]
    %v958 = vld [vmem:[%s514 + $0x64] sm:$0xff]
    %v959 = vld [vmem:[%s514 + $0x74] sm:$0xff]
    %v960 = vld [vmem:[%s514 + $0xb4] sm:$0xff]
    %v961 = vld [vmem:[%s514 + $0xc4] sm:$0xff]
    %v962 = vld [vmem:[%s514 + $0xd4] sm:$0xff]
    %v963 = vld [vmem:[%s514 + $0xe4] sm:$0xff]
    %v964 = vld [vmem:[%s514 + $0xf4] sm:$0xff]
    %v965 = vld [vmem:[%s514 + $0x104] sm:$0xff]
    %v966 = vld [vmem:[%s514 + $0x114] sm:$0xff]
    %v967 = vld [vmem:[%s514 + $0x124] sm:$0xff]
    %984 = vrot.lane.b32.xlu0 %v952, 80
    %v985 = vpop.permute.xlu0 %984
    %986 = vrot.lane.b32.xlu0 %v953, 80
    %v987 = vpop.permute.xlu0 %986
    %988 = vrot.lane.b32.xlu0 %v954, 80
    %v989 = vpop.permute.xlu0 %988
    %990 = vrot.lane.b32.xlu0 %v955, 80
    %v991 = vpop.permute.xlu0 %990
    %992 = vrot.lane.b32.xlu0 %v956, 80
    %v993 = vpop.permute.xlu0 %992
    %994 = vrot.lane.b32.xlu0 %v957, 80
    %v995 = vpop.permute.xlu0 %994
    %996 = vrot.lane.b32.xlu0 %v958, 80
    %v997 = vpop.permute.xlu0 %996
    %998 = vrot.lane.b32.xlu0 %v959, 80
    %v999 = vpop.permute.xlu0 %998
    %1000 = vrot.lane.b32.xlu0 %v960, 80
    %v1001 = vpop.permute.xlu0 %1000
    %1002 = vrot.lane.b32.xlu0 %v961, 80
    %v1003 = vpop.permute.xlu0 %1002
    %1004 = vrot.lane.b32.xlu0 %v962, 80
    %v1005 = vpop.permute.xlu0 %1004
    %1006 = vrot.lane.b32.xlu0 %v963, 80
    %v1007 = vpop.permute.xlu0 %1006
    %1008 = vrot.lane.b32.xlu0 %v964, 80
    %v1009 = vpop.permute.xlu0 %1008
    %1010 = vrot.lane.b32.xlu0 %v965, 80
    %v1011 = vpop.permute.xlu0 %1010
    %1012 = vrot.lane.b32.xlu0 %v966, 80
    %v1013 = vpop.permute.xlu0 %1012
    %1014 = vrot.lane.b32.xlu0 %v967, 80
    %v1015 = vpop.permute.xlu0 %1014
    %vm1032 = vcmask 786048
    %1033 = vst.msk [vmem:[#allocation3] sm:$0xff] %vm1032, %v985
    %1034 = vst.msk [vmem:[#allocation3 + $0x8] sm:$0xff] %vm1032, %v987
    %1035 = vst.msk [vmem:[#allocation3 + $0x10] sm:$0xff] %vm1032, %v989
    %1036 = vst.msk [vmem:[#allocation3 + $0x18] sm:$0xff] %vm1032, %v991
    %1037 = vst.msk [vmem:[#allocation3 + $0x20] sm:$0xff] %vm1032, %v993
    %1038 = vst.msk [vmem:[#allocation3 + $0x28] sm:$0xff] %vm1032, %v995
    %1039 = vst.msk [vmem:[#allocation3 + $0x30] sm:$0xff] %vm1032, %v997
    %1040 = vst.msk [vmem:[#allocation3 + $0x38] sm:$0xff] %vm1032, %v999
    %1041 = vst.msk [vmem:[#allocation3 + $0x40] sm:$0xff] %vm1032, %v1001
    %1042 = vst.msk [vmem:[#allocation3 + $0x48] sm:$0xff] %vm1032, %v1003
    %1043 = vst.msk [vmem:[#allocation3 + $0x50] sm:$0xff] %vm1032, %v1005
    %1044 = vst.msk [vmem:[#allocation3 + $0x58] sm:$0xff] %vm1032, %v1007
    %1045 = vst.msk [vmem:[#allocation3 + $0x60] sm:$0xff] %vm1032, %v1009
    %1046 = vst.msk [vmem:[#allocation3 + $0x68] sm:$0xff] %vm1032, %v1011
    %1047 = vst.msk [vmem:[#allocation3 + $0x70] sm:$0xff] %vm1032, %v1013
    %1048 = vst.msk [vmem:[#allocation3 + $0x78] sm:$0xff] %vm1032, %v1015
    %v1049 = vld [vmem:[#allocation3] sm:$0xff]
    %v1050 = vld [vmem:[#allocation3 + $0x8] sm:$0xff]
    %v1051 = vld [vmem:[#allocation3 + $0x10] sm:$0xff]
    %v1052 = vld [vmem:[#allocation3 + $0x18] sm:$0xff]
    %v1053 = vld [vmem:[#allocation3 + $0x20] sm:$0xff]
    %v1054 = vld [vmem:[#allocation3 + $0x28] sm:$0xff]
    %v1055 = vld [vmem:[#allocation3 + $0x30] sm:$0xff]
    %v1056 = vld [vmem:[#allocation3 + $0x38] sm:$0xff]
    %v1057 = vld [vmem:[#allocation3 + $0x40] sm:$0xff]
    %v1058 = vld [vmem:[#allocation3 + $0x48] sm:$0xff]
    %v1059 = vld [vmem:[#allocation3 + $0x50] sm:$0xff]
    %v1060 = vld [vmem:[#allocation3 + $0x58] sm:$0xff]
    %v1061 = vld [vmem:[#allocation3 + $0x60] sm:$0xff]
    %v1062 = vld [vmem:[#allocation3 + $0x68] sm:$0xff]
    %v1063 = vld [vmem:[#allocation3 + $0x70] sm:$0xff]
    %v1064 = vld [vmem:[#allocation3 + $0x78] sm:$0xff]
    %v1065 = vld [vmem:[%s4] sm:$0xff]
    %v1066 = vld [vmem:[%s4 + $0x8] sm:$0xff]
    %v1067 = vld [vmem:[%s4 + $0x10] sm:$0xff]
    %v1068 = vld [vmem:[%s4 + $0x18] sm:$0xff]
    %v1069 = vld [vmem:[%s4 + $0x20] sm:$0xff]
    %v1070 = vld [vmem:[%s4 + $0x28] sm:$0xff]
    %v1071 = vld [vmem:[%s4 + $0x30] sm:$0xff]
    %v1072 = vld [vmem:[%s4 + $0x38] sm:$0xff]
    %v1073 = vld [vmem:[%s4 + $0x40] sm:$0xff]
    %v1074 = vld [vmem:[%s4 + $0x48] sm:$0xff]
    %v1075 = vld [vmem:[%s4 + $0x50] sm:$0xff]
    %v1076 = vld [vmem:[%s4 + $0x58] sm:$0xff]
    %v1077 = vld [vmem:[%s5] sm:$0x1]
    %v1079 = vlaneseq
    %v1080 = vshrl.u32 %v1079, 7
    %v1081 = vsub.s32 0, %v1080
    %v1082 = vrot.slane %v1077, %v1081
    %vm1084 = vcmask 785408
    %v1086 = vsel %vm1084, %v1049, 0
    %v1089 = vsel %vm1084, %v1050, 0
    %v1092 = vsel %vm1084, %v1051, 0
    %v1095 = vsel %vm1084, %v1052, 0
    %v1098 = vsel %vm1084, %v1053, 0
    %v1101 = vsel %vm1084, %v1054, 0
    %v1104 = vsel %vm1084, %v1055, 0
    %v1107 = vsel %vm1084, %v1056, 0
    %v1110 = vsel %vm1084, %v1057, 0
    %v1113 = vsel %vm1084, %v1058, 0
    %v1116 = vsel %vm1084, %v1059, 0
    %v1119 = vsel %vm1084, %v1060, 0
    %v1122 = vsel %vm1084, %v1061, 0
    %v1125 = vsel %vm1084, %v1062, 0
    %v1128 = vsel %vm1084, %v1063, 0
    %v1131 = vsel %vm1084, %v1064, 0
    %1133 = vmatprep.subr.mxu0 0.0
    %1134 = vmatpush1.msra.mxu0 %v1065
    %1135 = vmatprep.subr.mxu0 0.0
    %1136 = vmatpush1.msra.mxu0 %v1066
    %1137 = vmatprep.subr.mxu0 0.0
    %1138 = vmatpush1.msra.mxu0 %v1067
    %1139 = vmatprep.subr.mxu0 0.0
    %1140 = vmatpush1.msra.mxu0 %v1068
    %1141 = vmatprep.subr.mxu0 0.0
    %1142 = vmatpush1.msra.mxu0 %v1069
    %1143 = vmatprep.subr.mxu0 0.0
    %1144 = vmatpush1.msra.mxu0 %v1070
    %1145 = vmatprep.subr.mxu0 0.0
    %1146 = vmatpush1.msra.mxu0 %v1071
    %1147 = vmatprep.subr.mxu0 0.0
    %1148 = vmatpush1.msra.mxu0 %v1072
    %1149 = vmatprep.subr.mxu0 0.0
    %1150 = vmatpush1.msra.mxu0 %v1073
    %1151 = vmatprep.subr.mxu0 0.0
    %1152 = vmatpush1.msra.mxu0 %v1074
    %1153 = vmatprep.subr.mxu0 0.0
    %1154 = vmatpush1.msra.mxu0 %v1075
    %1155 = vmatprep.subr.mxu0 0.0
    %1156 = vmatpush1.msra.mxu0 %v1076
    %1157 = vmatprep.subr.mxu0 0.0
    %1158 = vmatpush1.msra.mxu0 0.0
    %1159 = vmatprep.subr.mxu0 0.0
    %1160 = vmatpush1.msra.mxu0 0.0
    %1161 = vmatprep.subr.mxu0 0.0
    %1162 = vmatpush1.msra.mxu0 0.0
    %1163 = vmatprep.subr.mxu0 0.0
    %1164 = vmatpush1.msra.mxu0 0.0
    %1165 = vmatprep.subr.mxu0 0.0
    %1166 = vmatpush1.msra.mxu0 0.0
    %1167 = vmatprep.subr.mxu0 0.0
    %1168 = vmatpush1.msra.mxu0 0.0
    %1169 = vmatprep.subr.mxu0 0.0
    %1170 = vmatpush1.msra.mxu0 0.0
    %1171 = vmatprep.subr.mxu0 0.0
    %1172 = vmatpush1.msra.mxu0 0.0
    %1173 = vmatprep.subr.mxu0 0.0
    %1174 = vmatpush1.msra.mxu0 0.0
    %1175 = vmatprep.subr.mxu0 0.0
    %1176 = vmatpush1.msra.mxu0 0.0
    %1177 = vmatprep.subr.mxu0 0.0
    %1178 = vmatpush1.msra.mxu0 0.0
    %1179 = vmatprep.subr.mxu0 0.0
    %1180 = vmatpush1.msra.mxu0 0.0
    %1181 = vmatprep.subr.mxu0 0.0
    %1182 = vmatpush1.msra.mxu0 0.0
    %1183 = vmatprep.subr.mxu0 0.0
    %1184 = vmatpush1.msra.mxu0 0.0
    %1185 = vmatprep.subr.mxu0 0.0
    %1186 = vmatpush1.msra.mxu0 0.0
    %1187 = vmatprep.subr.mxu0 0.0
    %1188 = vmatpush1.msra.mxu0 0.0
    %1189 = vmatprep.subr.mxu0 0.0
    %1190 = vmatpush1.msra.mxu0 0.0
    %1191 = vmatprep.subr.mxu0 0.0
    %1192 = vmatpush1.msra.mxu0 0.0
    %1193 = vmatprep.subr.mxu0 0.0
    %1194 = vmatpush1.msra.mxu0 0.0
    %1195 = vmatprep.subr.mxu0 0.0
    %1196 = vmatpush1.msra.mxu0 0.0
    %1197 = vmatprep.mubr.f32.mxu0 0.0
    %1198 = vmatmul.mubr.f32.gmra.mrb[0].mxu0 %v1086
    %v1199 = vpop.f32.mrb[0].mxu0
    %v1200 = vadd.f32 %v1082, %v1199
    %v1201 = vpop.f32.mrb[0].mxu0
    %1202 = vmatprep.mubr.f32.mxu0 0.0
    %1203 = vmatmul.mubr.f32.gmra.mrb[0].mxu0 %v1089
    %v1204 = vpop.f32.mrb[0].mxu0
    %v1205 = vadd.f32 %v1082, %v1204
    %v1206 = vpop.f32.mrb[0].mxu0
    %1207 = vmatprep.mubr.f32.mxu0 0.0
    %1208 = vmatmul.mubr.f32.gmra.mrb[0].mxu0 %v1092
    %v1209 = vpop.f32.mrb[0].mxu0
    %v1210 = vadd.f32 %v1082, %v1209
    %v1211 = vpop.f32.mrb[0].mxu0
    %1212 = vmatprep.mubr.f32.mxu0 0.0
    %1213 = vmatmul.mubr.f32.gmra.mrb[0].mxu0 %v1095
    %v1214 = vpop.f32.mrb[0].mxu0
    %v1215 = vadd.f32 %v1082, %v1214
    %v1216 = vpop.f32.mrb[0].mxu0
    %1217 = vmatprep.mubr.f32.mxu0 0.0
    %1218 = vmatmul.mubr.f32.gmra.mrb[0].mxu0 %v1098
    %v1219 = vpop.f32.mrb[0].mxu0
    %v1220 = vadd.f32 %v1082, %v1219
    %v1221 = vpop.f32.mrb[0].mxu0
    %1222 = vmatprep.mubr.f32.mxu0 0.0
    %1223 = vmatmul.mubr.f32.gmra.mrb[0].mxu0 %v1101
    %v1224 = vpop.f32.mrb[0].mxu0
    %v1225 = vadd.f32 %v1082, %v1224
    %v1226 = vpop.f32.mrb[0].mxu0
    %1227 = vmatprep.mubr.f32.mxu0 0.0
    %1228 = vmatmul.mubr.f32.gmra.mrb[0].mxu0 %v1104
    %v1229 = vpop.f32.mrb[0].mxu0
    %v1230 = vadd.f32 %v1082, %v1229
    %v1231 = vpop.f32.mrb[0].mxu0
    %1232 = vmatprep.mubr.f32.mxu0 0.0
    %1233 = vmatmul.mubr.f32.gmra.mrb[0].mxu0 %v1107
    %v1234 = vpop.f32.mrb[0].mxu0
    %v1235 = vadd.f32 %v1082, %v1234
    %v1236 = vpop.f32.mrb[0].mxu0
    %1237 = vmatprep.mubr.f32.mxu0 0.0
    %1238 = vmatmul.mubr.f32.gmra.mrb[0].mxu0 %v1110
    %v1239 = vpop.f32.mrb[0].mxu0
    %v1240 = vadd.f32 %v1082, %v1239
    %v1241 = vpop.f32.mrb[0].mxu0
    %1242 = vmatprep.mubr.f32.mxu0 0.0
    %1243 = vmatmul.mubr.f32.gmra.mrb[0].mxu0 %v1113
    %v1244 = vpop.f32.mrb[0].mxu0
    %v1245 = vadd.f32 %v1082, %v1244
    %v1246 = vpop.f32.mrb[0].mxu0
    %1247 = vmatprep.mubr.f32.mxu0 0.0
    %1248 = vmatmul.mubr.f32.gmra.mrb[0].mxu0 %v1116
    %v1249 = vpop.f32.mrb[0].mxu0
    %v1250 = vadd.f32 %v1082, %v1249
    %v1251 = vpop.f32.mrb[0].mxu0
    %1252 = vmatprep.mubr.f32.mxu0 0.0
    %1253 = vmatmul.mubr.f32.gmra.mrb[0].mxu0 %v1119
    %v1254 = vpop.f32.mrb[0].mxu0
    %v1255 = vadd.f32 %v1082, %v1254
    %v1256 = vpop.f32.mrb[0].mxu0
    %1257 = vmatprep.mubr.f32.mxu0 0.0
    %1258 = vmatmul.mubr.f32.gmra.mrb[0].mxu0 %v1122
    %v1259 = vpop.f32.mrb[0].mxu0
    %v1260 = vadd.f32 %v1082, %v1259
    %v1261 = vpop.f32.mrb[0].mxu0
    %1262 = vmatprep.mubr.f32.mxu0 0.0
    %1263 = vmatmul.mubr.f32.gmra.mrb[0].mxu0 %v1125
    %v1264 = vpop.f32.mrb[0].mxu0
    %v1265 = vadd.f32 %v1082, %v1264
    %v1266 = vpop.f32.mrb[0].mxu0
    %1267 = vmatprep.mubr.f32.mxu0 0.0
    %1268 = vmatmul.mubr.f32.gmra.mrb[0].mxu0 %v1128
    %v1269 = vpop.f32.mrb[0].mxu0
    %v1270 = vadd.f32 %v1082, %v1269
    %v1271 = vpop.f32.mrb[0].mxu0
    %1272 = vmatprep.mubr.f32.mxu0 0.0
    %1273 = vmatmul.mubr.f32.gmra.mrb[0].mxu0 %v1131
    %v1274 = vpop.f32.mrb[0].mxu0
    %v1275 = vadd.f32 %v1082, %v1274
    %v1276 = vpop.f32.mrb[0].mxu0
    %1277 = vdwg.mxu0
    %v1278 = vadd.f32 %v1200, %v179
    %v1279 = vadd.f32 %v1205, %v184
    %v1280 = vadd.f32 %v1210, %v189
    %v1281 = vadd.f32 %v1215, %v194
    %v1282 = vadd.f32 %v1220, %v199
    %v1283 = vadd.f32 %v1225, %v204
    %v1284 = vadd.f32 %v1230, %v209
    %v1285 = vadd.f32 %v1235, %v214
    %v1286 = vadd.f32 %v1240, %v219
    %v1287 = vadd.f32 %v1245, %v224
    %v1288 = vadd.f32 %v1250, %v229
    %v1289 = vadd.f32 %v1255, %v234
    %v1290 = vadd.f32 %v1260, %v239
    %v1291 = vadd.f32 %v1265, %v244
    %v1292 = vadd.f32 %v1270, %v249
    %v1293 = vadd.f32 %v1275, %v254
    %v1294 = vmul.f32 %v1278, 0.70710677
    %v1295 = vmul.f32 %v1279, 0.70710677
    %v1296 = vmul.f32 %v1280, 0.70710677
    %v1297 = vmul.f32 %v1281, 0.70710677
    %v1298 = vmul.f32 %v1282, 0.70710677
    %v1299 = vmul.f32 %v1283, 0.70710677
    %v1300 = vmul.f32 %v1284, 0.70710677
    %v1301 = vmul.f32 %v1285, 0.70710677
    %v1302 = vmul.f32 %v1286, 0.70710677
    %v1303 = vmul.f32 %v1287, 0.70710677
    %v1304 = vmul.f32 %v1288, 0.70710677
    %v1305 = vmul.f32 %v1289, 0.70710677
    %v1306 = vmul.f32 %v1290, 0.70710677
    %v1307 = vmul.f32 %v1291, 0.70710677
    %v1308 = vmul.f32 %v1292, 0.70710677
    %v1309 = vmul.f32 %v1293, 0.70710677
    %v1310 = vld [vmem:[%s6] sm:$0xff]
    %v1311 = vld [vmem:[%s6 + $0x8] sm:$0xff]
    %v1312 = vld [vmem:[%s7] sm:$0x1]
    %v1314 = vlaneseq
    %v1315 = vshrl.u32 %v1314, 7
    %v1316 = vsub.s32 0, %v1315
    %v1317 = vrot.slane %v1312, %v1316
    %v1320 = vsel %vm273, %v1294, 0
    %v1323 = vsel %vm273, %v1295, 0
    %v1326 = vsel %vm273, %v1296, 0
    %v1329 = vsel %vm273, %v1297, 0
    %v1332 = vsel %vm273, %v1298, 0
    %v1335 = vsel %vm273, %v1299, 0
    %v1338 = vsel %vm273, %v1300, 0
    %v1341 = vsel %vm273, %v1301, 0
    %v1344 = vsel %vm273, %v1302, 0
    %v1347 = vsel %vm273, %v1303, 0
    %v1350 = vsel %vm273, %v1304, 0
    %v1353 = vsel %vm273, %v1305, 0
    %v1356 = vsel %vm273, %v1306, 0
    %v1359 = vsel %vm273, %v1307, 0
    %v1362 = vsel %vm273, %v1308, 0
    %v1365 = vsel %vm273, %v1309, 0
    %1367 = vmatprep.subr.mxu0 0.0
    %1368 = vmatpush1.msra.mxu0 %v1310
    %1369 = vmatprep.subr.mxu0 0.0
    %1370 = vmatpush1.msra.mxu0 %v1311
    %1371 = vmatprep.subr.mxu0 0.0
    %1372 = vmatpush1.msra.mxu0 0.0
    %1373 = vmatprep.subr.mxu0 0.0
    %1374 = vmatpush1.msra.mxu0 0.0
    %1375 = vmatprep.subr.mxu0 0.0
    %1376 = vmatpush1.msra.mxu0 0.0
    %1377 = vmatprep.subr.mxu0 0.0
    %1378 = vmatpush1.msra.mxu0 0.0
    %1379 = vmatprep.subr.mxu0 0.0
    %1380 = vmatpush1.msra.mxu0 0.0
    %1381 = vmatprep.subr.mxu0 0.0
    %1382 = vmatpush1.msra.mxu0 0.0
    %1383 = vmatprep.subr.mxu0 0.0
    %1384 = vmatpush1.msra.mxu0 0.0
    %1385 = vmatprep.subr.mxu0 0.0
    %1386 = vmatpush1.msra.mxu0 0.0
    %1387 = vmatprep.subr.mxu0 0.0
    %1388 = vmatpush1.msra.mxu0 0.0
    %1389 = vmatprep.subr.mxu0 0.0
    %1390 = vmatpush1.msra.mxu0 0.0
    %1391 = vmatprep.subr.mxu0 0.0
    %1392 = vmatpush1.msra.mxu0 0.0
    %1393 = vmatprep.subr.mxu0 0.0
    %1394 = vmatpush1.msra.mxu0 0.0
    %1395 = vmatprep.subr.mxu0 0.0
    %1396 = vmatpush1.msra.mxu0 0.0
    %1397 = vmatprep.subr.mxu0 0.0
    %1398 = vmatpush1.msra.mxu0 0.0
    %1399 = vmatprep.subr.mxu0 0.0
    %1400 = vmatpush1.msra.mxu0 0.0
    %1401 = vmatprep.subr.mxu0 0.0
    %1402 = vmatpush1.msra.mxu0 0.0
    %1403 = vmatprep.subr.mxu0 0.0
    %1404 = vmatpush1.msra.mxu0 0.0
    %1405 = vmatprep.subr.mxu0 0.0
    %1406 = vmatpush1.msra.mxu0 0.0
    %1407 = vmatprep.subr.mxu0 0.0
    %1408 = vmatpush1.msra.mxu0 0.0
    %1409 = vmatprep.subr.mxu0 0.0
    %1410 = vmatpush1.msra.mxu0 0.0
    %1411 = vmatprep.subr.mxu0 0.0
    %1412 = vmatpush1.msra.mxu0 0.0
    %1413 = vmatprep.subr.mxu0 0.0
    %1414 = vmatpush1.msra.mxu0 0.0
    %1415 = vmatprep.subr.mxu0 0.0
    %1416 = vmatpush1.msra.mxu0 0.0
    %1417 = vmatprep.subr.mxu0 0.0
    %1418 = vmatpush1.msra.mxu0 0.0
    %1419 = vmatprep.subr.mxu0 0.0
    %1420 = vmatpush1.msra.mxu0 0.0
    %1421 = vmatprep.subr.mxu0 0.0
    %1422 = vmatpush1.msra.mxu0 0.0
    %1423 = vmatprep.subr.mxu0 0.0
    %1424 = vmatpush1.msra.mxu0 0.0
    %1425 = vmatprep.subr.mxu0 0.0
    %1426 = vmatpush1.msra.mxu0 0.0
    %1427 = vmatprep.subr.mxu0 0.0
    %1428 = vmatpush1.msra.mxu0 0.0
    %1429 = vmatprep.subr.mxu0 0.0
    %1430 = vmatpush1.msra.mxu0 0.0
    %1431 = vmatprep.mubr.f32.mxu0 0.0
    %1432 = vmatmul.mubr.f32.gmra.mrb[0].mxu0 %v1320
    %v1433 = vpop.f32.mrb[0].mxu0
    %v1434 = vadd.f32 %v1317, %v1433
    %v1435 = vpop.f32.mrb[0].mxu0
    %1436 = vmatprep.mubr.f32.mxu0 0.0
    %1437 = vmatmul.mubr.f32.gmra.mrb[0].mxu0 %v1323
    %v1438 = vpop.f32.mrb[0].mxu0
    %v1439 = vadd.f32 %v1317, %v1438
    %v1440 = vpop.f32.mrb[0].mxu0
    %1441 = vmatprep.mubr.f32.mxu0 0.0
    %1442 = vmatmul.mubr.f32.gmra.mrb[0].mxu0 %v1326
    %v1443 = vpop.f32.mrb[0].mxu0
    %v1444 = vadd.f32 %v1317, %v1443
    %v1445 = vpop.f32.mrb[0].mxu0
    %1446 = vmatprep.mubr.f32.mxu0 0.0
    %1447 = vmatmul.mubr.f32.gmra.mrb[0].mxu0 %v1329
    %v1448 = vpop.f32.mrb[0].mxu0
    %v1449 = vadd.f32 %v1317, %v1448
    %v1450 = vpop.f32.mrb[0].mxu0
    %1451 = vmatprep.mubr.f32.mxu0 0.0
    %1452 = vmatmul.mubr.f32.gmra.mrb[0].mxu0 %v1332
    %v1453 = vpop.f32.mrb[0].mxu0
    %v1454 = vadd.f32 %v1317, %v1453
    %v1455 = vpop.f32.mrb[0].mxu0
    %1456 = vmatprep.mubr.f32.mxu0 0.0
    %1457 = vmatmul.mubr.f32.gmra.mrb[0].mxu0 %v1335
    %v1458 = vpop.f32.mrb[0].mxu0
    %v1459 = vadd.f32 %v1317, %v1458
    %v1460 = vpop.f32.mrb[0].mxu0
    %1461 = vmatprep.mubr.f32.mxu0 0.0
    %1462 = vmatmul.mubr.f32.gmra.mrb[0].mxu0 %v1338
    %v1463 = vpop.f32.mrb[0].mxu0
    %v1464 = vadd.f32 %v1317, %v1463
    %v1465 = vpop.f32.mrb[0].mxu0
    %1466 = vmatprep.mubr.f32.mxu0 0.0
    %1467 = vmatmul.mubr.f32.gmra.mrb[0].mxu0 %v1341
    %v1468 = vpop.f32.mrb[0].mxu0
    %v1469 = vadd.f32 %v1317, %v1468
    %v1470 = vpop.f32.mrb[0].mxu0
    %1471 = vmatprep.mubr.f32.mxu0 0.0
    %1472 = vmatmul.mubr.f32.gmra.mrb[0].mxu0 %v1344
    %v1473 = vpop.f32.mrb[0].mxu0
    %v1474 = vadd.f32 %v1317, %v1473
    %v1475 = vpop.f32.mrb[0].mxu0
    %1476 = vmatprep.mubr.f32.mxu0 0.0
    %1477 = vmatmul.mubr.f32.gmra.mrb[0].mxu0 %v1347
    %v1478 = vpop.f32.mrb[0].mxu0
    %v1479 = vadd.f32 %v1317, %v1478
    %v1480 = vpop.f32.mrb[0].mxu0
    %1481 = vmatprep.mubr.f32.mxu0 0.0
    %1482 = vmatmul.mubr.f32.gmra.mrb[0].mxu0 %v1350
    %v1483 = vpop.f32.mrb[0].mxu0
    %v1484 = vadd.f32 %v1317, %v1483
    %v1485 = vpop.f32.mrb[0].mxu0
    %1486 = vmatprep.mubr.f32.mxu0 0.0
    %1487 = vmatmul.mubr.f32.gmra.mrb[0].mxu0 %v1353
    %v1488 = vpop.f32.mrb[0].mxu0
    %v1489 = vadd.f32 %v1317, %v1488
    %v1490 = vpop.f32.mrb[0].mxu0
    %1491 = vmatprep.mubr.f32.mxu0 0.0
    %1492 = vmatmul.mubr.f32.gmra.mrb[0].mxu0 %v1356
    %v1493 = vpop.f32.mrb[0].mxu0
    %v1494 = vadd.f32 %v1317, %v1493
    %v1495 = vpop.f32.mrb[0].mxu0
    %1496 = vmatprep.mubr.f32.mxu0 0.0
    %1497 = vmatmul.mubr.f32.gmra.mrb[0].mxu0 %v1359
    %v1498 = vpop.f32.mrb[0].mxu0
    %v1499 = vadd.f32 %v1317, %v1498
    %v1500 = vpop.f32.mrb[0].mxu0
    %1501 = vmatprep.mubr.f32.mxu0 0.0
    %1502 = vmatmul.mubr.f32.gmra.mrb[0].mxu0 %v1362
    %v1503 = vpop.f32.mrb[0].mxu0
    %v1504 = vadd.f32 %v1317, %v1503
    %v1505 = vpop.f32.mrb[0].mxu0
    %1506 = vmatprep.mubr.f32.mxu0 0.0
    %1507 = vmatmul.mubr.f32.gmra.mrb[0].mxu0 %v1365
    %v1508 = vpop.f32.mrb[0].mxu0
    %v1509 = vadd.f32 %v1317, %v1508
    %v1510 = vpop.f32.mrb[0].mxu0
    %1511 = vdwg.mxu0
    %v1512 = vmax.f32 %v1434, 0.0
    %v1513 = vmax.f32 %v1439, 0.0
    %v1514 = vmax.f32 %v1444, 0.0
    %v1515 = vmax.f32 %v1449, 0.0
    %v1516 = vmax.f32 %v1454, 0.0
    %v1517 = vmax.f32 %v1459, 0.0
    %v1518 = vmax.f32 %v1464, 0.0
    %v1519 = vmax.f32 %v1469, 0.0
    %v1520 = vmax.f32 %v1474, 0.0
    %v1521 = vmax.f32 %v1479, 0.0
    %v1522 = vmax.f32 %v1484, 0.0
    %v1523 = vmax.f32 %v1489, 0.0
    %v1524 = vmax.f32 %v1494, 0.0
    %v1525 = vmax.f32 %v1499, 0.0
    %v1526 = vmax.f32 %v1504, 0.0
    %v1527 = vmax.f32 %v1509, 0.0
    %v1528 = vld [vmem:[%s8] sm:$0xff]
    %v1529 = vld [vmem:[%s8 + $0x8] sm:$0xff]
    %v1530 = vld [vmem:[%s8 + $0x10] sm:$0xff]
    %v1531 = vld [vmem:[%s8 + $0x18] sm:$0xff]
    %v1532 = vld [vmem:[%s9] sm:$0x1]
    %v1534 = vlaneseq
    %v1535 = vshrl.u32 %v1534, 7
    %v1536 = vsub.s32 0, %v1535
    %v1537 = vrot.slane %v1532, %v1536
    %v1540 = vsel %vm63, %v1512, 0
    %v1543 = vsel %vm63, %v1513, 0
    %v1546 = vsel %vm63, %v1514, 0
    %v1549 = vsel %vm63, %v1515, 0
    %v1552 = vsel %vm63, %v1516, 0
    %v1555 = vsel %vm63, %v1517, 0
    %v1558 = vsel %vm63, %v1518, 0
    %v1561 = vsel %vm63, %v1519, 0
    %v1564 = vsel %vm63, %v1520, 0
    %v1567 = vsel %vm63, %v1521, 0
    %v1570 = vsel %vm63, %v1522, 0
    %v1573 = vsel %vm63, %v1523, 0
    %v1576 = vsel %vm63, %v1524, 0
    %v1579 = vsel %vm63, %v1525, 0
    %v1582 = vsel %vm63, %v1526, 0
    %v1585 = vsel %vm63, %v1527, 0
    %1587 = vmatprep.subr.mxu0 0.0
    %1588 = vmatpush1.msra.mxu0 %v1528
    %1589 = vmatprep.subr.mxu0 0.0
    %1590 = vmatpush1.msra.mxu0 %v1529
    %1591 = vmatprep.subr.mxu0 0.0
    %1592 = vmatpush1.msra.mxu0 %v1530
    %1593 = vmatprep.subr.mxu0 0.0
    %1594 = vmatpush1.msra.mxu0 %v1531
    %1595 = vmatprep.subr.mxu0 0.0
    %1596 = vmatpush1.msra.mxu0 0.0
    %1597 = vmatprep.subr.mxu0 0.0
    %1598 = vmatpush1.msra.mxu0 0.0
    %1599 = vmatprep.subr.mxu0 0.0
    %1600 = vmatpush1.msra.mxu0 0.0
    %1601 = vmatprep.subr.mxu0 0.0
    %1602 = vmatpush1.msra.mxu0 0.0
    %1603 = vmatprep.subr.mxu0 0.0
    %1604 = vmatpush1.msra.mxu0 0.0
    %1605 = vmatprep.subr.mxu0 0.0
    %1606 = vmatpush1.msra.mxu0 0.0
    %1607 = vmatprep.subr.mxu0 0.0
    %1608 = vmatpush1.msra.mxu0 0.0
    %1609 = vmatprep.subr.mxu0 0.0
    %1610 = vmatpush1.msra.mxu0 0.0
    %1611 = vmatprep.subr.mxu0 0.0
    %1612 = vmatpush1.msra.mxu0 0.0
    %1613 = vmatprep.subr.mxu0 0.0
    %1614 = vmatpush1.msra.mxu0 0.0
    %1615 = vmatprep.subr.mxu0 0.0
    %1616 = vmatpush1.msra.mxu0 0.0
    %1617 = vmatprep.subr.mxu0 0.0
    %1618 = vmatpush1.msra.mxu0 0.0
    %1619 = vmatprep.subr.mxu0 0.0
    %1620 = vmatpush1.msra.mxu0 0.0
    %1621 = vmatprep.subr.mxu0 0.0
    %1622 = vmatpush1.msra.mxu0 0.0
    %1623 = vmatprep.subr.mxu0 0.0
    %1624 = vmatpush1.msra.mxu0 0.0
    %1625 = vmatprep.subr.mxu0 0.0
    %1626 = vmatpush1.msra.mxu0 0.0
    %1627 = vmatprep.subr.mxu0 0.0
    %1628 = vmatpush1.msra.mxu0 0.0
    %1629 = vmatprep.subr.mxu0 0.0
    %1630 = vmatpush1.msra.mxu0 0.0
    %1631 = vmatprep.subr.mxu0 0.0
    %1632 = vmatpush1.msra.mxu0 0.0
    %1633 = vmatprep.subr.mxu0 0.0
    %1634 = vmatpush1.msra.mxu0 0.0
    %1635 = vmatprep.subr.mxu0 0.0
    %1636 = vmatpush1.msra.mxu0 0.0
    %1637 = vmatprep.subr.mxu0 0.0
    %1638 = vmatpush1.msra.mxu0 0.0
    %1639 = vmatprep.subr.mxu0 0.0
    %1640 = vmatpush1.msra.mxu0 0.0
    %1641 = vmatprep.subr.mxu0 0.0
    %1642 = vmatpush1.msra.mxu0 0.0
    %1643 = vmatprep.subr.mxu0 0.0
    %1644 = vmatpush1.msra.mxu0 0.0
    %1645 = vmatprep.subr.mxu0 0.0
    %1646 = vmatpush1.msra.mxu0 0.0
    %1647 = vmatprep.subr.mxu0 0.0
    %1648 = vmatpush1.msra.mxu0 0.0
    %1649 = vmatprep.subr.mxu0 0.0
    %1650 = vmatpush1.msra.mxu0 0.0
    %1651 = vmatprep.mubr.f32.mxu0 0.0
    %1652 = vmatmul.mubr.f32.gmra.mrb[0].mxu0 %v1540
    %v1653 = vpop.f32.mrb[0].mxu0
    %v1654 = vadd.f32 %v1537, %v1653
    %v1655 = vpop.f32.mrb[0].mxu0
    %1656 = vmatprep.mubr.f32.mxu0 0.0
    %1657 = vmatmul.mubr.f32.gmra.mrb[0].mxu0 %v1543
    %v1658 = vpop.f32.mrb[0].mxu0
    %v1659 = vadd.f32 %v1537, %v1658
    %v1660 = vpop.f32.mrb[0].mxu0
    %1661 = vmatprep.mubr.f32.mxu0 0.0
    %1662 = vmatmul.mubr.f32.gmra.mrb[0].mxu0 %v1546
    %v1663 = vpop.f32.mrb[0].mxu0
    %v1664 = vadd.f32 %v1537, %v1663
    %v1665 = vpop.f32.mrb[0].mxu0
    %1666 = vmatprep.mubr.f32.mxu0 0.0
    %1667 = vmatmul.mubr.f32.gmra.mrb[0].mxu0 %v1549
    %v1668 = vpop.f32.mrb[0].mxu0
    %v1669 = vadd.f32 %v1537, %v1668
    %v1670 = vpop.f32.mrb[0].mxu0
    %1671 = vmatprep.mubr.f32.mxu0 0.0
    %1672 = vmatmul.mubr.f32.gmra.mrb[0].mxu0 %v1552
    %v1673 = vpop.f32.mrb[0].mxu0
    %v1674 = vadd.f32 %v1537, %v1673
    %v1675 = vpop.f32.mrb[0].mxu0
    %1676 = vmatprep.mubr.f32.mxu0 0.0
    %1677 = vmatmul.mubr.f32.gmra.mrb[0].mxu0 %v1555
    %v1678 = vpop.f32.mrb[0].mxu0
    %v1679 = vadd.f32 %v1537, %v1678
    %v1680 = vpop.f32.mrb[0].mxu0
    %1681 = vmatprep.mubr.f32.mxu0 0.0
    %1682 = vmatmul.mubr.f32.gmra.mrb[0].mxu0 %v1558
    %v1683 = vpop.f32.mrb[0].mxu0
    %v1684 = vadd.f32 %v1537, %v1683
    %v1685 = vpop.f32.mrb[0].mxu0
    %1686 = vmatprep.mubr.f32.mxu0 0.0
    %1687 = vmatmul.mubr.f32.gmra.mrb[0].mxu0 %v1561
    %v1688 = vpop.f32.mrb[0].mxu0
    %v1689 = vadd.f32 %v1537, %v1688
    %v1690 = vpop.f32.mrb[0].mxu0
    %1691 = vmatprep.mubr.f32.mxu0 0.0
    %1692 = vmatmul.mubr.f32.gmra.mrb[0].mxu0 %v1564
    %v1693 = vpop.f32.mrb[0].mxu0
    %v1694 = vadd.f32 %v1537, %v1693
    %v1695 = vpop.f32.mrb[0].mxu0
    %1696 = vmatprep.mubr.f32.mxu0 0.0
    %1697 = vmatmul.mubr.f32.gmra.mrb[0].mxu0 %v1567
    %v1698 = vpop.f32.mrb[0].mxu0
    %v1699 = vadd.f32 %v1537, %v1698
    %v1700 = vpop.f32.mrb[0].mxu0
    %1701 = vmatprep.mubr.f32.mxu0 0.0
    %1702 = vmatmul.mubr.f32.gmra.mrb[0].mxu0 %v1570
    %v1703 = vpop.f32.mrb[0].mxu0
    %v1704 = vadd.f32 %v1537, %v1703
    %v1705 = vpop.f32.mrb[0].mxu0
    %1706 = vmatprep.mubr.f32.mxu0 0.0
    %1707 = vmatmul.mubr.f32.gmra.mrb[0].mxu0 %v1573
    %v1708 = vpop.f32.mrb[0].mxu0
    %v1709 = vadd.f32 %v1537, %v1708
    %v1710 = vpop.f32.mrb[0].mxu0
    %1711 = vmatprep.mubr.f32.mxu0 0.0
    %1712 = vmatmul.mubr.f32.gmra.mrb[0].mxu0 %v1576
    %v1713 = vpop.f32.mrb[0].mxu0
    %v1714 = vadd.f32 %v1537, %v1713
    %v1715 = vpop.f32.mrb[0].mxu0
    %1716 = vmatprep.mubr.f32.mxu0 0.0
    %1717 = vmatmul.mubr.f32.gmra.mrb[0].mxu0 %v1579
    %v1718 = vpop.f32.mrb[0].mxu0
    %v1719 = vadd.f32 %v1537, %v1718
    %v1720 = vpop.f32.mrb[0].mxu0
    %1721 = vmatprep.mubr.f32.mxu0 0.0
    %1722 = vmatmul.mubr.f32.gmra.mrb[0].mxu0 %v1582
    %v1723 = vpop.f32.mrb[0].mxu0
    %v1724 = vadd.f32 %v1537, %v1723
    %v1725 = vpop.f32.mrb[0].mxu0
    %1726 = vmatprep.mubr.f32.mxu0 0.0
    %1727 = vmatmul.mubr.f32.gmra.mrb[0].mxu0 %v1585
    %v1728 = vpop.f32.mrb[0].mxu0
    %v1729 = vadd.f32 %v1537, %v1728
    %v1730 = vpop.f32.mrb[0].mxu0
    %1731 = vdwg.mxu0
    %v1732 = vadd.f32 %v1654, %v1294
    %v1733 = vadd.f32 %v1659, %v1295
    %v1734 = vadd.f32 %v1664, %v1296
    %v1735 = vadd.f32 %v1669, %v1297
    %v1736 = vadd.f32 %v1674, %v1298
    %v1737 = vadd.f32 %v1679, %v1299
    %v1738 = vadd.f32 %v1684, %v1300
    %v1739 = vadd.f32 %v1689, %v1301
    %v1740 = vadd.f32 %v1694, %v1302
    %v1741 = vadd.f32 %v1699, %v1303
    %v1742 = vadd.f32 %v1704, %v1304
    %v1743 = vadd.f32 %v1709, %v1305
    %v1744 = vadd.f32 %v1714, %v1306
    %v1745 = vadd.f32 %v1719, %v1307
    %v1746 = vadd.f32 %v1724, %v1308
    %v1747 = vadd.f32 %v1729, %v1309
    %v1748 = vmul.f32 %v1732, 0.70710677
    %v1749 = vmul.f32 %v1733, 0.70710677
    %v1750 = vmul.f32 %v1734, 0.70710677
    %v1751 = vmul.f32 %v1735, 0.70710677
    %v1752 = vmul.f32 %v1736, 0.70710677
    %v1753 = vmul.f32 %v1737, 0.70710677
    %v1754 = vmul.f32 %v1738, 0.70710677
    %v1755 = vmul.f32 %v1739, 0.70710677
    %v1756 = vmul.f32 %v1740, 0.70710677
    %v1757 = vmul.f32 %v1741, 0.70710677
    %v1758 = vmul.f32 %v1742, 0.70710677
    %v1759 = vmul.f32 %v1743, 0.70710677
    %v1760 = vmul.f32 %v1744, 0.70710677
    %v1761 = vmul.f32 %v1745, 0.70710677
    %v1762 = vmul.f32 %v1746, 0.70710677
    %v1763 = vmul.f32 %v1747, 0.70710677
    %v1764 = vmul.f32 %v1748, 0.25
    %v1765 = vmul.f32 %v1749, 0.25
    %v1766 = vmul.f32 %v1750, 0.25
    %v1767 = vmul.f32 %v1751, 0.25
    %v1768 = vmul.f32 %v1752, 0.25
    %v1769 = vmul.f32 %v1753, 0.25
    %v1770 = vmul.f32 %v1754, 0.25
    %v1771 = vmul.f32 %v1755, 0.25
    %v1772 = vmul.f32 %v1756, 0.25
    %v1773 = vmul.f32 %v1757, 0.25
    %v1774 = vmul.f32 %v1758, 0.25
    %v1775 = vmul.f32 %v1759, 0.25
    %v1776 = vmul.f32 %v1760, 0.25
    %v1777 = vmul.f32 %v1761, 0.25
    %v1778 = vmul.f32 %v1762, 0.25
    %v1779 = vmul.f32 %v1763, 0.25
    %v1780 = vadd.f32 %v257, %v1764
    %v1781 = vadd.f32 %v258, %v1765
    %v1782 = vadd.f32 %v259, %v1766
    %v1783 = vadd.f32 %v260, %v1767
    %v1784 = vadd.f32 %v261, %v1768
    %v1785 = vadd.f32 %v262, %v1769
    %v1786 = vadd.f32 %v263, %v1770
    %v1787 = vadd.f32 %v264, %v1771
    %v1788 = vadd.f32 %v265, %v1772
    %v1789 = vadd.f32 %v266, %v1773
    %v1790 = vadd.f32 %v267, %v1774
    %v1791 = vadd.f32 %v268, %v1775
    %v1792 = vadd.f32 %v269, %v1776
    %v1793 = vadd.f32 %v270, %v1777
    %v1794 = vadd.f32 %v271, %v1778
    %v1795 = vadd.f32 %v272, %v1779
    %s1796 = scalar_lea.vmem %s3, 16
    %v1797 = vld [vmem:[%s1796] sm:$0xff]
    %v1798 = vld [vmem:[%s1796 + $0x8] sm:$0xff]
    %v1800 = vsel %vm273, %v1748, 0
    %v1803 = vsel %vm273, %v1749, 0
    %v1806 = vsel %vm273, %v1750, 0
    %v1809 = vsel %vm273, %v1751, 0
    %v1812 = vsel %vm273, %v1752, 0
    %v1815 = vsel %vm273, %v1753, 0
    %v1818 = vsel %vm273, %v1754, 0
    %v1821 = vsel %vm273, %v1755, 0
    %v1824 = vsel %vm273, %v1756, 0
    %v1827 = vsel %vm273, %v1757, 0
    %v1830 = vsel %vm273, %v1758, 0
    %v1833 = vsel %vm273, %v1759, 0
    %v1836 = vsel %vm273, %v1760, 0
    %v1839 = vsel %vm273, %v1761, 0
    %v1842 = vsel %vm273, %v1762, 0
    %v1845 = vsel %vm273, %v1763, 0
    %1847 = vmatprep.subr.mxu0 0.0
    %1848 = vmatpush1.msra.mxu0 %v1797
    %1849 = vmatprep.subr.mxu0 0.0
    %1850 = vmatpush1.msra.mxu0 %v1798
    %1851 = vmatprep.subr.mxu0 0.0
    %1852 = vmatpush1.msra.mxu0 0.0
    %1853 = vmatprep.subr.mxu0 0.0
    %1854 = vmatpush1.msra.mxu0 0.0
    %1855 = vmatprep.subr.mxu0 0.0
    %1856 = vmatpush1.msra.mxu0 0.0
    %1857 = vmatprep.subr.mxu0 0.0
    %1858 = vmatpush1.msra.mxu0 0.0
    %1859 = vmatprep.subr.mxu0 0.0
    %1860 = vmatpush1.msra.mxu0 0.0
    %1861 = vmatprep.subr.mxu0 0.0
    %1862 = vmatpush1.msra.mxu0 0.0
    %1863 = vmatprep.subr.mxu0 0.0
    %1864 = vmatpush1.msra.mxu0 0.0
    %1865 = vmatprep.subr.mxu0 0.0
    %1866 = vmatpush1.msra.mxu0 0.0
    %1867 = vmatprep.subr.mxu0 0.0
    %1868 = vmatpush1.msra.mxu0 0.0
    %1869 = vmatprep.subr.mxu0 0.0
    %1870 = vmatpush1.msra.mxu0 0.0
    %1871 = vmatprep.subr.mxu0 0.0
    %1872 = vmatpush1.msra.mxu0 0.0
    %1873 = vmatprep.subr.mxu0 0.0
    %1874 = vmatpush1.msra.mxu0 0.0
    %1875 = vmatprep.subr.mxu0 0.0
    %1876 = vmatpush1.msra.mxu0 0.0
    %1877 = vmatprep.subr.mxu0 0.0
    %1878 = vmatpush1.msra.mxu0 0.0
    %1879 = vmatprep.subr.mxu0 0.0
    %1880 = vmatpush1.msra.mxu0 0.0
    %1881 = vmatprep.subr.mxu0 0.0
    %1882 = vmatpush1.msra.mxu0 0.0
    %1883 = vmatprep.subr.mxu0 0.0
    %1884 = vmatpush1.msra.mxu0 0.0
    %1885 = vmatprep.subr.mxu0 0.0
    %1886 = vmatpush1.msra.mxu0 0.0
    %1887 = vmatprep.subr.mxu0 0.0
    %1888 = vmatpush1.msra.mxu0 0.0
    %1889 = vmatprep.subr.mxu0 0.0
    %1890 = vmatpush1.msra.mxu0 0.0
    %1891 = vmatprep.subr.mxu0 0.0
    %1892 = vmatpush1.msra.mxu0 0.0
    %1893 = vmatprep.subr.mxu0 0.0
    %1894 = vmatpush1.msra.mxu0 0.0
    %1895 = vmatprep.subr.mxu0 0.0
    %1896 = vmatpush1.msra.mxu0 0.0
    %1897 = vmatprep.subr.mxu0 0.0
    %1898 = vmatpush1.msra.mxu0 0.0
    %1899 = vmatprep.subr.mxu0 0.0
    %1900 = vmatpush1.msra.mxu0 0.0
    %1901 = vmatprep.subr.mxu0 0.0
    %1902 = vmatpush1.msra.mxu0 0.0
    %1903 = vmatprep.subr.mxu0 0.0
    %1904 = vmatpush1.msra.mxu0 0.0
    %1905 = vmatprep.subr.mxu0 0.0
    %1906 = vmatpush1.msra.mxu0 0.0
    %1907 = vmatprep.subr.mxu0 0.0
    %1908 = vmatpush1.msra.mxu0 0.0
    %1909 = vmatprep.subr.mxu0 0.0
    %1910 = vmatpush1.msra.mxu0 0.0
    %1911 = vmatprep.mubr.f32.mxu0 0.0
    %1912 = vmatmul.mubr.f32.gmra.mrb[0].mxu0 %v1800
    %v1913 = vpop.f32.mrb[0].mxu0
    %v1914 = vadd.f32 0.0, %v1913
    %v1915 = vpop.f32.mrb[0].mxu0
    %1916 = vmatprep.mubr.f32.mxu0 0.0
    %1917 = vmatmul.mubr.f32.gmra.mrb[0].mxu0 %v1803
    %v1918 = vpop.f32.mrb[0].mxu0
    %v1919 = vadd.f32 0.0, %v1918
    %v1920 = vpop.f32.mrb[0].mxu0
    %1921 = vmatprep.mubr.f32.mxu0 0.0
    %1922 = vmatmul.mubr.f32.gmra.mrb[0].mxu0 %v1806
    %v1923 = vpop.f32.mrb[0].mxu0
    %v1924 = vadd.f32 0.0, %v1923
    %v1925 = vpop.f32.mrb[0].mxu0
    %1926 = vmatprep.mubr.f32.mxu0 0.0
    %1927 = vmatmul.mubr.f32.gmra.mrb[0].mxu0 %v1809
    %v1928 = vpop.f32.mrb[0].mxu0
    %v1929 = vadd.f32 0.0, %v1928
    %v1930 = vpop.f32.mrb[0].mxu0
    %1931 = vmatprep.mubr.f32.mxu0 0.0
    %1932 = vmatmul.mubr.f32.gmra.mrb[0].mxu0 %v1812
    %v1933 = vpop.f32.mrb[0].mxu0
    %v1934 = vadd.f32 0.0, %v1933
    %v1935 = vpop.f32.mrb[0].mxu0
    %1936 = vmatprep.mubr.f32.mxu0 0.0
    %1937 = vmatmul.mubr.f32.gmra.mrb[0].mxu0 %v1815
    %v1938 = vpop.f32.mrb[0].mxu0
    %v1939 = vadd.f32 0.0, %v1938
    %v1940 = vpop.f32.mrb[0].mxu0
    %1941 = vmatprep.mubr.f32.mxu0 0.0
    %1942 = vmatmul.mubr.f32.gmra.mrb[0].mxu0 %v1818
    %v1943 = vpop.f32.mrb[0].mxu0
    %v1944 = vadd.f32 0.0, %v1943
    %v1945 = vpop.f32.mrb[0].mxu0
    %1946 = vmatprep.mubr.f32.mxu0 0.0
    %1947 = vmatmul.mubr.f32.gmra.mrb[0].mxu0 %v1821
    %v1948 = vpop.f32.mrb[0].mxu0
    %v1949 = vadd.f32 0.0, %v1948
    %v1950 = vpop.f32.mrb[0].mxu0
    %1951 = vmatprep.mubr.f32.mxu0 0.0
    %1952 = vmatmul.mubr.f32.gmra.mrb[0].mxu0 %v1824
    %v1953 = vpop.f32.mrb[0].mxu0
    %v1954 = vadd.f32 0.0, %v1953
    %v1955 = vpop.f32.mrb[0].mxu0
    %1956 = vmatprep.mubr.f32.mxu0 0.0
    %1957 = vmatmul.mubr.f32.gmra.mrb[0].mxu0 %v1827
    %v1958 = vpop.f32.mrb[0].mxu0
    %v1959 = vadd.f32 0.0, %v1958
    %v1960 = vpop.f32.mrb[0].mxu0
    %1961 = vmatprep.mubr.f32.mxu0 0.0
    %1962 = vmatmul.mubr.f32.gmra.mrb[0].mxu0 %v1830
    %v1963 = vpop.f32.mrb[0].mxu0
    %v1964 = vadd.f32 0.0, %v1963
    %v1965 = vpop.f32.mrb[0].mxu0
    %1966 = vmatprep.mubr.f32.mxu0 0.0
    %1967 = vmatmul.mubr.f32.gmra.mrb[0].mxu0 %v1833
    %v1968 = vpop.f32.mrb[0].mxu0
    %v1969 = vadd.f32 0.0, %v1968
    %v1970 = vpop.f32.mrb[0].mxu0
    %1971 = vmatprep.mubr.f32.mxu0 0.0
    %1972 = vmatmul.mubr.f32.gmra.mrb[0].mxu0 %v1836
    %v1973 = vpop.f32.mrb[0].mxu0
    %v1974 = vadd.f32 0.0, %v1973
    %v1975 = vpop.f32.mrb[0].mxu0
    %1976 = vmatprep.mubr.f32.mxu0 0.0
    %1977 = vmatmul.mubr.f32.gmra.mrb[0].mxu0 %v1839
    %v1978 = vpop.f32.mrb[0].mxu0
    %v1979 = vadd.f32 0.0, %v1978
    %v1980 = vpop.f32.mrb[0].mxu0
    %1981 = vmatprep.mubr.f32.mxu0 0.0
    %1982 = vmatmul.mubr.f32.gmra.mrb[0].mxu0 %v1842
    %v1983 = vpop.f32.mrb[0].mxu0
    %v1984 = vadd.f32 0.0, %v1983
    %v1985 = vpop.f32.mrb[0].mxu0
    %1986 = vmatprep.mubr.f32.mxu0 0.0
    %1987 = vmatmul.mubr.f32.gmra.mrb[0].mxu0 %v1845
    %v1988 = vpop.f32.mrb[0].mxu0
    %v1989 = vadd.f32 0.0, %v1988
    %v1990 = vpop.f32.mrb[0].mxu0
    %1991 = vdwg.mxu0
    %1992 = vst.msk [vmem:[%s514 + $0x3] sm:$0xff] %vm273, %v1914
    %1993 = vst.msk [vmem:[%s514 + $0x13] sm:$0xff] %vm273, %v1919
    %1994 = vst.msk [vmem:[%s514 + $0x23] sm:$0xff] %vm273, %v1924
    %1995 = vst.msk [vmem:[%s514 + $0x33] sm:$0xff] %vm273, %v1929
    %1996 = vst.msk [vmem:[%s514 + $0x43] sm:$0xff] %vm273, %v1934
    %1997 = vst.msk [vmem:[%s514 + $0x53] sm:$0xff] %vm273, %v1939
    %1998 = vst.msk [vmem:[%s514 + $0x63] sm:$0xff] %vm273, %v1944
    %1999 = vst.msk [vmem:[%s514 + $0x73] sm:$0xff] %vm273, %v1949
    %2000 = vst.msk [vmem:[%s514 + $0xb3] sm:$0xff] %vm273, %v1954
    %2001 = vst.msk [vmem:[%s514 + $0xc3] sm:$0xff] %vm273, %v1959
    %2002 = vst.msk [vmem:[%s514 + $0xd3] sm:$0xff] %vm273, %v1964
    %2003 = vst.msk [vmem:[%s514 + $0xe3] sm:$0xff] %vm273, %v1969
    %2004 = vst.msk [vmem:[%s514 + $0xf3] sm:$0xff] %vm273, %v1974
    %2005 = vst.msk [vmem:[%s514 + $0x103] sm:$0xff] %vm273, %v1979
    %2006 = vst.msk [vmem:[%s514 + $0x113] sm:$0xff] %vm273, %v1984
    %2007 = vst.msk [vmem:[%s514 + $0x123] sm:$0xff] %vm273, %v1989
    %s2008 = scalar_lea.vmem [#allocation2], 16
    %v2009 = vld [vmem:[%s2008 + $0x1] sm:$0xff]
    %v2010 = vld [vmem:[%s2008 + $0x11] sm:$0xff]
    %v2011 = vld [vmem:[%s2008 + $0x21] sm:$0xff]
    %v2012 = vld [vmem:[%s2008 + $0x31] sm:$0xff]
    %v2013 = vld [vmem:[%s2008 + $0x41] sm:$0xff]
    %v2014 = vld [vmem:[%s2008 + $0x51] sm:$0xff]
    %v2015 = vld [vmem:[%s2008 + $0x61] sm:$0xff]
    %v2016 = vld [vmem:[%s2008 + $0x71] sm:$0xff]
    %v2017 = vld [vmem:[%s2008 + $0xb1] sm:$0xff]
    %v2018 = vld [vmem:[%s2008 + $0xc1] sm:$0xff]
    %v2019 = vld [vmem:[%s2008 + $0xd1] sm:$0xff]
    %v2020 = vld [vmem:[%s2008 + $0xe1] sm:$0xff]
    %v2021 = vld [vmem:[%s2008 + $0xf1] sm:$0xff]
    %v2022 = vld [vmem:[%s2008 + $0x101] sm:$0xff]
    %v2023 = vld [vmem:[%s2008 + $0x111] sm:$0xff]
    %v2024 = vld [vmem:[%s2008 + $0x121] sm:$0xff]
    %2025 = vst.msk [vmem:[#allocation3] sm:$0xff] %vm273, %v2009
    %2026 = vst.msk [vmem:[#allocation3 + $0x8] sm:$0xff] %vm273, %v2010
    %2027 = vst.msk [vmem:[#allocation3 + $0x10] sm:$0xff] %vm273, %v2011
    %2028 = vst.msk [vmem:[#allocation3 + $0x18] sm:$0xff] %vm273, %v2012
    %2029 = vst.msk [vmem:[#allocation3 + $0x20] sm:$0xff] %vm273, %v2013
    %2030 = vst.msk [vmem:[#allocation3 + $0x28] sm:$0xff] %vm273, %v2014
    %2031 = vst.msk [vmem:[#allocation3 + $0x30] sm:$0xff] %vm273, %v2015
    %2032 = vst.msk [vmem:[#allocation3 + $0x38] sm:$0xff] %vm273, %v2016
    %2033 = vst.msk [vmem:[#allocation3 + $0x40] sm:$0xff] %vm273, %v2017
    %2034 = vst.msk [vmem:[#allocation3 + $0x48] sm:$0xff] %vm273, %v2018
    %2035 = vst.msk [vmem:[#allocation3 + $0x50] sm:$0xff] %vm273, %v2019
    %2036 = vst.msk [vmem:[#allocation3 + $0x58] sm:$0xff] %vm273, %v2020
    %2037 = vst.msk [vmem:[#allocation3 + $0x60] sm:$0xff] %vm273, %v2021
    %2038 = vst.msk [vmem:[#allocation3 + $0x68] sm:$0xff] %vm273, %v2022
    %2039 = vst.msk [vmem:[#allocation3 + $0x70] sm:$0xff] %vm273, %v2023
    %2040 = vst.msk [vmem:[#allocation3 + $0x78] sm:$0xff] %vm273, %v2024
    %v2041 = vld [vmem:[%s2008 + $0x3] sm:$0xff]
    %v2042 = vld [vmem:[%s2008 + $0x13] sm:$0xff]
    %v2043 = vld [vmem:[%s2008 + $0x23] sm:$0xff]
    %v2044 = vld [vmem:[%s2008 + $0x33] sm:$0xff]
    %v2045 = vld [vmem:[%s2008 + $0x43] sm:$0xff]
    %v2046 = vld [vmem:[%s2008 + $0x53] sm:$0xff]
    %v2047 = vld [vmem:[%s2008 + $0x63] sm:$0xff]
    %v2048 = vld [vmem:[%s2008 + $0x73] sm:$0xff]
    %v2049 = vld [vmem:[%s2008 + $0xb3] sm:$0xff]
    %v2050 = vld [vmem:[%s2008 + $0xc3] sm:$0xff]
    %v2051 = vld [vmem:[%s2008 + $0xd3] sm:$0xff]
    %v2052 = vld [vmem:[%s2008 + $0xe3] sm:$0xff]
    %v2053 = vld [vmem:[%s2008 + $0xf3] sm:$0xff]
    %v2054 = vld [vmem:[%s2008 + $0x103] sm:$0xff]
    %v2055 = vld [vmem:[%s2008 + $0x113] sm:$0xff]
    %v2056 = vld [vmem:[%s2008 + $0x123] sm:$0xff]
    %2073 = vrot.lane.b32.xlu0 %v2041, 16
    %v2074 = vpop.permute.xlu0 %2073
    %2075 = vrot.lane.b32.xlu0 %v2042, 16
    %v2076 = vpop.permute.xlu0 %2075
    %2077 = vrot.lane.b32.xlu0 %v2043, 16
    %v2078 = vpop.permute.xlu0 %2077
    %2079 = vrot.lane.b32.xlu0 %v2044, 16
    %v2080 = vpop.permute.xlu0 %2079
    %2081 = vrot.lane.b32.xlu0 %v2045, 16
    %v2082 = vpop.permute.xlu0 %2081
    %2083 = vrot.lane.b32.xlu0 %v2046, 16
    %v2084 = vpop.permute.xlu0 %2083
    %2085 = vrot.lane.b32.xlu0 %v2047, 16
    %v2086 = vpop.permute.xlu0 %2085
    %2087 = vrot.lane.b32.xlu0 %v2048, 16
    %v2088 = vpop.permute.xlu0 %2087
    %2089 = vrot.lane.b32.xlu0 %v2049, 16
    %v2090 = vpop.permute.xlu0 %2089
    %2091 = vrot.lane.b32.xlu0 %v2050, 16
    %v2092 = vpop.permute.xlu0 %2091
    %2093 = vrot.lane.b32.xlu0 %v2051, 16
    %v2094 = vpop.permute.xlu0 %2093
    %2095 = vrot.lane.b32.xlu0 %v2052, 16
    %v2096 = vpop.permute.xlu0 %2095
    %2097 = vrot.lane.b32.xlu0 %v2053, 16
    %v2098 = vpop.permute.xlu0 %2097
    %2099 = vrot.lane.b32.xlu0 %v2054, 16
    %v2100 = vpop.permute.xlu0 %2099
    %2101 = vrot.lane.b32.xlu0 %v2055, 16
    %v2102 = vpop.permute.xlu0 %2101
    %2103 = vrot.lane.b32.xlu0 %v2056, 16
    %v2104 = vpop.permute.xlu0 %2103
    %2121 = vst.msk [vmem:[#allocation3] sm:$0xff] %vm644, %v2074
    %2122 = vst.msk [vmem:[#allocation3 + $0x8] sm:$0xff] %vm644, %v2076
    %2123 = vst.msk [vmem:[#allocation3 + $0x10] sm:$0xff] %vm644, %v2078
    %2124 = vst.msk [vmem:[#allocation3 + $0x18] sm:$0xff] %vm644, %v2080
    %2125 = vst.msk [vmem:[#allocation3 + $0x20] sm:$0xff] %vm644, %v2082
    %2126 = vst.msk [vmem:[#allocation3 + $0x28] sm:$0xff] %vm644, %v2084
    %2127 = vst.msk [vmem:[#allocation3 + $0x30] sm:$0xff] %vm644, %v2086
    %2128 = vst.msk [vmem:[#allocation3 + $0x38] sm:$0xff] %vm644, %v2088
    %2129 = vst.msk [vmem:[#allocation3 + $0x40] sm:$0xff] %vm644, %v2090
    %2130 = vst.msk [vmem:[#allocation3 + $0x48] sm:$0xff] %vm644, %v2092
    %2131 = vst.msk [vmem:[#allocation3 + $0x50] sm:$0xff] %vm644, %v2094
    %2132 = vst.msk [vmem:[#allocation3 + $0x58] sm:$0xff] %vm644, %v2096
    %2133 = vst.msk [vmem:[#allocation3 + $0x60] sm:$0xff] %vm644, %v2098
    %2134 = vst.msk [vmem:[#allocation3 + $0x68] sm:$0xff] %vm644, %v2100
    %2135 = vst.msk [vmem:[#allocation3 + $0x70] sm:$0xff] %vm644, %v2102
    %2136 = vst.msk [vmem:[#allocation3 + $0x78] sm:$0xff] %vm644, %v2104
    %v2137 = vld [vmem:[%s2008 + $0x5] sm:$0xff]
    %v2138 = vld [vmem:[%s2008 + $0x15] sm:$0xff]
    %v2139 = vld [vmem:[%s2008 + $0x25] sm:$0xff]
    %v2140 = vld [vmem:[%s2008 + $0x35] sm:$0xff]
    %v2141 = vld [vmem:[%s2008 + $0x45] sm:$0xff]
    %v2142 = vld [vmem:[%s2008 + $0x55] sm:$0xff]
    %v2143 = vld [vmem:[%s2008 + $0x65] sm:$0xff]
    %v2144 = vld [vmem:[%s2008 + $0x75] sm:$0xff]
    %v2145 = vld [vmem:[%s2008 + $0xb5] sm:$0xff]
    %v2146 = vld [vmem:[%s2008 + $0xc5] sm:$0xff]
    %v2147 = vld [vmem:[%s2008 + $0xd5] sm:$0xff]
    %v2148 = vld [vmem:[%s2008 + $0xe5] sm:$0xff]
    %v2149 = vld [vmem:[%s2008 + $0xf5] sm:$0xff]
    %v2150 = vld [vmem:[%s2008 + $0x105] sm:$0xff]
    %v2151 = vld [vmem:[%s2008 + $0x115] sm:$0xff]
    %v2152 = vld [vmem:[%s2008 + $0x125] sm:$0xff]
    %2169 = vrot.lane.b32.xlu0 %v2137, 32
    %v2170 = vpop.permute.xlu0 %2169
    %2171 = vrot.lane.b32.xlu0 %v2138, 32
    %v2172 = vpop.permute.xlu0 %2171
    %2173 = vrot.lane.b32.xlu0 %v2139, 32
    %v2174 = vpop.permute.xlu0 %2173
    %2175 = vrot.lane.b32.xlu0 %v2140, 32
    %v2176 = vpop.permute.xlu0 %2175
    %2177 = vrot.lane.b32.xlu0 %v2141, 32
    %v2178 = vpop.permute.xlu0 %2177
    %2179 = vrot.lane.b32.xlu0 %v2142, 32
    %v2180 = vpop.permute.xlu0 %2179
    %2181 = vrot.lane.b32.xlu0 %v2143, 32
    %v2182 = vpop.permute.xlu0 %2181
    %2183 = vrot.lane.b32.xlu0 %v2144, 32
    %v2184 = vpop.permute.xlu0 %2183
    %2185 = vrot.lane.b32.xlu0 %v2145, 32
    %v2186 = vpop.permute.xlu0 %2185
    %2187 = vrot.lane.b32.xlu0 %v2146, 32
    %v2188 = vpop.permute.xlu0 %2187
    %2189 = vrot.lane.b32.xlu0 %v2147, 32
    %v2190 = vpop.permute.xlu0 %2189
    %2191 = vrot.lane.b32.xlu0 %v2148, 32
    %v2192 = vpop.permute.xlu0 %2191
    %2193 = vrot.lane.b32.xlu0 %v2149, 32
    %v2194 = vpop.permute.xlu0 %2193
    %2195 = vrot.lane.b32.xlu0 %v2150, 32
    %v2196 = vpop.permute.xlu0 %2195
    %2197 = vrot.lane.b32.xlu0 %v2151, 32
    %v2198 = vpop.permute.xlu0 %2197
    %2199 = vrot.lane.b32.xlu0 %v2152, 32
    %v2200 = vpop.permute.xlu0 %2199
    %2217 = vst.msk [vmem:[#allocation3] sm:$0xff] %vm741, %v2170
    %2218 = vst.msk [vmem:[#allocation3 + $0x8] sm:$0xff] %vm741, %v2172
    %2219 = vst.msk [vmem:[#allocation3 + $0x10] sm:$0xff] %vm741, %v2174
    %2220 = vst.msk [vmem:[#allocation3 + $0x18] sm:$0xff] %vm741, %v2176
    %2221 = vst.msk [vmem:[#allocation3 + $0x20] sm:$0xff] %vm741, %v2178
    %2222 = vst.msk [vmem:[#allocation3 + $0x28] sm:$0xff] %vm741, %v2180
    %2223 = vst.msk [vmem:[#allocation3 + $0x30] sm:$0xff] %vm741, %v2182
    %2224 = vst.msk [vmem:[#allocation3 + $0x38] sm:$0xff] %vm741, %v2184
    %2225 = vst.msk [vmem:[#allocation3 + $0x40] sm:$0xff] %vm741, %v2186
    %2226 = vst.msk [vmem:[#allocation3 + $0x48] sm:$0xff] %vm741, %v2188
    %2227 = vst.msk [vmem:[#allocation3 + $0x50] sm:$0xff] %vm741, %v2190
    %2228 = vst.msk [vmem:[#allocation3 + $0x58] sm:$0xff] %vm741, %v2192
    %2229 = vst.msk [vmem:[#allocation3 + $0x60] sm:$0xff] %vm741, %v2194
    %2230 = vst.msk [vmem:[#allocation3 + $0x68] sm:$0xff] %vm741, %v2196
    %2231 = vst.msk [vmem:[#allocation3 + $0x70] sm:$0xff] %vm741, %v2198
    %2232 = vst.msk [vmem:[#allocation3 + $0x78] sm:$0xff] %vm741, %v2200
    %v2233 = vld [vmem:[%s514 + $0x1] sm:$0xff]
    %v2234 = vld [vmem:[%s514 + $0x11] sm:$0xff]
    %v2235 = vld [vmem:[%s514 + $0x21] sm:$0xff]
    %v2236 = vld [vmem:[%s514 + $0x31] sm:$0xff]
    %v2237 = vld [vmem:[%s514 + $0x41] sm:$0xff]
    %v2238 = vld [vmem:[%s514 + $0x51] sm:$0xff]
    %v2239 = vld [vmem:[%s514 + $0x61] sm:$0xff]
    %v2240 = vld [vmem:[%s514 + $0x71] sm:$0xff]
    %v2241 = vld [vmem:[%s514 + $0xb1] sm:$0xff]
    %v2242 = vld [vmem:[%s514 + $0xc1] sm:$0xff]
    %v2243 = vld [vmem:[%s514 + $0xd1] sm:$0xff]
    %v2244 = vld [vmem:[%s514 + $0xe1] sm:$0xff]
    %v2245 = vld [vmem:[%s514 + $0xf1] sm:$0xff]
    %v2246 = vld [vmem:[%s514 + $0x101] sm:$0xff]
    %v2247 = vld [vmem:[%s514 + $0x111] sm:$0xff]
    %v2248 = vld [vmem:[%s514 + $0x121] sm:$0xff]
    %2265 = vrot.lane.b32.xlu0 %v2233, 48
    %v2266 = vpop.permute.xlu0 %2265
    %2267 = vrot.lane.b32.xlu0 %v2234, 48
    %v2268 = vpop.permute.xlu0 %2267
    %2269 = vrot.lane.b32.xlu0 %v2235, 48
    %v2270 = vpop.permute.xlu0 %2269
    %2271 = vrot.lane.b32.xlu0 %v2236, 48
    %v2272 = vpop.permute.xlu0 %2271
    %2273 = vrot.lane.b32.xlu0 %v2237, 48
    %v2274 = vpop.permute.xlu0 %2273
    %2275 = vrot.lane.b32.xlu0 %v2238, 48
    %v2276 = vpop.permute.xlu0 %2275
    %2277 = vrot.lane.b32.xlu0 %v2239, 48
    %v2278 = vpop.permute.xlu0 %2277
    %2279 = vrot.lane.b32.xlu0 %v2240, 48
    %v2280 = vpop.permute.xlu0 %2279
    %2281 = vrot.lane.b32.xlu0 %v2241, 48
    %v2282 = vpop.permute.xlu0 %2281
    %2283 = vrot.lane.b32.xlu0 %v2242, 48
    %v2284 = vpop.permute.xlu0 %2283
    %2285 = vrot.lane.b32.xlu0 %v2243, 48
    %v2286 = vpop.permute.xlu0 %2285
    %2287 = vrot.lane.b32.xlu0 %v2244, 48
    %v2288 = vpop.permute.xlu0 %2287
    %2289 = vrot.lane.b32.xlu0 %v2245, 48
    %v2290 = vpop.permute.xlu0 %2289
    %2291 = vrot.lane.b32.xlu0 %v2246, 48
    %v2292 = vpop.permute.xlu0 %2291
    %2293 = vrot.lane.b32.xlu0 %v2247, 48
    %v2294 = vpop.permute.xlu0 %2293
    %2295 = vrot.lane.b32.xlu0 %v2248, 48
    %v2296 = vpop.permute.xlu0 %2295
    %2313 = vst.msk [vmem:[#allocation3] sm:$0xff] %vm838, %v2266
    %2314 = vst.msk [vmem:[#allocation3 + $0x8] sm:$0xff] %vm838, %v2268
    %2315 = vst.msk [vmem:[#allocation3 + $0x10] sm:$0xff] %vm838, %v2270
    %2316 = vst.msk [vmem:[#allocation3 + $0x18] sm:$0xff] %vm838, %v2272
    %2317 = vst.msk [vmem:[#allocation3 + $0x20] sm:$0xff] %vm838, %v2274
    %2318 = vst.msk [vmem:[#allocation3 + $0x28] sm:$0xff] %vm838, %v2276
    %2319 = vst.msk [vmem:[#allocation3 + $0x30] sm:$0xff] %vm838, %v2278
    %2320 = vst.msk [vmem:[#allocation3 + $0x38] sm:$0xff] %vm838, %v2280
    %2321 = vst.msk [vmem:[#allocation3 + $0x40] sm:$0xff] %vm838, %v2282
    %2322 = vst.msk [vmem:[#allocation3 + $0x48] sm:$0xff] %vm838, %v2284
    %2323 = vst.msk [vmem:[#allocation3 + $0x50] sm:$0xff] %vm838, %v2286
    %2324 = vst.msk [vmem:[#allocation3 + $0x58] sm:$0xff] %vm838, %v2288
    %2325 = vst.msk [vmem:[#allocation3 + $0x60] sm:$0xff] %vm838, %v2290
    %2326 = vst.msk [vmem:[#allocation3 + $0x68] sm:$0xff] %vm838, %v2292
    %2327 = vst.msk [vmem:[#allocation3 + $0x70] sm:$0xff] %vm838, %v2294
    %2328 = vst.msk [vmem:[#allocation3 + $0x78] sm:$0xff] %vm838, %v2296
    %v2329 = vld [vmem:[%s514 + $0x3] sm:$0xff]
    %v2330 = vld [vmem:[%s514 + $0x13] sm:$0xff]
    %v2331 = vld [vmem:[%s514 + $0x23] sm:$0xff]
    %v2332 = vld [vmem:[%s514 + $0x33] sm:$0xff]
    %v2333 = vld [vmem:[%s514 + $0x43] sm:$0xff]
    %v2334 = vld [vmem:[%s514 + $0x53] sm:$0xff]
    %v2335 = vld [vmem:[%s514 + $0x63] sm:$0xff]
    %v2336 = vld [vmem:[%s514 + $0x73] sm:$0xff]
    %v2337 = vld [vmem:[%s514 + $0xb3] sm:$0xff]
    %v2338 = vld [vmem:[%s514 + $0xc3] sm:$0xff]
    %v2339 = vld [vmem:[%s514 + $0xd3] sm:$0xff]
    %v2340 = vld [vmem:[%s514 + $0xe3] sm:$0xff]
    %v2341 = vld [vmem:[%s514 + $0xf3] sm:$0xff]
    %v2342 = vld [vmem:[%s514 + $0x103] sm:$0xff]
    %v2343 = vld [vmem:[%s514 + $0x113] sm:$0xff]
    %v2344 = vld [vmem:[%s514 + $0x123] sm:$0xff]
    %2361 = vrot.lane.b32.xlu0 %v2329, 64
    %v2362 = vpop.permute.xlu0 %2361
    %2363 = vrot.lane.b32.xlu0 %v2330, 64
    %v2364 = vpop.permute.xlu0 %2363
    %2365 = vrot.lane.b32.xlu0 %v2331, 64
    %v2366 = vpop.permute.xlu0 %2365
    %2367 = vrot.lane.b32.xlu0 %v2332, 64
    %v2368 = vpop.permute.xlu0 %2367
    %2369 = vrot.lane.b32.xlu0 %v2333, 64
    %v2370 = vpop.permute.xlu0 %2369
    %2371 = vrot.lane.b32.xlu0 %v2334, 64
    %v2372 = vpop.permute.xlu0 %2371
    %2373 = vrot.lane.b32.xlu0 %v2335, 64
    %v2374 = vpop.permute.xlu0 %2373
    %2375 = vrot.lane.b32.xlu0 %v2336, 64
    %v2376 = vpop.permute.xlu0 %2375
    %2377 = vrot.lane.b32.xlu0 %v2337, 64
    %v2378 = vpop.permute.xlu0 %2377
    %2379 = vrot.lane.b32.xlu0 %v2338, 64
    %v2380 = vpop.permute.xlu0 %2379
    %2381 = vrot.lane.b32.xlu0 %v2339, 64
    %v2382 = vpop.permute.xlu0 %2381
    %2383 = vrot.lane.b32.xlu0 %v2340, 64
    %v2384 = vpop.permute.xlu0 %2383
    %2385 = vrot.lane.b32.xlu0 %v2341, 64
    %v2386 = vpop.permute.xlu0 %2385
    %2387 = vrot.lane.b32.xlu0 %v2342, 64
    %v2388 = vpop.permute.xlu0 %2387
    %2389 = vrot.lane.b32.xlu0 %v2343, 64
    %v2390 = vpop.permute.xlu0 %2389
    %2391 = vrot.lane.b32.xlu0 %v2344, 64
    %v2392 = vpop.permute.xlu0 %2391
    %2409 = vst.msk [vmem:[#allocation3] sm:$0xff] %vm935, %v2362
    %2410 = vst.msk [vmem:[#allocation3 + $0x8] sm:$0xff] %vm935, %v2364
    %2411 = vst.msk [vmem:[#allocation3 + $0x10] sm:$0xff] %vm935, %v2366
    %2412 = vst.msk [vmem:[#allocation3 + $0x18] sm:$0xff] %vm935, %v2368
    %2413 = vst.msk [vmem:[#allocation3 + $0x20] sm:$0xff] %vm935, %v2370
    %2414 = vst.msk [vmem:[#allocation3 + $0x28] sm:$0xff] %vm935, %v2372
    %2415 = vst.msk [vmem:[#allocation3 + $0x30] sm:$0xff] %vm935, %v2374
    %2416 = vst.msk [vmem:[#allocation3 + $0x38] sm:$0xff] %vm935, %v2376
    %2417 = vst.msk [vmem:[#allocation3 + $0x40] sm:$0xff] %vm935, %v2378
    %2418 = vst.msk [vmem:[#allocation3 + $0x48] sm:$0xff] %vm935, %v2380
    %2419 = vst.msk [vmem:[#allocation3 + $0x50] sm:$0xff] %vm935, %v2382
    %2420 = vst.msk [vmem:[#allocation3 + $0x58] sm:$0xff] %vm935, %v2384
    %2421 = vst.msk [vmem:[#allocation3 + $0x60] sm:$0xff] %vm935, %v2386
    %2422 = vst.msk [vmem:[#allocation3 + $0x68] sm:$0xff] %vm935, %v2388
    %2423 = vst.msk [vmem:[#allocation3 + $0x70] sm:$0xff] %vm935, %v2390
    %2424 = vst.msk [vmem:[#allocation3 + $0x78] sm:$0xff] %vm935, %v2392
    %v2425 = vld [vmem:[%s514 + $0x5] sm:$0xff]
    %v2426 = vld [vmem:[%s514 + $0x15] sm:$0xff]
    %v2427 = vld [vmem:[%s514 + $0x25] sm:$0xff]
    %v2428 = vld [vmem:[%s514 + $0x35] sm:$0xff]
    %v2429 = vld [vmem:[%s514 + $0x45] sm:$0xff]
    %v2430 = vld [vmem:[%s514 + $0x55] sm:$0xff]
    %v2431 = vld [vmem:[%s514 + $0x65] sm:$0xff]
    %v2432 = vld [vmem:[%s514 + $0x75] sm:$0xff]
    %v2433 = vld [vmem:[%s514 + $0xb5] sm:$0xff]
    %v2434 = vld [vmem:[%s514 + $0xc5] sm:$0xff]
    %v2435 = vld [vmem:[%s514 + $0xd5] sm:$0xff]
    %v2436 = vld [vmem:[%s514 + $0xe5] sm:$0xff]
    %v2437 = vld [vmem:[%s514 + $0xf5] sm:$0xff]
    %v2438 = vld [vmem:[%s514 + $0x105] sm:$0xff]
    %v2439 = vld [vmem:[%s514 + $0x115] sm:$0xff]
    %v2440 = vld [vmem:[%s514 + $0x125] sm:$0xff]
    %2457 = vrot.lane.b32.xlu0 %v2425, 80
    %v2458 = vpop.permute.xlu0 %2457
    %2459 = vrot.lane.b32.xlu0 %v2426, 80
    %v2460 = vpop.permute.xlu0 %2459
    %2461 = vrot.lane.b32.xlu0 %v2427, 80
    %v2462 = vpop.permute.xlu0 %2461
    %2463 = vrot.lane.b32.xlu0 %v2428, 80
    %v2464 = vpop.permute.xlu0 %2463
    %2465 = vrot.lane.b32.xlu0 %v2429, 80
    %v2466 = vpop.permute.xlu0 %2465
    %2467 = vrot.lane.b32.xlu0 %v2430, 80
    %v2468 = vpop.permute.xlu0 %2467
    %2469 = vrot.lane.b32.xlu0 %v2431, 80
    %v2470 = vpop.permute.xlu0 %2469
    %2471 = vrot.lane.b32.xlu0 %v2432, 80
    %v2472 = vpop.permute.xlu0 %2471
    %2473 = vrot.lane.b32.xlu0 %v2433, 80
    %v2474 = vpop.permute.xlu0 %2473
    %2475 = vrot.lane.b32.xlu0 %v2434, 80
    %v2476 = vpop.permute.xlu0 %2475
    %2477 = vrot.lane.b32.xlu0 %v2435, 80
    %v2478 = vpop.permute.xlu0 %2477
    %2479 = vrot.lane.b32.xlu0 %v2436, 80
    %v2480 = vpop.permute.xlu0 %2479
    %2481 = vrot.lane.b32.xlu0 %v2437, 80
    %v2482 = vpop.permute.xlu0 %2481
    %2483 = vrot.lane.b32.xlu0 %v2438, 80
    %v2484 = vpop.permute.xlu0 %2483
    %2485 = vrot.lane.b32.xlu0 %v2439, 80
    %v2486 = vpop.permute.xlu0 %2485
    %2487 = vrot.lane.b32.xlu0 %v2440, 80
    %v2488 = vpop.permute.xlu0 %2487
    %2505 = vst.msk [vmem:[#allocation3] sm:$0xff] %vm1032, %v2458
    %2506 = vst.msk [vmem:[#allocation3 + $0x8] sm:$0xff] %vm1032, %v2460
    %2507 = vst.msk [vmem:[#allocation3 + $0x10] sm:$0xff] %vm1032, %v2462
    %2508 = vst.msk [vmem:[#allocation3 + $0x18] sm:$0xff] %vm1032, %v2464
    %2509 = vst.msk [vmem:[#allocation3 + $0x20] sm:$0xff] %vm1032, %v2466
    %2510 = vst.msk [vmem:[#allocation3 + $0x28] sm:$0xff] %vm1032, %v2468
    %2511 = vst.msk [vmem:[#allocation3 + $0x30] sm:$0xff] %vm1032, %v2470
    %2512 = vst.msk [vmem:[#allocation3 + $0x38] sm:$0xff] %vm1032, %v2472
    %2513 = vst.msk [vmem:[#allocation3 + $0x40] sm:$0xff] %vm1032, %v2474
    %2514 = vst.msk [vmem:[#allocation3 + $0x48] sm:$0xff] %vm1032, %v2476
    %2515 = vst.msk [vmem:[#allocation3 + $0x50] sm:$0xff] %vm1032, %v2478
    %2516 = vst.msk [vmem:[#allocation3 + $0x58] sm:$0xff] %vm1032, %v2480
    %2517 = vst.msk [vmem:[#allocation3 + $0x60] sm:$0xff] %vm1032, %v2482
    %2518 = vst.msk [vmem:[#allocation3 + $0x68] sm:$0xff] %vm1032, %v2484
    %2519 = vst.msk [vmem:[#allocation3 + $0x70] sm:$0xff] %vm1032, %v2486
    %2520 = vst.msk [vmem:[#allocation3 + $0x78] sm:$0xff] %vm1032, %v2488
    %v2521 = vld [vmem:[#allocation3] sm:$0xff]
    %v2522 = vld [vmem:[#allocation3 + $0x8] sm:$0xff]
    %v2523 = vld [vmem:[#allocation3 + $0x10] sm:$0xff]
    %v2524 = vld [vmem:[#allocation3 + $0x18] sm:$0xff]
    %v2525 = vld [vmem:[#allocation3 + $0x20] sm:$0xff]
    %v2526 = vld [vmem:[#allocation3 + $0x28] sm:$0xff]
    %v2527 = vld [vmem:[#allocation3 + $0x30] sm:$0xff]
    %v2528 = vld [vmem:[#allocation3 + $0x38] sm:$0xff]
    %v2529 = vld [vmem:[#allocation3 + $0x40] sm:$0xff]
    %v2530 = vld [vmem:[#allocation3 + $0x48] sm:$0xff]
    %v2531 = vld [vmem:[#allocation3 + $0x50] sm:$0xff]
    %v2532 = vld [vmem:[#allocation3 + $0x58] sm:$0xff]
    %v2533 = vld [vmem:[#allocation3 + $0x60] sm:$0xff]
    %v2534 = vld [vmem:[#allocation3 + $0x68] sm:$0xff]
    %v2535 = vld [vmem:[#allocation3 + $0x70] sm:$0xff]
    %v2536 = vld [vmem:[#allocation3 + $0x78] sm:$0xff]
    %s2537 = scalar_lea.vmem %s4, 96
    %v2538 = vld [vmem:[%s2537] sm:$0xff]
    %v2539 = vld [vmem:[%s2537 + $0x8] sm:$0xff]
    %v2540 = vld [vmem:[%s2537 + $0x10] sm:$0xff]
    %v2541 = vld [vmem:[%s2537 + $0x18] sm:$0xff]
    %v2542 = vld [vmem:[%s2537 + $0x20] sm:$0xff]
    %v2543 = vld [vmem:[%s2537 + $0x28] sm:$0xff]
    %v2544 = vld [vmem:[%s2537 + $0x30] sm:$0xff]
    %v2545 = vld [vmem:[%s2537 + $0x38] sm:$0xff]
    %v2546 = vld [vmem:[%s2537 + $0x40] sm:$0xff]
    %v2547 = vld [vmem:[%s2537 + $0x48] sm:$0xff]
    %v2548 = vld [vmem:[%s2537 + $0x50] sm:$0xff]
    %v2549 = vld [vmem:[%s2537 + $0x58] sm:$0xff]
    %s2550 = scalar_lea.vmem %s5, 1
    %v2551 = vld [vmem:[%s2550] sm:$0x1]
    %v2553 = vlaneseq
    %v2554 = vshrl.u32 %v2553, 7
    %v2555 = vsub.s32 0, %v2554
    %v2556 = vrot.slane %v2551, %v2555
    %v2559 = vsel %vm1084, %v2521, 0
    %v2562 = vsel %vm1084, %v2522, 0
    %v2565 = vsel %vm1084, %v2523, 0
    %v2568 = vsel %vm1084, %v2524, 0
    %v2571 = vsel %vm1084, %v2525, 0
    %v2574 = vsel %vm1084, %v2526, 0
    %v2577 = vsel %vm1084, %v2527, 0
    %v2580 = vsel %vm1084, %v2528, 0
    %v2583 = vsel %vm1084, %v2529, 0
    %v2586 = vsel %vm1084, %v2530, 0
    %v2589 = vsel %vm1084, %v2531, 0
    %v2592 = vsel %vm1084, %v2532, 0
    %v2595 = vsel %vm1084, %v2533, 0
    %v2598 = vsel %vm1084, %v2534, 0
    %v2601 = vsel %vm1084, %v2535, 0
    %v2604 = vsel %vm1084, %v2536, 0
    %2606 = vmatprep.subr.mxu0 0.0
    %2607 = vmatpush1.msra.mxu0 %v2538
    %2608 = vmatprep.subr.mxu0 0.0
    %2609 = vmatpush1.msra.mxu0 %v2539
    %2610 = vmatprep.subr.mxu0 0.0
    %2611 = vmatpush1.msra.mxu0 %v2540
    %2612 = vmatprep.subr.mxu0 0.0
    %2613 = vmatpush1.msra.mxu0 %v2541
    %2614 = vmatprep.subr.mxu0 0.0
    %2615 = vmatpush1.msra.mxu0 %v2542
    %2616 = vmatprep.subr.mxu0 0.0
    %2617 = vmatpush1.msra.mxu0 %v2543
    %2618 = vmatprep.subr.mxu0 0.0
    %2619 = vmatpush1.msra.mxu0 %v2544
    %2620 = vmatprep.subr.mxu0 0.0
    %2621 = vmatpush1.msra.mxu0 %v2545
    %2622 = vmatprep.subr.mxu0 0.0
    %2623 = vmatpush1.msra.mxu0 %v2546
    %2624 = vmatprep.subr.mxu0 0.0
    %2625 = vmatpush1.msra.mxu0 %v2547
    %2626 = vmatprep.subr.mxu0 0.0
    %2627 = vmatpush1.msra.mxu0 %v2548
    %2628 = vmatprep.subr.mxu0 0.0
    %2629 = vmatpush1.msra.mxu0 %v2549
    %2630 = vmatprep.subr.mxu0 0.0
    %2631 = vmatpush1.msra.mxu0 0.0
    %2632 = vmatprep.subr.mxu0 0.0
    %2633 = vmatpush1.msra.mxu0 0.0
    %2634 = vmatprep.subr.mxu0 0.0
    %2635 = vmatpush1.msra.mxu0 0.0
    %2636 = vmatprep.subr.mxu0 0.0
    %2637 = vmatpush1.msra.mxu0 0.0
    %2638 = vmatprep.subr.mxu0 0.0
    %2639 = vmatpush1.msra.mxu0 0.0
    %2640 = vmatprep.subr.mxu0 0.0
    %2641 = vmatpush1.msra.mxu0 0.0
    %2642 = vmatprep.subr.mxu0 0.0
    %2643 = vmatpush1.msra.mxu0 0.0
    %2644 = vmatprep.subr.mxu0 0.0
    %2645 = vmatpush1.msra.mxu0 0.0
    %2646 = vmatprep.subr.mxu0 0.0
    %2647 = vmatpush1.msra.mxu0 0.0
    %2648 = vmatprep.subr.mxu0 0.0
    %2649 = vmatpush1.msra.mxu0 0.0
    %2650 = vmatprep.subr.mxu0 0.0
    %2651 = vmatpush1.msra.mxu0 0.0
    %2652 = vmatprep.subr.mxu0 0.0
    %2653 = vmatpush1.msra.mxu0 0.0
    %2654 = vmatprep.subr.mxu0 0.0
    %2655 = vmatpush1.msra.mxu0 0.0
    %2656 = vmatprep.subr.mxu0 0.0
    %2657 = vmatpush1.msra.mxu0 0.0
    %2658 = vmatprep.subr.mxu0 0.0
    %2659 = vmatpush1.msra.mxu0 0.0
    %2660 = vmatprep.subr.mxu0 0.0
    %2661 = vmatpush1.msra.mxu0 0.0
    %2662 = vmatprep.subr.mxu0 0.0
    %2663 = vmatpush1.msra.mxu0 0.0
    %2664 = vmatprep.subr.mxu0 0.0
    %2665 = vmatpush1.msra.mxu0 0.0
    %2666 = vmatprep.subr.mxu0 0.0
    %2667 = vmatpush1.msra.mxu0 0.0
    %2668 = vmatprep.subr.mxu0 0.0
    %2669 = vmatpush1.msra.mxu0 0.0
    %2670 = vmatprep.mubr.f32.mxu0 0.0
    %2671 = vmatmul.mubr.f32.gmra.mrb[0].mxu0 %v2559
    %v2672 = vpop.f32.mrb[0].mxu0
    %v2673 = vadd.f32 %v2556, %v2672
    %v2674 = vpop.f32.mrb[0].mxu0
    %2675 = vmatprep.mubr.f32.mxu0 0.0
    %2676 = vmatmul.mubr.f32.gmra.mrb[0].mxu0 %v2562
    %v2677 = vpop.f32.mrb[0].mxu0
    %v2678 = vadd.f32 %v2556, %v2677
    %v2679 = vpop.f32.mrb[0].mxu0
    %2680 = vmatprep.mubr.f32.mxu0 0.0
    %2681 = vmatmul.mubr.f32.gmra.mrb[0].mxu0 %v2565
    %v2682 = vpop.f32.mrb[0].mxu0
    %v2683 = vadd.f32 %v2556, %v2682
    %v2684 = vpop.f32.mrb[0].mxu0
    %2685 = vmatprep.mubr.f32.mxu0 0.0
    %2686 = vmatmul.mubr.f32.gmra.mrb[0].mxu0 %v2568
    %v2687 = vpop.f32.mrb[0].mxu0
    %v2688 = vadd.f32 %v2556, %v2687
    %v2689 = vpop.f32.mrb[0].mxu0
    %2690 = vmatprep.mubr.f32.mxu0 0.0
    %2691 = vmatmul.mubr.f32.gmra.mrb[0].mxu0 %v2571
    %v2692 = vpop.f32.mrb[0].mxu0
    %v2693 = vadd.f32 %v2556, %v2692
    %v2694 = vpop.f32.mrb[0].mxu0
    %2695 = vmatprep.mubr.f32.mxu0 0.0
    %2696 = vmatmul.mubr.f32.gmra.mrb[0].mxu0 %v2574
    %v2697 = vpop.f32.mrb[0].mxu0
    %v2698 = vadd.f32 %v2556, %v2697
    %v2699 = vpop.f32.mrb[0].mxu0
    %2700 = vmatprep.mubr.f32.mxu0 0.0
    %2701 = vmatmul.mubr.f32.gmra.mrb[0].mxu0 %v2577
    %v2702 = vpop.f32.mrb[0].mxu0
    %v2703 = vadd.f32 %v2556, %v2702
    %v2704 = vpop.f32.mrb[0].mxu0
    %2705 = vmatprep.mubr.f32.mxu0 0.0
    %2706 = vmatmul.mubr.f32.gmra.mrb[0].mxu0 %v2580
    %v2707 = vpop.f32.mrb[0].mxu0
    %v2708 = vadd.f32 %v2556, %v2707
    %v2709 = vpop.f32.mrb[0].mxu0
    %2710 = vmatprep.mubr.f32.mxu0 0.0
    %2711 = vmatmul.mubr.f32.gmra.mrb[0].mxu0 %v2583
    %v2712 = vpop.f32.mrb[0].mxu0
    %v2713 = vadd.f32 %v2556, %v2712
    %v2714 = vpop.f32.mrb[0].mxu0
    %2715 = vmatprep.mubr.f32.mxu0 0.0
    %2716 = vmatmul.mubr.f32.gmra.mrb[0].mxu0 %v2586
    %v2717 = vpop.f32.mrb[0].mxu0
    %v2718 = vadd.f32 %v2556, %v2717
    %v2719 = vpop.f32.mrb[0].mxu0
    %2720 = vmatprep.mubr.f32.mxu0 0.0
    %2721 = vmatmul.mubr.f32.gmra.mrb[0].mxu0 %v2589
    %v2722 = vpop.f32.mrb[0].mxu0
    %v2723 = vadd.f32 %v2556, %v2722
    %v2724 = vpop.f32.mrb[0].mxu0
    %2725 = vmatprep.mubr.f32.mxu0 0.0
    %2726 = vmatmul.mubr.f32.gmra.mrb[0].mxu0 %v2592
    %v2727 = vpop.f32.mrb[0].mxu0
    %v2728 = vadd.f32 %v2556, %v2727
    %v2729 = vpop.f32.mrb[0].mxu0
    %2730 = vmatprep.mubr.f32.mxu0 0.0
    %2731 = vmatmul.mubr.f32.gmra.mrb[0].mxu0 %v2595
    %v2732 = vpop.f32.mrb[0].mxu0
    %v2733 = vadd.f32 %v2556, %v2732
    %v2734 = vpop.f32.mrb[0].mxu0
    %2735 = vmatprep.mubr.f32.mxu0 0.0
    %2736 = vmatmul.mubr.f32.gmra.mrb[0].mxu0 %v2598
    %v2737 = vpop.f32.mrb[0].mxu0
    %v2738 = vadd.f32 %v2556, %v2737
    %v2739 = vpop.f32.mrb[0].mxu0
    %2740 = vmatprep.mubr.f32.mxu0 0.0
    %2741 = vmatmul.mubr.f32.gmra.mrb[0].mxu0 %v2601
    %v2742 = vpop.f32.mrb[0].mxu0
    %v2743 = vadd.f32 %v2556, %v2742
    %v2744 = vpop.f32.mrb[0].mxu0
    %2745 = vmatprep.mubr.f32.mxu0 0.0
    %2746 = vmatmul.mubr.f32.gmra.mrb[0].mxu0 %v2604
    %v2747 = vpop.f32.mrb[0].mxu0
    %v2748 = vadd.f32 %v2556, %v2747
    %v2749 = vpop.f32.mrb[0].mxu0
    %2750 = vdwg.mxu0
    %v2751 = vadd.f32 %v2673, %v1748
    %v2752 = vadd.f32 %v2678, %v1749
    %v2753 = vadd.f32 %v2683, %v1750
    %v2754 = vadd.f32 %v2688, %v1751
    %v2755 = vadd.f32 %v2693, %v1752
    %v2756 = vadd.f32 %v2698, %v1753
    %v2757 = vadd.f32 %v2703, %v1754
    %v2758 = vadd.f32 %v2708, %v1755
    %v2759 = vadd.f32 %v2713, %v1756
    %v2760 = vadd.f32 %v2718, %v1757
    %v2761 = vadd.f32 %v2723, %v1758
    %v2762 = vadd.f32 %v2728, %v1759
    %v2763 = vadd.f32 %v2733, %v1760
    %v2764 = vadd.f32 %v2738, %v1761
    %v2765 = vadd.f32 %v2743, %v1762
    %v2766 = vadd.f32 %v2748, %v1763
    %v2767 = vmul.f32 %v2751, 0.70710677
    %v2768 = vmul.f32 %v2752, 0.70710677
    %v2769 = vmul.f32 %v2753, 0.70710677
    %v2770 = vmul.f32 %v2754, 0.70710677
    %v2771 = vmul.f32 %v2755, 0.70710677
    %v2772 = vmul.f32 %v2756, 0.70710677
    %v2773 = vmul.f32 %v2757, 0.70710677
    %v2774 = vmul.f32 %v2758, 0.70710677
    %v2775 = vmul.f32 %v2759, 0.70710677
    %v2776 = vmul.f32 %v2760, 0.70710677
    %v2777 = vmul.f32 %v2761, 0.70710677
    %v2778 = vmul.f32 %v2762, 0.70710677
    %v2779 = vmul.f32 %v2763, 0.70710677
    %v2780 = vmul.f32 %v2764, 0.70710677
    %v2781 = vmul.f32 %v2765, 0.70710677
    %v2782 = vmul.f32 %v2766, 0.70710677
    %s2783 = scalar_lea.vmem %s6, 16
    %v2784 = vld [vmem:[%s2783] sm:$0xff]
    %v2785 = vld [vmem:[%s2783 + $0x8] sm:$0xff]
    %s2786 = scalar_lea.vmem %s7, 1
    %v2787 = vld [vmem:[%s2786] sm:$0x1]
    %v2789 = vlaneseq
    %v2790 = vshrl.u32 %v2789, 7
    %v2791 = vsub.s32 0, %v2790
    %v2792 = vrot.slane %v2787, %v2791
    %v2795 = vsel %vm273, %v2767, 0
    %v2798 = vsel %vm273, %v2768, 0
    %v2801 = vsel %vm273, %v2769, 0
    %v2804 = vsel %vm273, %v2770, 0
    %v2807 = vsel %vm273, %v2771, 0
    %v2810 = vsel %vm273, %v2772, 0
    %v2813 = vsel %vm273, %v2773, 0
    %v2816 = vsel %vm273, %v2774, 0
    %v2819 = vsel %vm273, %v2775, 0
    %v2822 = vsel %vm273, %v2776, 0
    %v2825 = vsel %vm273, %v2777, 0
    %v2828 = vsel %vm273, %v2778, 0
    %v2831 = vsel %vm273, %v2779, 0
    %v2834 = vsel %vm273, %v2780, 0
    %v2837 = vsel %vm273, %v2781, 0
    %v2840 = vsel %vm273, %v2782, 0
    %2842 = vmatprep.subr.mxu0 0.0
    %2843 = vmatpush1.msra.mxu0 %v2784
    %2844 = vmatprep.subr.mxu0 0.0
    %2845 = vmatpush1.msra.mxu0 %v2785
    %2846 = vmatprep.subr.mxu0 0.0
    %2847 = vmatpush1.msra.mxu0 0.0
    %2848 = vmatprep.subr.mxu0 0.0
    %2849 = vmatpush1.msra.mxu0 0.0
    %2850 = vmatprep.subr.mxu0 0.0
    %2851 = vmatpush1.msra.mxu0 0.0
    %2852 = vmatprep.subr.mxu0 0.0
    %2853 = vmatpush1.msra.mxu0 0.0
    %2854 = vmatprep.subr.mxu0 0.0
    %2855 = vmatpush1.msra.mxu0 0.0
    %2856 = vmatprep.subr.mxu0 0.0
    %2857 = vmatpush1.msra.mxu0 0.0
    %2858 = vmatprep.subr.mxu0 0.0
    %2859 = vmatpush1.msra.mxu0 0.0
    %2860 = vmatprep.subr.mxu0 0.0
    %2861 = vmatpush1.msra.mxu0 0.0
    %2862 = vmatprep.subr.mxu0 0.0
    %2863 = vmatpush1.msra.mxu0 0.0
    %2864 = vmatprep.subr.mxu0 0.0
    %2865 = vmatpush1.msra.mxu0 0.0
    %2866 = vmatprep.subr.mxu0 0.0
    %2867 = vmatpush1.msra.mxu0 0.0
    %2868 = vmatprep.subr.mxu0 0.0
    %2869 = vmatpush1.msra.mxu0 0.0
    %2870 = vmatprep.subr.mxu0 0.0
    %2871 = vmatpush1.msra.mxu0 0.0
    %2872 = vmatprep.subr.mxu0 0.0
    %2873 = vmatpush1.msra.mxu0 0.0
    %2874 = vmatprep.subr.mxu0 0.0
    %2875 = vmatpush1.msra.mxu0 0.0
    %2876 = vmatprep.subr.mxu0 0.0
    %2877 = vmatpush1.msra.mxu0 0.0
    %2878 = vmatprep.subr.mxu0 0.0
    %2879 = vmatpush1.msra.mxu0 0.0
    %2880 = vmatprep.subr.mxu0 0.0
    %2881 = vmatpush1.msra.mxu0 0.0
    %2882 = vmatprep.subr.mxu0 0.0
    %2883 = vmatpush1.msra.mxu0 0.0
    %2884 = vmatprep.subr.mxu0 0.0
    %2885 = vmatpush1.msra.mxu0 0.0
    %2886 = vmatprep.subr.mxu0 0.0
    %2887 = vmatpush1.msra.mxu0 0.0
    %2888 = vmatprep.subr.mxu0 0.0
    %2889 = vmatpush1.msra.mxu0 0.0
    %2890 = vmatprep.subr.mxu0 0.0
    %2891 = vmatpush1.msra.mxu0 0.0
    %2892 = vmatprep.subr.mxu0 0.0
    %2893 = vmatpush1.msra.mxu0 0.0
    %2894 = vmatprep.subr.mxu0 0.0
    %2895 = vmatpush1.msra.mxu0 0.0
    %2896 = vmatprep.subr.mxu0 0.0
    %2897 = vmatpush1.msra.mxu0 0.0
    %2898 = vmatprep.subr.mxu0 0.0
    %2899 = vmatpush1.msra.mxu0 0.0
    %2900 = vmatprep.subr.mxu0 0.0
    %2901 = vmatpush1.msra.mxu0 0.0
    %2902 = vmatprep.subr.mxu0 0.0
    %2903 = vmatpush1.msra.mxu0 0.0
    %2904 = vmatprep.subr.mxu0 0.0
    %2905 = vmatpush1.msra.mxu0 0.0
    %2906 = vmatprep.mubr.f32.mxu0 0.0
    %2907 = vmatmul.mubr.f32.gmra.mrb[0].mxu0 %v2795
    %v2908 = vpop.f32.mrb[0].mxu0
    %v2909 = vadd.f32 %v2792, %v2908
    %v2910 = vpop.f32.mrb[0].mxu0
    %2911 = vmatprep.mubr.f32.mxu0 0.0
    %2912 = vmatmul.mubr.f32.gmra.mrb[0].mxu0 %v2798
    %v2913 = vpop.f32.mrb[0].mxu0
    %v2914 = vadd.f32 %v2792, %v2913
    %v2915 = vpop.f32.mrb[0].mxu0
    %2916 = vmatprep.mubr.f32.mxu0 0.0
    %2917 = vmatmul.mubr.f32.gmra.mrb[0].mxu0 %v2801
    %v2918 = vpop.f32.mrb[0].mxu0
    %v2919 = vadd.f32 %v2792, %v2918
    %v2920 = vpop.f32.mrb[0].mxu0
    %2921 = vmatprep.mubr.f32.mxu0 0.0
    %2922 = vmatmul.mubr.f32.gmra.mrb[0].mxu0 %v2804
    %v2923 = vpop.f32.mrb[0].mxu0
    %v2924 = vadd.f32 %v2792, %v2923
    %v2925 = vpop.f32.mrb[0].mxu0
    %2926 = vmatprep.mubr.f32.mxu0 0.0
    %2927 = vmatmul.mubr.f32.gmra.mrb[0].mxu0 %v2807
    %v2928 = vpop.f32.mrb[0].mxu0
    %v2929 = vadd.f32 %v2792, %v2928
    %v2930 = vpop.f32.mrb[0].mxu0
    %2931 = vmatprep.mubr.f32.mxu0 0.0
    %2932 = vmatmul.mubr.f32.gmra.mrb[0].mxu0 %v2810
    %v2933 = vpop.f32.mrb[0].mxu0
    %v2934 = vadd.f32 %v2792, %v2933
    %v2935 = vpop.f32.mrb[0].mxu0
    %2936 = vmatprep.mubr.f32.mxu0 0.0
    %2937 = vmatmul.mubr.f32.gmra.mrb[0].mxu0 %v2813
    %v2938 = vpop.f32.mrb[0].mxu0
    %v2939 = vadd.f32 %v2792, %v2938
    %v2940 = vpop.f32.mrb[0].mxu0
    %2941 = vmatprep.mubr.f32.mxu0 0.0
    %2942 = vmatmul.mubr.f32.gmra.mrb[0].mxu0 %v2816
    %v2943 = vpop.f32.mrb[0].mxu0
    %v2944 = vadd.f32 %v2792, %v2943
    %v2945 = vpop.f32.mrb[0].mxu0
    %2946 = vmatprep.mubr.f32.mxu0 0.0
    %2947 = vmatmul.mubr.f32.gmra.mrb[0].mxu0 %v2819
    %v2948 = vpop.f32.mrb[0].mxu0
    %v2949 = vadd.f32 %v2792, %v2948
    %v2950 = vpop.f32.mrb[0].mxu0
    %2951 = vmatprep.mubr.f32.mxu0 0.0
    %2952 = vmatmul.mubr.f32.gmra.mrb[0].mxu0 %v2822
    %v2953 = vpop.f32.mrb[0].mxu0
    %v2954 = vadd.f32 %v2792, %v2953
    %v2955 = vpop.f32.mrb[0].mxu0
    %2956 = vmatprep.mubr.f32.mxu0 0.0
    %2957 = vmatmul.mubr.f32.gmra.mrb[0].mxu0 %v2825
    %v2958 = vpop.f32.mrb[0].mxu0
    %v2959 = vadd.f32 %v2792, %v2958
    %v2960 = vpop.f32.mrb[0].mxu0
    %2961 = vmatprep.mubr.f32.mxu0 0.0
    %2962 = vmatmul.mubr.f32.gmra.mrb[0].mxu0 %v2828
    %v2963 = vpop.f32.mrb[0].mxu0
    %v2964 = vadd.f32 %v2792, %v2963
    %v2965 = vpop.f32.mrb[0].mxu0
    %2966 = vmatprep.mubr.f32.mxu0 0.0
    %2967 = vmatmul.mubr.f32.gmra.mrb[0].mxu0 %v2831
    %v2968 = vpop.f32.mrb[0].mxu0
    %v2969 = vadd.f32 %v2792, %v2968
    %v2970 = vpop.f32.mrb[0].mxu0
    %2971 = vmatprep.mubr.f32.mxu0 0.0
    %2972 = vmatmul.mubr.f32.gmra.mrb[0].mxu0 %v2834
    %v2973 = vpop.f32.mrb[0].mxu0
    %v2974 = vadd.f32 %v2792, %v2973
    %v2975 = vpop.f32.mrb[0].mxu0
    %2976 = vmatprep.mubr.f32.mxu0 0.0
    %2977 = vmatmul.mubr.f32.gmra.mrb[0].mxu0 %v2837
    %v2978 = vpop.f32.mrb[0].mxu0
    %v2979 = vadd.f32 %v2792, %v2978
    %v2980 = vpop.f32.mrb[0].mxu0
    %2981 = vmatprep.mubr.f32.mxu0 0.0
    %2982 = vmatmul.mubr.f32.gmra.mrb[0].mxu0 %v2840
    %v2983 = vpop.f32.mrb[0].mxu0
    %v2984 = vadd.f32 %v2792, %v2983
    %v2985 = vpop.f32.mrb[0].mxu0
    %2986 = vdwg.mxu0
    %v2987 = vmax.f32 %v2909, 0.0
    %v2988 = vmax.f32 %v2914, 0.0
    %v2989 = vmax.f32 %v2919, 0.0
    %v2990 = vmax.f32 %v2924, 0.0
    %v2991 = vmax.f32 %v2929, 0.0
    %v2992 = vmax.f32 %v2934, 0.0
    %v2993 = vmax.f32 %v2939, 0.0
    %v2994 = vmax.f32 %v2944, 0.0
    %v2995 = vmax.f32 %v2949, 0.0
    %v2996 = vmax.f32 %v2954, 0.0
    %v2997 = vmax.f32 %v2959, 0.0
    %v2998 = vmax.f32 %v2964, 0.0
    %v2999 = vmax.f32 %v2969, 0.0
    %v3000 = vmax.f32 %v2974, 0.0
    %v3001 = vmax.f32 %v2979, 0.0
    %v3002 = vmax.f32 %v2984, 0.0
    %s3003 = scalar_lea.vmem %s8, 32
    %v3004 = vld [vmem:[%s3003] sm:$0xff]
    %v3005 = vld [vmem:[%s3003 + $0x8] sm:$0xff]
    %v3006 = vld [vmem:[%s3003 + $0x10] sm:$0xff]
    %v3007 = vld [vmem:[%s3003 + $0x18] sm:$0xff]
    %s3008 = scalar_lea.vmem %s9, 1
    %v3009 = vld [vmem:[%s3008] sm:$0x1]
    %v3011 = vlaneseq
    %v3012 = vshrl.u32 %v3011, 7
    %v3013 = vsub.s32 0, %v3012
    %v3014 = vrot.slane %v3009, %v3013
    %v3017 = vsel %vm63, %v2987, 0
    %v3020 = vsel %vm63, %v2988, 0
    %v3023 = vsel %vm63, %v2989, 0
    %v3026 = vsel %vm63, %v2990, 0
    %v3029 = vsel %vm63, %v2991, 0
    %v3032 = vsel %vm63, %v2992, 0
    %v3035 = vsel %vm63, %v2993, 0
    %v3038 = vsel %vm63, %v2994, 0
    %v3041 = vsel %vm63, %v2995, 0
    %v3044 = vsel %vm63, %v2996, 0
    %v3047 = vsel %vm63, %v2997, 0
    %v3050 = vsel %vm63, %v2998, 0
    %v3053 = vsel %vm63, %v2999, 0
    %v3056 = vsel %vm63, %v3000, 0
    %v3059 = vsel %vm63, %v3001, 0
    %v3062 = vsel %vm63, %v3002, 0
    %3064 = vmatprep.subr.mxu0 0.0
    %3065 = vmatpush1.msra.mxu0 %v3004
    %3066 = vmatprep.subr.mxu0 0.0
    %3067 = vmatpush1.msra.mxu0 %v3005
    %3068 = vmatprep.subr.mxu0 0.0
    %3069 = vmatpush1.msra.mxu0 %v3006
    %3070 = vmatprep.subr.mxu0 0.0
    %3071 = vmatpush1.msra.mxu0 %v3007
    %3072 = vmatprep.subr.mxu0 0.0
    %3073 = vmatpush1.msra.mxu0 0.0
    %3074 = vmatprep.subr.mxu0 0.0
    %3075 = vmatpush1.msra.mxu0 0.0
    %3076 = vmatprep.subr.mxu0 0.0
    %3077 = vmatpush1.msra.mxu0 0.0
    %3078 = vmatprep.subr.mxu0 0.0
    %3079 = vmatpush1.msra.mxu0 0.0
    %3080 = vmatprep.subr.mxu0 0.0
    %3081 = vmatpush1.msra.mxu0 0.0
    %3082 = vmatprep.subr.mxu0 0.0
    %3083 = vmatpush1.msra.mxu0 0.0
    %3084 = vmatprep.subr.mxu0 0.0
    %3085 = vmatpush1.msra.mxu0 0.0
    %3086 = vmatprep.subr.mxu0 0.0
    %3087 = vmatpush1.msra.mxu0 0.0
    %3088 = vmatprep.subr.mxu0 0.0
    %3089 = vmatpush1.msra.mxu0 0.0
    %3090 = vmatprep.subr.mxu0 0.0
    %3091 = vmatpush1.msra.mxu0 0.0
    %3092 = vmatprep.subr.mxu0 0.0
    %3093 = vmatpush1.msra.mxu0 0.0
    %3094 = vmatprep.subr.mxu0 0.0
    %3095 = vmatpush1.msra.mxu0 0.0
    %3096 = vmatprep.subr.mxu0 0.0
    %3097 = vmatpush1.msra.mxu0 0.0
    %3098 = vmatprep.subr.mxu0 0.0
    %3099 = vmatpush1.msra.mxu0 0.0
    %3100 = vmatprep.subr.mxu0 0.0
    %3101 = vmatpush1.msra.mxu0 0.0
    %3102 = vmatprep.subr.mxu0 0.0
    %3103 = vmatpush1.msra.mxu0 0.0
    %3104 = vmatprep.subr.mxu0 0.0
    %3105 = vmatpush1.msra.mxu0 0.0
    %3106 = vmatprep.subr.mxu0 0.0
    %3107 = vmatpush1.msra.mxu0 0.0
    %3108 = vmatprep.subr.mxu0 0.0
    %3109 = vmatpush1.msra.mxu0 0.0
    %3110 = vmatprep.subr.mxu0 0.0
    %3111 = vmatpush1.msra.mxu0 0.0
    %3112 = vmatprep.subr.mxu0 0.0
    %3113 = vmatpush1.msra.mxu0 0.0
    %3114 = vmatprep.subr.mxu0 0.0
    %3115 = vmatpush1.msra.mxu0 0.0
    %3116 = vmatprep.subr.mxu0 0.0
    %3117 = vmatpush1.msra.mxu0 0.0
    %3118 = vmatprep.subr.mxu0 0.0
    %3119 = vmatpush1.msra.mxu0 0.0
    %3120 = vmatprep.subr.mxu0 0.0
    %3121 = vmatpush1.msra.mxu0 0.0
    %3122 = vmatprep.subr.mxu0 0.0
    %3123 = vmatpush1.msra.mxu0 0.0
    %3124 = vmatprep.subr.mxu0 0.0
    %3125 = vmatpush1.msra.mxu0 0.0
    %3126 = vmatprep.subr.mxu0 0.0
    %3127 = vmatpush1.msra.mxu0 0.0
    %3128 = vmatprep.mubr.f32.mxu0 0.0
    %3129 = vmatmul.mubr.f32.gmra.mrb[0].mxu0 %v3017
    %v3130 = vpop.f32.mrb[0].mxu0
    %v3131 = vadd.f32 %v3014, %v3130
    %v3132 = vpop.f32.mrb[0].mxu0
    %3133 = vmatprep.mubr.f32.mxu0 0.0
    %3134 = vmatmul.mubr.f32.gmra.mrb[0].mxu0 %v3020
    %v3135 = vpop.f32.mrb[0].mxu0
    %v3136 = vadd.f32 %v3014, %v3135
    %v3137 = vpop.f32.mrb[0].mxu0
    %3138 = vmatprep.mubr.f32.mxu0 0.0
    %3139 = vmatmul.mubr.f32.gmra.mrb[0].mxu0 %v3023
    %v3140 = vpop.f32.mrb[0].mxu0
    %v3141 = vadd.f32 %v3014, %v3140
    %v3142 = vpop.f32.mrb[0].mxu0
    %3143 = vmatprep.mubr.f32.mxu0 0.0
    %3144 = vmatmul.mubr.f32.gmra.mrb[0].mxu0 %v3026
    %v3145 = vpop.f32.mrb[0].mxu0
    %v3146 = vadd.f32 %v3014, %v3145
    %v3147 = vpop.f32.mrb[0].mxu0
    %3148 = vmatprep.mubr.f32.mxu0 0.0
    %3149 = vmatmul.mubr.f32.gmra.mrb[0].mxu0 %v3029
    %v3150 = vpop.f32.mrb[0].mxu0
    %v3151 = vadd.f32 %v3014, %v3150
    %v3152 = vpop.f32.mrb[0].mxu0
    %3153 = vmatprep.mubr.f32.mxu0 0.0
    %3154 = vmatmul.mubr.f32.gmra.mrb[0].mxu0 %v3032
    %v3155 = vpop.f32.mrb[0].mxu0
    %v3156 = vadd.f32 %v3014, %v3155
    %v3157 = vpop.f32.mrb[0].mxu0
    %3158 = vmatprep.mubr.f32.mxu0 0.0
    %3159 = vmatmul.mubr.f32.gmra.mrb[0].mxu0 %v3035
    %v3160 = vpop.f32.mrb[0].mxu0
    %v3161 = vadd.f32 %v3014, %v3160
    %v3162 = vpop.f32.mrb[0].mxu0
    %3163 = vmatprep.mubr.f32.mxu0 0.0
    %3164 = vmatmul.mubr.f32.gmra.mrb[0].mxu0 %v3038
    %v3165 = vpop.f32.mrb[0].mxu0
    %v3166 = vadd.f32 %v3014, %v3165
    %v3167 = vpop.f32.mrb[0].mxu0
    %3168 = vmatprep.mubr.f32.mxu0 0.0
    %3169 = vmatmul.mubr.f32.gmra.mrb[0].mxu0 %v3041
    %v3170 = vpop.f32.mrb[0].mxu0
    %v3171 = vadd.f32 %v3014, %v3170
    %v3172 = vpop.f32.mrb[0].mxu0
    %3173 = vmatprep.mubr.f32.mxu0 0.0
    %3174 = vmatmul.mubr.f32.gmra.mrb[0].mxu0 %v3044
    %v3175 = vpop.f32.mrb[0].mxu0
    %v3176 = vadd.f32 %v3014, %v3175
    %v3177 = vpop.f32.mrb[0].mxu0
    %3178 = vmatprep.mubr.f32.mxu0 0.0
    %3179 = vmatmul.mubr.f32.gmra.mrb[0].mxu0 %v3047
    %v3180 = vpop.f32.mrb[0].mxu0
    %v3181 = vadd.f32 %v3014, %v3180
    %v3182 = vpop.f32.mrb[0].mxu0
    %3183 = vmatprep.mubr.f32.mxu0 0.0
    %3184 = vmatmul.mubr.f32.gmra.mrb[0].mxu0 %v3050
    %v3185 = vpop.f32.mrb[0].mxu0
    %v3186 = vadd.f32 %v3014, %v3185
    %v3187 = vpop.f32.mrb[0].mxu0
    %3188 = vmatprep.mubr.f32.mxu0 0.0
    %3189 = vmatmul.mubr.f32.gmra.mrb[0].mxu0 %v3053
    %v3190 = vpop.f32.mrb[0].mxu0
    %v3191 = vadd.f32 %v3014, %v3190
    %v3192 = vpop.f32.mrb[0].mxu0
    %3193 = vmatprep.mubr.f32.mxu0 0.0
    %3194 = vmatmul.mubr.f32.gmra.mrb[0].mxu0 %v3056
    %v3195 = vpop.f32.mrb[0].mxu0
    %v3196 = vadd.f32 %v3014, %v3195
    %v3197 = vpop.f32.mrb[0].mxu0
    %3198 = vmatprep.mubr.f32.mxu0 0.0
    %3199 = vmatmul.mubr.f32.gmra.mrb[0].mxu0 %v3059
    %v3200 = vpop.f32.mrb[0].mxu0
    %v3201 = vadd.f32 %v3014, %v3200
    %v3202 = vpop.f32.mrb[0].mxu0
    %3203 = vmatprep.mubr.f32.mxu0 0.0
    %3204 = vmatmul.mubr.f32.gmra.mrb[0].mxu0 %v3062
    %v3205 = vpop.f32.mrb[0].mxu0
    %v3206 = vadd.f32 %v3014, %v3205
    %v3207 = vpop.f32.mrb[0].mxu0
    %3208 = vdwg.mxu0
    %v3209 = vadd.f32 %v3131, %v2767
    %v3210 = vadd.f32 %v3136, %v2768
    %v3211 = vadd.f32 %v3141, %v2769
    %v3212 = vadd.f32 %v3146, %v2770
    %v3213 = vadd.f32 %v3151, %v2771
    %v3214 = vadd.f32 %v3156, %v2772
    %v3215 = vadd.f32 %v3161, %v2773
    %v3216 = vadd.f32 %v3166, %v2774
    %v3217 = vadd.f32 %v3171, %v2775
    %v3218 = vadd.f32 %v3176, %v2776
    %v3219 = vadd.f32 %v3181, %v2777
    %v3220 = vadd.f32 %v3186, %v2778
    %v3221 = vadd.f32 %v3191, %v2779
    %v3222 = vadd.f32 %v3196, %v2780
    %v3223 = vadd.f32 %v3201, %v2781
    %v3224 = vadd.f32 %v3206, %v2782
    %v3225 = vmul.f32 %v3209, 0.70710677
    %v3226 = vmul.f32 %v3210, 0.70710677
    %v3227 = vmul.f32 %v3211, 0.70710677
    %v3228 = vmul.f32 %v3212, 0.70710677
    %v3229 = vmul.f32 %v3213, 0.70710677
    %v3230 = vmul.f32 %v3214, 0.70710677
    %v3231 = vmul.f32 %v3215, 0.70710677
    %v3232 = vmul.f32 %v3216, 0.70710677
    %v3233 = vmul.f32 %v3217, 0.70710677
    %v3234 = vmul.f32 %v3218, 0.70710677
    %v3235 = vmul.f32 %v3219, 0.70710677
    %v3236 = vmul.f32 %v3220, 0.70710677
    %v3237 = vmul.f32 %v3221, 0.70710677
    %v3238 = vmul.f32 %v3222, 0.70710677
    %v3239 = vmul.f32 %v3223, 0.70710677
    %v3240 = vmul.f32 %v3224, 0.70710677
    %v3241 = vmul.f32 %v3225, 0.25
    %v3242 = vmul.f32 %v3226, 0.25
    %v3243 = vmul.f32 %v3227, 0.25
    %v3244 = vmul.f32 %v3228, 0.25
    %v3245 = vmul.f32 %v3229, 0.25
    %v3246 = vmul.f32 %v3230, 0.25
    %v3247 = vmul.f32 %v3231, 0.25
    %v3248 = vmul.f32 %v3232, 0.25
    %v3249 = vmul.f32 %v3233, 0.25
    %v3250 = vmul.f32 %v3234, 0.25
    %v3251 = vmul.f32 %v3235, 0.25
    %v3252 = vmul.f32 %v3236, 0.25
    %v3253 = vmul.f32 %v3237, 0.25
    %v3254 = vmul.f32 %v3238, 0.25
    %v3255 = vmul.f32 %v3239, 0.25
    %v3256 = vmul.f32 %v3240, 0.25
    %v3257 = vadd.f32 %v1780, %v3241
    %v3258 = vadd.f32 %v1781, %v3242
    %v3259 = vadd.f32 %v1782, %v3243
    %v3260 = vadd.f32 %v1783, %v3244
    %v3261 = vadd.f32 %v1784, %v3245
    %v3262 = vadd.f32 %v1785, %v3246
    %v3263 = vadd.f32 %v1786, %v3247
    %v3264 = vadd.f32 %v1787, %v3248
    %v3265 = vadd.f32 %v1788, %v3249
    %v3266 = vadd.f32 %v1789, %v3250
    %v3267 = vadd.f32 %v1790, %v3251
    %v3268 = vadd.f32 %v1791, %v3252
    %v3269 = vadd.f32 %v1792, %v3253
    %v3270 = vadd.f32 %v1793, %v3254
    %v3271 = vadd.f32 %v1794, %v3255
    %v3272 = vadd.f32 %v1795, %v3256
    %s3273 = scalar_lea.vmem %s3, 32
    %v3274 = vld [vmem:[%s3273] sm:$0xff]
    %v3275 = vld [vmem:[%s3273 + $0x8] sm:$0xff]
    %v3277 = vsel %vm273, %v3225, 0
    %v3280 = vsel %vm273, %v3226, 0
    %v3283 = vsel %vm273, %v3227, 0
    %v3286 = vsel %vm273, %v3228, 0
    %v3289 = vsel %vm273, %v3229, 0
    %v3292 = vsel %vm273, %v3230, 0
    %v3295 = vsel %vm273, %v3231, 0
    %v3298 = vsel %vm273, %v3232, 0
    %v3301 = vsel %vm273, %v3233, 0
    %v3304 = vsel %vm273, %v3234, 0
    %v3307 = vsel %vm273, %v3235, 0
    %v3310 = vsel %vm273, %v3236, 0
    %v3313 = vsel %vm273, %v3237, 0
    %v3316 = vsel %vm273, %v3238, 0
    %v3319 = vsel %vm273, %v3239, 0
    %v3322 = vsel %vm273, %v3240, 0
    %3324 = vmatprep.subr.mxu0 0.0
    %3325 = vmatpush1.msra.mxu0 %v3274
    %3326 = vmatprep.subr.mxu0 0.0
    %3327 = vmatpush1.msra.mxu0 %v3275
    %3328 = vmatprep.subr.mxu0 0.0
    %3329 = vmatpush1.msra.mxu0 0.0
    %3330 = vmatprep.subr.mxu0 0.0
    %3331 = vmatpush1.msra.mxu0 0.0
    %3332 = vmatprep.subr.mxu0 0.0
    %3333 = vmatpush1.msra.mxu0 0.0
    %3334 = vmatprep.subr.mxu0 0.0
    %3335 = vmatpush1.msra.mxu0 0.0
    %3336 = vmatprep.subr.mxu0 0.0
    %3337 = vmatpush1.msra.mxu0 0.0
    %3338 = vmatprep.subr.mxu0 0.0
    %3339 = vmatpush1.msra.mxu0 0.0
    %3340 = vmatprep.subr.mxu0 0.0
    %3341 = vmatpush1.msra.mxu0 0.0
    %3342 = vmatprep.subr.mxu0 0.0
    %3343 = vmatpush1.msra.mxu0 0.0
    %3344 = vmatprep.subr.mxu0 0.0
    %3345 = vmatpush1.msra.mxu0 0.0
    %3346 = vmatprep.subr.mxu0 0.0
    %3347 = vmatpush1.msra.mxu0 0.0
    %3348 = vmatprep.subr.mxu0 0.0
    %3349 = vmatpush1.msra.mxu0 0.0
    %3350 = vmatprep.subr.mxu0 0.0
    %3351 = vmatpush1.msra.mxu0 0.0
    %3352 = vmatprep.subr.mxu0 0.0
    %3353 = vmatpush1.msra.mxu0 0.0
    %3354 = vmatprep.subr.mxu0 0.0
    %3355 = vmatpush1.msra.mxu0 0.0
    %3356 = vmatprep.subr.mxu0 0.0
    %3357 = vmatpush1.msra.mxu0 0.0
    %3358 = vmatprep.subr.mxu0 0.0
    %3359 = vmatpush1.msra.mxu0 0.0
    %3360 = vmatprep.subr.mxu0 0.0
    %3361 = vmatpush1.msra.mxu0 0.0
    %3362 = vmatprep.subr.mxu0 0.0
    %3363 = vmatpush1.msra.mxu0 0.0
    %3364 = vmatprep.subr.mxu0 0.0
    %3365 = vmatpush1.msra.mxu0 0.0
    %3366 = vmatprep.subr.mxu0 0.0
    %3367 = vmatpush1.msra.mxu0 0.0
    %3368 = vmatprep.subr.mxu0 0.0
    %3369 = vmatpush1.msra.mxu0 0.0
    %3370 = vmatprep.subr.mxu0 0.0
    %3371 = vmatpush1.msra.mxu0 0.0
    %3372 = vmatprep.subr.mxu0 0.0
    %3373 = vmatpush1.msra.mxu0 0.0
    %3374 = vmatprep.subr.mxu0 0.0
    %3375 = vmatpush1.msra.mxu0 0.0
    %3376 = vmatprep.subr.mxu0 0.0
    %3377 = vmatpush1.msra.mxu0 0.0
    %3378 = vmatprep.subr.mxu0 0.0
    %3379 = vmatpush1.msra.mxu0 0.0
    %3380 = vmatprep.subr.mxu0 0.0
    %3381 = vmatpush1.msra.mxu0 0.0
    %3382 = vmatprep.subr.mxu0 0.0
    %3383 = vmatpush1.msra.mxu0 0.0
    %3384 = vmatprep.subr.mxu0 0.0
    %3385 = vmatpush1.msra.mxu0 0.0
    %3386 = vmatprep.subr.mxu0 0.0
    %3387 = vmatpush1.msra.mxu0 0.0
    %3388 = vmatprep.mubr.f32.mxu0 0.0
    %3389 = vmatmul.mubr.f32.gmra.mrb[0].mxu0 %v3277
    %v3390 = vpop.f32.mrb[0].mxu0
    %v3391 = vadd.f32 0.0, %v3390
    %v3392 = vpop.f32.mrb[0].mxu0
    %3393 = vmatprep.mubr.f32.mxu0 0.0
    %3394 = vmatmul.mubr.f32.gmra.mrb[0].mxu0 %v3280
    %v3395 = vpop.f32.mrb[0].mxu0
    %v3396 = vadd.f32 0.0, %v3395
    %v3397 = vpop.f32.mrb[0].mxu0
    %3398 = vmatprep.mubr.f32.mxu0 0.0
    %3399 = vmatmul.mubr.f32.gmra.mrb[0].mxu0 %v3283
    %v3400 = vpop.f32.mrb[0].mxu0
    %v3401 = vadd.f32 0.0, %v3400
    %v3402 = vpop.f32.mrb[0].mxu0
    %3403 = vmatprep.mubr.f32.mxu0 0.0
    %3404 = vmatmul.mubr.f32.gmra.mrb[0].mxu0 %v3286
    %v3405 = vpop.f32.mrb[0].mxu0
    %v3406 = vadd.f32 0.0, %v3405
    %v3407 = vpop.f32.mrb[0].mxu0
    %3408 = vmatprep.mubr.f32.mxu0 0.0
    %3409 = vmatmul.mubr.f32.gmra.mrb[0].mxu0 %v3289
    %v3410 = vpop.f32.mrb[0].mxu0
    %v3411 = vadd.f32 0.0, %v3410
    %v3412 = vpop.f32.mrb[0].mxu0
    %3413 = vmatprep.mubr.f32.mxu0 0.0
    %3414 = vmatmul.mubr.f32.gmra.mrb[0].mxu0 %v3292
    %v3415 = vpop.f32.mrb[0].mxu0
    %v3416 = vadd.f32 0.0, %v3415
    %v3417 = vpop.f32.mrb[0].mxu0
    %3418 = vmatprep.mubr.f32.mxu0 0.0
    %3419 = vmatmul.mubr.f32.gmra.mrb[0].mxu0 %v3295
    %v3420 = vpop.f32.mrb[0].mxu0
    %v3421 = vadd.f32 0.0, %v3420
    %v3422 = vpop.f32.mrb[0].mxu0
    %3423 = vmatprep.mubr.f32.mxu0 0.0
    %3424 = vmatmul.mubr.f32.gmra.mrb[0].mxu0 %v3298
    %v3425 = vpop.f32.mrb[0].mxu0
    %v3426 = vadd.f32 0.0, %v3425
    %v3427 = vpop.f32.mrb[0].mxu0
    %3428 = vmatprep.mubr.f32.mxu0 0.0
    %3429 = vmatmul.mubr.f32.gmra.mrb[0].mxu0 %v3301
    %v3430 = vpop.f32.mrb[0].mxu0
    %v3431 = vadd.f32 0.0, %v3430
    %v3432 = vpop.f32.mrb[0].mxu0
    %3433 = vmatprep.mubr.f32.mxu0 0.0
    %3434 = vmatmul.mubr.f32.gmra.mrb[0].mxu0 %v3304
    %v3435 = vpop.f32.mrb[0].mxu0
    %v3436 = vadd.f32 0.0, %v3435
    %v3437 = vpop.f32.mrb[0].mxu0
    %3438 = vmatprep.mubr.f32.mxu0 0.0
    %3439 = vmatmul.mubr.f32.gmra.mrb[0].mxu0 %v3307
    %v3440 = vpop.f32.mrb[0].mxu0
    %v3441 = vadd.f32 0.0, %v3440
    %v3442 = vpop.f32.mrb[0].mxu0
    %3443 = vmatprep.mubr.f32.mxu0 0.0
    %3444 = vmatmul.mubr.f32.gmra.mrb[0].mxu0 %v3310
    %v3445 = vpop.f32.mrb[0].mxu0
    %v3446 = vadd.f32 0.0, %v3445
    %v3447 = vpop.f32.mrb[0].mxu0
    %3448 = vmatprep.mubr.f32.mxu0 0.0
    %3449 = vmatmul.mubr.f32.gmra.mrb[0].mxu0 %v3313
    %v3450 = vpop.f32.mrb[0].mxu0
    %v3451 = vadd.f32 0.0, %v3450
    %v3452 = vpop.f32.mrb[0].mxu0
    %3453 = vmatprep.mubr.f32.mxu0 0.0
    %3454 = vmatmul.mubr.f32.gmra.mrb[0].mxu0 %v3316
    %v3455 = vpop.f32.mrb[0].mxu0
    %v3456 = vadd.f32 0.0, %v3455
    %v3457 = vpop.f32.mrb[0].mxu0
    %3458 = vmatprep.mubr.f32.mxu0 0.0
    %3459 = vmatmul.mubr.f32.gmra.mrb[0].mxu0 %v3319
    %v3460 = vpop.f32.mrb[0].mxu0
    %v3461 = vadd.f32 0.0, %v3460
    %v3462 = vpop.f32.mrb[0].mxu0
    %3463 = vmatprep.mubr.f32.mxu0 0.0
    %3464 = vmatmul.mubr.f32.gmra.mrb[0].mxu0 %v3322
    %v3465 = vpop.f32.mrb[0].mxu0
    %v3466 = vadd.f32 0.0, %v3465
    %v3467 = vpop.f32.mrb[0].mxu0
    %3468 = vdwg.mxu0
    %3469 = vst.msk [vmem:[%s514 + $0x3] sm:$0xff] %vm273, %v3391
    %3470 = vst.msk [vmem:[%s514 + $0x13] sm:$0xff] %vm273, %v3396
    %3471 = vst.msk [vmem:[%s514 + $0x23] sm:$0xff] %vm273, %v3401
    %3472 = vst.msk [vmem:[%s514 + $0x33] sm:$0xff] %vm273, %v3406
    %3473 = vst.msk [vmem:[%s514 + $0x43] sm:$0xff] %vm273, %v3411
    %3474 = vst.msk [vmem:[%s514 + $0x53] sm:$0xff] %vm273, %v3416
    %3475 = vst.msk [vmem:[%s514 + $0x63] sm:$0xff] %vm273, %v3421
    %3476 = vst.msk [vmem:[%s514 + $0x73] sm:$0xff] %vm273, %v3426
    %3477 = vst.msk [vmem:[%s514 + $0xb3] sm:$0xff] %vm273, %v3431
    %3478 = vst.msk [vmem:[%s514 + $0xc3] sm:$0xff] %vm273, %v3436
    %3479 = vst.msk [vmem:[%s514 + $0xd3] sm:$0xff] %vm273, %v3441
    %3480 = vst.msk [vmem:[%s514 + $0xe3] sm:$0xff] %vm273, %v3446
    %3481 = vst.msk [vmem:[%s514 + $0xf3] sm:$0xff] %vm273, %v3451
    %3482 = vst.msk [vmem:[%s514 + $0x103] sm:$0xff] %vm273, %v3456
    %3483 = vst.msk [vmem:[%s514 + $0x113] sm:$0xff] %vm273, %v3461
    %3484 = vst.msk [vmem:[%s514 + $0x123] sm:$0xff] %vm273, %v3466
    %v3485 = vld [vmem:[#allocation2] sm:$0xff]
    %v3486 = vld [vmem:[#allocation2 + $0x10] sm:$0xff]
    %v3487 = vld [vmem:[#allocation2 + $0x20] sm:$0xff]
    %v3488 = vld [vmem:[#allocation2 + $0x30] sm:$0xff]
    %v3489 = vld [vmem:[#allocation2 + $0x40] sm:$0xff]
    %v3490 = vld [vmem:[#allocation2 + $0x50] sm:$0xff]
    %v3491 = vld [vmem:[#allocation2 + $0x60] sm:$0xff]
    %v3492 = vld [vmem:[#allocation2 + $0x70] sm:$0xff]
    %v3493 = vld [vmem:[#allocation2 + $0xb0] sm:$0xff]
    %v3494 = vld [vmem:[#allocation2 + $0xc0] sm:$0xff]
    %v3495 = vld [vmem:[#allocation2 + $0xd0] sm:$0xff]
    %v3496 = vld [vmem:[#allocation2 + $0xe0] sm:$0xff]
    %v3497 = vld [vmem:[#allocation2 + $0xf0] sm:$0xff]
    %v3498 = vld [vmem:[#allocation2 + $0x100] sm:$0xff]
    %v3499 = vld [vmem:[#allocation2 + $0x110] sm:$0xff]
    %v3500 = vld [vmem:[#allocation2 + $0x120] sm:$0xff]
    %3501 = vst.msk [vmem:[#allocation3] sm:$0xff] %vm273, %v3485
    %3502 = vst.msk [vmem:[#allocation3 + $0x8] sm:$0xff] %vm273, %v3486
    %3503 = vst.msk [vmem:[#allocation3 + $0x10] sm:$0xff] %vm273, %v3487
    %3504 = vst.msk [vmem:[#allocation3 + $0x18] sm:$0xff] %vm273, %v3488
    %3505 = vst.msk [vmem:[#allocation3 + $0x20] sm:$0xff] %vm273, %v3489
    %3506 = vst.msk [vmem:[#allocation3 + $0x28] sm:$0xff] %vm273, %v3490
    %3507 = vst.msk [vmem:[#allocation3 + $0x30] sm:$0xff] %vm273, %v3491
    %3508 = vst.msk [vmem:[#allocation3 + $0x38] sm:$0xff] %vm273, %v3492
    %3509 = vst.msk [vmem:[#allocation3 + $0x40] sm:$0xff] %vm273, %v3493
    %3510 = vst.msk [vmem:[#allocation3 + $0x48] sm:$0xff] %vm273, %v3494
    %3511 = vst.msk [vmem:[#allocation3 + $0x50] sm:$0xff] %vm273, %v3495
    %3512 = vst.msk [vmem:[#allocation3 + $0x58] sm:$0xff] %vm273, %v3496
    %3513 = vst.msk [vmem:[#allocation3 + $0x60] sm:$0xff] %vm273, %v3497
    %3514 = vst.msk [vmem:[#allocation3 + $0x68] sm:$0xff] %vm273, %v3498
    %3515 = vst.msk [vmem:[#allocation3 + $0x70] sm:$0xff] %vm273, %v3499
    %3516 = vst.msk [vmem:[#allocation3 + $0x78] sm:$0xff] %vm273, %v3500
    %v3517 = vld [vmem:[#allocation2 + $0x3] sm:$0xff]
    %v3518 = vld [vmem:[#allocation2 + $0x13] sm:$0xff]
    %v3519 = vld [vmem:[#allocation2 + $0x23] sm:$0xff]
    %v3520 = vld [vmem:[#allocation2 + $0x33] sm:$0xff]
    %v3521 = vld [vmem:[#allocation2 + $0x43] sm:$0xff]
    %v3522 = vld [vmem:[#allocation2 + $0x53] sm:$0xff]
    %v3523 = vld [vmem:[#allocation2 + $0x63] sm:$0xff]
    %v3524 = vld [vmem:[#allocation2 + $0x73] sm:$0xff]
    %v3525 = vld [vmem:[#allocation2 + $0xb3] sm:$0xff]
    %v3526 = vld [vmem:[#allocation2 + $0xc3] sm:$0xff]
    %v3527 = vld [vmem:[#allocation2 + $0xd3] sm:$0xff]
    %v3528 = vld [vmem:[#allocation2 + $0xe3] sm:$0xff]
    %v3529 = vld [vmem:[#allocation2 + $0xf3] sm:$0xff]
    %v3530 = vld [vmem:[#allocation2 + $0x103] sm:$0xff]
    %v3531 = vld [vmem:[#allocation2 + $0x113] sm:$0xff]
    %v3532 = vld [vmem:[#allocation2 + $0x123] sm:$0xff]
    %3549 = vrot.lane.b32.xlu0 %v3517, 16
    %v3550 = vpop.permute.xlu0 %3549
    %3551 = vrot.lane.b32.xlu0 %v3518, 16
    %v3552 = vpop.permute.xlu0 %3551
    %3553 = vrot.lane.b32.xlu0 %v3519, 16
    %v3554 = vpop.permute.xlu0 %3553
    %3555 = vrot.lane.b32.xlu0 %v3520, 16
    %v3556 = vpop.permute.xlu0 %3555
    %3557 = vrot.lane.b32.xlu0 %v3521, 16
    %v3558 = vpop.permute.xlu0 %3557
    %3559 = vrot.lane.b32.xlu0 %v3522, 16
    %v3560 = vpop.permute.xlu0 %3559
    %3561 = vrot.lane.b32.xlu0 %v3523, 16
    %v3562 = vpop.permute.xlu0 %3561
    %3563 = vrot.lane.b32.xlu0 %v3524, 16
    %v3564 = vpop.permute.xlu0 %3563
    %3565 = vrot.lane.b32.xlu0 %v3525, 16
    %v3566 = vpop.permute.xlu0 %3565
    %3567 = vrot.lane.b32.xlu0 %v3526, 16
    %v3568 = vpop.permute.xlu0 %3567
    %3569 = vrot.lane.b32.xlu0 %v3527, 16
    %v3570 = vpop.permute.xlu0 %3569
    %3571 = vrot.lane.b32.xlu0 %v3528, 16
    %v3572 = vpop.permute.xlu0 %3571
    %3573 = vrot.lane.b32.xlu0 %v3529, 16
    %v3574 = vpop.permute.xlu0 %3573
    %3575 = vrot.lane.b32.xlu0 %v3530, 16
    %v3576 = vpop.permute.xlu0 %3575
    %3577 = vrot.lane.b32.xlu0 %v3531, 16
    %v3578 = vpop.permute.xlu0 %3577
    %3579 = vrot.lane.b32.xlu0 %v3532, 16
    %v3580 = vpop.permute.xlu0 %3579
    %3597 = vst.msk [vmem:[#allocation3] sm:$0xff] %vm644, %v3550
    %3598 = vst.msk [vmem:[#allocation3 + $0x8] sm:$0xff] %vm644, %v3552
    %3599 = vst.msk [vmem:[#allocation3 + $0x10] sm:$0xff] %vm644, %v3554
    %3600 = vst.msk [vmem:[#allocation3 + $0x18] sm:$0xff] %vm644, %v3556
    %3601 = vst.msk [vmem:[#allocation3 + $0x20] sm:$0xff] %vm644, %v3558
    %3602 = vst.msk [vmem:[#allocation3 + $0x28] sm:$0xff] %vm644, %v3560
    %3603 = vst.msk [vmem:[#allocation3 + $0x30] sm:$0xff] %vm644, %v3562
    %3604 = vst.msk [vmem:[#allocation3 + $0x38] sm:$0xff] %vm644, %v3564
    %3605 = vst.msk [vmem:[#allocation3 + $0x40] sm:$0xff] %vm644, %v3566
    %3606 = vst.msk [vmem:[#allocation3 + $0x48] sm:$0xff] %vm644, %v3568
    %3607 = vst.msk [vmem:[#allocation3 + $0x50] sm:$0xff] %vm644, %v3570
    %3608 = vst.msk [vmem:[#allocation3 + $0x58] sm:$0xff] %vm644, %v3572
    %3609 = vst.msk [vmem:[#allocation3 + $0x60] sm:$0xff] %vm644, %v3574
    %3610 = vst.msk [vmem:[#allocation3 + $0x68] sm:$0xff] %vm644, %v3576
    %3611 = vst.msk [vmem:[#allocation3 + $0x70] sm:$0xff] %vm644, %v3578
    %3612 = vst.msk [vmem:[#allocation3 + $0x78] sm:$0xff] %vm644, %v3580
    %v3613 = vld [vmem:[#allocation2 + $0x6] sm:$0xff]
    %v3614 = vld [vmem:[#allocation2 + $0x16] sm:$0xff]
    %v3615 = vld [vmem:[#allocation2 + $0x26] sm:$0xff]
    %v3616 = vld [vmem:[#allocation2 + $0x36] sm:$0xff]
    %v3617 = vld [vmem:[#allocation2 + $0x46] sm:$0xff]
    %v3618 = vld [vmem:[#allocation2 + $0x56] sm:$0xff]
    %v3619 = vld [vmem:[#allocation2 + $0x66] sm:$0xff]
    %v3620 = vld [vmem:[#allocation2 + $0x76] sm:$0xff]
    %v3621 = vld [vmem:[#allocation2 + $0xb6] sm:$0xff]
    %v3622 = vld [vmem:[#allocation2 + $0xc6] sm:$0xff]
    %v3623 = vld [vmem:[#allocation2 + $0xd6] sm:$0xff]
    %v3624 = vld [vmem:[#allocation2 + $0xe6] sm:$0xff]
    %v3625 = vld [vmem:[#allocation2 + $0xf6] sm:$0xff]
    %v3626 = vld [vmem:[#allocation2 + $0x106] sm:$0xff]
    %v3627 = vld [vmem:[#allocation2 + $0x116] sm:$0xff]
    %v3628 = vld [vmem:[#allocation2 + $0x126] sm:$0xff]
    %3645 = vrot.lane.b32.xlu0 %v3613, 32
    %v3646 = vpop.permute.xlu0 %3645
    %3647 = vrot.lane.b32.xlu0 %v3614, 32
    %v3648 = vpop.permute.xlu0 %3647
    %3649 = vrot.lane.b32.xlu0 %v3615, 32
    %v3650 = vpop.permute.xlu0 %3649
    %3651 = vrot.lane.b32.xlu0 %v3616, 32
    %v3652 = vpop.permute.xlu0 %3651
    %3653 = vrot.lane.b32.xlu0 %v3617, 32
    %v3654 = vpop.permute.xlu0 %3653
    %3655 = vrot.lane.b32.xlu0 %v3618, 32
    %v3656 = vpop.permute.xlu0 %3655
    %3657 = vrot.lane.b32.xlu0 %v3619, 32
    %v3658 = vpop.permute.xlu0 %3657
    %3659 = vrot.lane.b32.xlu0 %v3620, 32
    %v3660 = vpop.permute.xlu0 %3659
    %3661 = vrot.lane.b32.xlu0 %v3621, 32
    %v3662 = vpop.permute.xlu0 %3661
    %3663 = vrot.lane.b32.xlu0 %v3622, 32
    %v3664 = vpop.permute.xlu0 %3663
    %3665 = vrot.lane.b32.xlu0 %v3623, 32
    %v3666 = vpop.permute.xlu0 %3665
    %3667 = vrot.lane.b32.xlu0 %v3624, 32
    %v3668 = vpop.permute.xlu0 %3667
    %3669 = vrot.lane.b32.xlu0 %v3625, 32
    %v3670 = vpop.permute.xlu0 %3669
    %3671 = vrot.lane.b32.xlu0 %v3626, 32
    %v3672 = vpop.permute.xlu0 %3671
    %3673 = vrot.lane.b32.xlu0 %v3627, 32
    %v3674 = vpop.permute.xlu0 %3673
    %3675 = vrot.lane.b32.xlu0 %v3628, 32
    %v3676 = vpop.permute.xlu0 %3675
    %3693 = vst.msk [vmem:[#allocation3] sm:$0xff] %vm741, %v3646
    %3694 = vst.msk [vmem:[#allocation3 + $0x8] sm:$0xff] %vm741, %v3648
    %3695 = vst.msk [vmem:[#allocation3 + $0x10] sm:$0xff] %vm741, %v3650
    %3696 = vst.msk [vmem:[#allocation3 + $0x18] sm:$0xff] %vm741, %v3652
    %3697 = vst.msk [vmem:[#allocation3 + $0x20] sm:$0xff] %vm741, %v3654
    %3698 = vst.msk [vmem:[#allocation3 + $0x28] sm:$0xff] %vm741, %v3656
    %3699 = vst.msk [vmem:[#allocation3 + $0x30] sm:$0xff] %vm741, %v3658
    %3700 = vst.msk [vmem:[#allocation3 + $0x38] sm:$0xff] %vm741, %v3660
    %3701 = vst.msk [vmem:[#allocation3 + $0x40] sm:$0xff] %vm741, %v3662
    %3702 = vst.msk [vmem:[#allocation3 + $0x48] sm:$0xff] %vm741, %v3664
    %3703 = vst.msk [vmem:[#allocation3 + $0x50] sm:$0xff] %vm741, %v3666
    %3704 = vst.msk [vmem:[#allocation3 + $0x58] sm:$0xff] %vm741, %v3668
    %3705 = vst.msk [vmem:[#allocation3 + $0x60] sm:$0xff] %vm741, %v3670
    %3706 = vst.msk [vmem:[#allocation3 + $0x68] sm:$0xff] %vm741, %v3672
    %3707 = vst.msk [vmem:[#allocation3 + $0x70] sm:$0xff] %vm741, %v3674
    %3708 = vst.msk [vmem:[#allocation3 + $0x78] sm:$0xff] %vm741, %v3676
    %v3709 = vld [vmem:[%s514] sm:$0xff]
    %v3710 = vld [vmem:[%s514 + $0x10] sm:$0xff]
    %v3711 = vld [vmem:[%s514 + $0x20] sm:$0xff]
    %v3712 = vld [vmem:[%s514 + $0x30] sm:$0xff]
    %v3713 = vld [vmem:[%s514 + $0x40] sm:$0xff]
    %v3714 = vld [vmem:[%s514 + $0x50] sm:$0xff]
    %v3715 = vld [vmem:[%s514 + $0x60] sm:$0xff]
    %v3716 = vld [vmem:[%s514 + $0x70] sm:$0xff]
    %v3717 = vld [vmem:[%s514 + $0xb0] sm:$0xff]
    %v3718 = vld [vmem:[%s514 + $0xc0] sm:$0xff]
    %v3719 = vld [vmem:[%s514 + $0xd0] sm:$0xff]
    %v3720 = vld [vmem:[%s514 + $0xe0] sm:$0xff]
    %v3721 = vld [vmem:[%s514 + $0xf0] sm:$0xff]
    %v3722 = vld [vmem:[%s514 + $0x100] sm:$0xff]
    %v3723 = vld [vmem:[%s514 + $0x110] sm:$0xff]
    %v3724 = vld [vmem:[%s514 + $0x120] sm:$0xff]
    %3741 = vrot.lane.b32.xlu0 %v3709, 48
    %v3742 = vpop.permute.xlu0 %3741
    %3743 = vrot.lane.b32.xlu0 %v3710, 48
    %v3744 = vpop.permute.xlu0 %3743
    %3745 = vrot.lane.b32.xlu0 %v3711, 48
    %v3746 = vpop.permute.xlu0 %3745
    %3747 = vrot.lane.b32.xlu0 %v3712, 48
    %v3748 = vpop.permute.xlu0 %3747
    %3749 = vrot.lane.b32.xlu0 %v3713, 48
    %v3750 = vpop.permute.xlu0 %3749
    %3751 = vrot.lane.b32.xlu0 %v3714, 48
    %v3752 = vpop.permute.xlu0 %3751
    %3753 = vrot.lane.b32.xlu0 %v3715, 48
    %v3754 = vpop.permute.xlu0 %3753
    %3755 = vrot.lane.b32.xlu0 %v3716, 48
    %v3756 = vpop.permute.xlu0 %3755
    %3757 = vrot.lane.b32.xlu0 %v3717, 48
    %v3758 = vpop.permute.xlu0 %3757
    %3759 = vrot.lane.b32.xlu0 %v3718, 48
    %v3760 = vpop.permute.xlu0 %3759
    %3761 = vrot.lane.b32.xlu0 %v3719, 48
    %v3762 = vpop.permute.xlu0 %3761
    %3763 = vrot.lane.b32.xlu0 %v3720, 48
    %v3764 = vpop.permute.xlu0 %3763
    %3765 = vrot.lane.b32.xlu0 %v3721, 48
    %v3766 = vpop.permute.xlu0 %3765
    %3767 = vrot.lane.b32.xlu0 %v3722, 48
    %v3768 = vpop.permute.xlu0 %3767
    %3769 = vrot.lane.b32.xlu0 %v3723, 48
    %v3770 = vpop.permute.xlu0 %3769
    %3771 = vrot.lane.b32.xlu0 %v3724, 48
    %v3772 = vpop.permute.xlu0 %3771
    %3789 = vst.msk [vmem:[#allocation3] sm:$0xff] %vm838, %v3742
    %3790 = vst.msk [vmem:[#allocation3 + $0x8] sm:$0xff] %vm838, %v3744
    %3791 = vst.msk [vmem:[#allocation3 + $0x10] sm:$0xff] %vm838, %v3746
    %3792 = vst.msk [vmem:[#allocation3 + $0x18] sm:$0xff] %vm838, %v3748
    %3793 = vst.msk [vmem:[#allocation3 + $0x20] sm:$0xff] %vm838, %v3750
    %3794 = vst.msk [vmem:[#allocation3 + $0x28] sm:$0xff] %vm838, %v3752
    %3795 = vst.msk [vmem:[#allocation3 + $0x30] sm:$0xff] %vm838, %v3754
    %3796 = vst.msk [vmem:[#allocation3 + $0x38] sm:$0xff] %vm838, %v3756
    %3797 = vst.msk [vmem:[#allocation3 + $0x40] sm:$0xff] %vm838, %v3758
    %3798 = vst.msk [vmem:[#allocation3 + $0x48] sm:$0xff] %vm838, %v3760
    %3799 = vst.msk [vmem:[#allocation3 + $0x50] sm:$0xff] %vm838, %v3762
    %3800 = vst.msk [vmem:[#allocation3 + $0x58] sm:$0xff] %vm838, %v3764
    %3801 = vst.msk [vmem:[#allocation3 + $0x60] sm:$0xff] %vm838, %v3766
    %3802 = vst.msk [vmem:[#allocation3 + $0x68] sm:$0xff] %vm838, %v3768
    %3803 = vst.msk [vmem:[#allocation3 + $0x70] sm:$0xff] %vm838, %v3770
    %3804 = vst.msk [vmem:[#allocation3 + $0x78] sm:$0xff] %vm838, %v3772
    %v3805 = vld [vmem:[%s514 + $0x3] sm:$0xff]
    %v3806 = vld [vmem:[%s514 + $0x13] sm:$0xff]
    %v3807 = vld [vmem:[%s514 + $0x23] sm:$0xff]
    %v3808 = vld [vmem:[%s514 + $0x33] sm:$0xff]
    %v3809 = vld [vmem:[%s514 + $0x43] sm:$0xff]
    %v3810 = vld [vmem:[%s514 + $0x53] sm:$0xff]
    %v3811 = vld [vmem:[%s514 + $0x63] sm:$0xff]
    %v3812 = vld [vmem:[%s514 + $0x73] sm:$0xff]
    %v3813 = vld [vmem:[%s514 + $0xb3] sm:$0xff]
    %v3814 = vld [vmem:[%s514 + $0xc3] sm:$0xff]
    %v3815 = vld [vmem:[%s514 + $0xd3] sm:$0xff]
    %v3816 = vld [vmem:[%s514 + $0xe3] sm:$0xff]
    %v3817 = vld [vmem:[%s514 + $0xf3] sm:$0xff]
    %v3818 = vld [vmem:[%s514 + $0x103] sm:$0xff]
    %v3819 = vld [vmem:[%s514 + $0x113] sm:$0xff]
    %v3820 = vld [vmem:[%s514 + $0x123] sm:$0xff]
    %3837 = vrot.lane.b32.xlu0 %v3805, 64
    %v3838 = vpop.permute.xlu0 %3837
    %3839 = vrot.lane.b32.xlu0 %v3806, 64
    %v3840 = vpop.permute.xlu0 %3839
    %3841 = vrot.lane.b32.xlu0 %v3807, 64
    %v3842 = vpop.permute.xlu0 %3841
    %3843 = vrot.lane.b32.xlu0 %v3808, 64
    %v3844 = vpop.permute.xlu0 %3843
    %3845 = vrot.lane.b32.xlu0 %v3809, 64
    %v3846 = vpop.permute.xlu0 %3845
    %3847 = vrot.lane.b32.xlu0 %v3810, 64
    %v3848 = vpop.permute.xlu0 %3847
    %3849 = vrot.lane.b32.xlu0 %v3811, 64
    %v3850 = vpop.permute.xlu0 %3849
    %3851 = vrot.lane.b32.xlu0 %v3812, 64
    %v3852 = vpop.permute.xlu0 %3851
    %3853 = vrot.lane.b32.xlu0 %v3813, 64
    %v3854 = vpop.permute.xlu0 %3853
    %3855 = vrot.lane.b32.xlu0 %v3814, 64
    %v3856 = vpop.permute.xlu0 %3855
    %3857 = vrot.lane.b32.xlu0 %v3815, 64
    %v3858 = vpop.permute.xlu0 %3857
    %3859 = vrot.lane.b32.xlu0 %v3816, 64
    %v3860 = vpop.permute.xlu0 %3859
    %3861 = vrot.lane.b32.xlu0 %v3817, 64
    %v3862 = vpop.permute.xlu0 %3861
    %3863 = vrot.lane.b32.xlu0 %v3818, 64
    %v3864 = vpop.permute.xlu0 %3863
    %3865 = vrot.lane.b32.xlu0 %v3819, 64
    %v3866 = vpop.permute.xlu0 %3865
    %3867 = vrot.lane.b32.xlu0 %v3820, 64
    %v3868 = vpop.permute.xlu0 %3867
    %3885 = vst.msk [vmem:[#allocation3] sm:$0xff] %vm935, %v3838
    %3886 = vst.msk [vmem:[#allocation3 + $0x8] sm:$0xff] %vm935, %v3840
    %3887 = vst.msk [vmem:[#allocation3 + $0x10] sm:$0xff] %vm935, %v3842
    %3888 = vst.msk [vmem:[#allocation3 + $0x18] sm:$0xff] %vm935, %v3844
    %3889 = vst.msk [vmem:[#allocation3 + $0x20] sm:$0xff] %vm935, %v3846
    %3890 = vst.msk [vmem:[#allocation3 + $0x28] sm:$0xff] %vm935, %v3848
    %3891 = vst.msk [vmem:[#allocation3 + $0x30] sm:$0xff] %vm935, %v3850
    %3892 = vst.msk [vmem:[#allocation3 + $0x38] sm:$0xff] %vm935, %v3852
    %3893 = vst.msk [vmem:[#allocation3 + $0x40] sm:$0xff] %vm935, %v3854
    %3894 = vst.msk [vmem:[#allocation3 + $0x48] sm:$0xff] %vm935, %v3856
    %3895 = vst.msk [vmem:[#allocation3 + $0x50] sm:$0xff] %vm935, %v3858
    %3896 = vst.msk [vmem:[#allocation3 + $0x58] sm:$0xff] %vm935, %v3860
    %3897 = vst.msk [vmem:[#allocation3 + $0x60] sm:$0xff] %vm935, %v3862
    %3898 = vst.msk [vmem:[#allocation3 + $0x68] sm:$0xff] %vm935, %v3864
    %3899 = vst.msk [vmem:[#allocation3 + $0x70] sm:$0xff] %vm935, %v3866
    %3900 = vst.msk [vmem:[#allocation3 + $0x78] sm:$0xff] %vm935, %v3868
    %v3901 = vld [vmem:[%s514 + $0x6] sm:$0xff]
    %v3902 = vld [vmem:[%s514 + $0x16] sm:$0xff]
    %v3903 = vld [vmem:[%s514 + $0x26] sm:$0xff]
    %v3904 = vld [vmem:[%s514 + $0x36] sm:$0xff]
    %v3905 = vld [vmem:[%s514 + $0x46] sm:$0xff]
    %v3906 = vld [vmem:[%s514 + $0x56] sm:$0xff]
    %v3907 = vld [vmem:[%s514 + $0x66] sm:$0xff]
    %v3908 = vld [vmem:[%s514 + $0x76] sm:$0xff]
    %v3909 = vld [vmem:[%s514 + $0xb6] sm:$0xff]
    %v3910 = vld [vmem:[%s514 + $0xc6] sm:$0xff]
    %v3911 = vld [vmem:[%s514 + $0xd6] sm:$0xff]
    %v3912 = vld [vmem:[%s514 + $0xe6] sm:$0xff]
    %v3913 = vld [vmem:[%s514 + $0xf6] sm:$0xff]
    %v3914 = vld [vmem:[%s514 + $0x106] sm:$0xff]
    %v3915 = vld [vmem:[%s514 + $0x116] sm:$0xff]
    %v3916 = vld [vmem:[%s514 + $0x126] sm:$0xff]
    %3933 = vrot.lane.b32.xlu0 %v3901, 80
    %v3934 = vpop.permute.xlu0 %3933
    %3935 = vrot.lane.b32.xlu0 %v3902, 80
    %v3936 = vpop.permute.xlu0 %3935
    %3937 = vrot.lane.b32.xlu0 %v3903, 80
    %v3938 = vpop.permute.xlu0 %3937
    %3939 = vrot.lane.b32.xlu0 %v3904, 80
    %v3940 = vpop.permute.xlu0 %3939
    %3941 = vrot.lane.b32.xlu0 %v3905, 80
    %v3942 = vpop.permute.xlu0 %3941
    %3943 = vrot.lane.b32.xlu0 %v3906, 80
    %v3944 = vpop.permute.xlu0 %3943
    %3945 = vrot.lane.b32.xlu0 %v3907, 80
    %v3946 = vpop.permute.xlu0 %3945
    %3947 = vrot.lane.b32.xlu0 %v3908, 80
    %v3948 = vpop.permute.xlu0 %3947
    %3949 = vrot.lane.b32.xlu0 %v3909, 80
    %v3950 = vpop.permute.xlu0 %3949
    %3951 = vrot.lane.b32.xlu0 %v3910, 80
    %v3952 = vpop.permute.xlu0 %3951
    %3953 = vrot.lane.b32.xlu0 %v3911, 80
    %v3954 = vpop.permute.xlu0 %3953
    %3955 = vrot.lane.b32.xlu0 %v3912, 80
    %v3956 = vpop.permute.xlu0 %3955
    %3957 = vrot.lane.b32.xlu0 %v3913, 80
    %v3958 = vpop.permute.xlu0 %3957
    %3959 = vrot.lane.b32.xlu0 %v3914, 80
    %v3960 = vpop.permute.xlu0 %3959
    %3961 = vrot.lane.b32.xlu0 %v3915, 80
    %v3962 = vpop.permute.xlu0 %3961
    %3963 = vrot.lane.b32.xlu0 %v3916, 80
    %v3964 = vpop.permute.xlu0 %3963
    %3981 = vst.msk [vmem:[#allocation3] sm:$0xff] %vm1032, %v3934
    %3982 = vst.msk [vmem:[#allocation3 + $0x8] sm:$0xff] %vm1032, %v3936
    %3983 = vst.msk [vmem:[#allocation3 + $0x10] sm:$0xff] %vm1032, %v3938
    %3984 = vst.msk [vmem:[#allocation3 + $0x18] sm:$0xff] %vm1032, %v3940
    %3985 = vst.msk [vmem:[#allocation3 + $0x20] sm:$0xff] %vm1032, %v3942
    %3986 = vst.msk [vmem:[#allocation3 + $0x28] sm:$0xff] %vm1032, %v3944
    %3987 = vst.msk [vmem:[#allocation3 + $0x30] sm:$0xff] %vm1032, %v3946
    %3988 = vst.msk [vmem:[#allocation3 + $0x38] sm:$0xff] %vm1032, %v3948
    %3989 = vst.msk [vmem:[#allocation3 + $0x40] sm:$0xff] %vm1032, %v3950
    %3990 = vst.msk [vmem:[#allocation3 + $0x48] sm:$0xff] %vm1032, %v3952
    %3991 = vst.msk [vmem:[#allocation3 + $0x50] sm:$0xff] %vm1032, %v3954
    %3992 = vst.msk [vmem:[#allocation3 + $0x58] sm:$0xff] %vm1032, %v3956
    %3993 = vst.msk [vmem:[#allocation3 + $0x60] sm:$0xff] %vm1032, %v3958
    %3994 = vst.msk [vmem:[#allocation3 + $0x68] sm:$0xff] %vm1032, %v3960
    %3995 = vst.msk [vmem:[#allocation3 + $0x70] sm:$0xff] %vm1032, %v3962
    %3996 = vst.msk [vmem:[#allocation3 + $0x78] sm:$0xff] %vm1032, %v3964
    %v3997 = vld [vmem:[#allocation3] sm:$0xff]
    %v3998 = vld [vmem:[#allocation3 + $0x8] sm:$0xff]
    %v3999 = vld [vmem:[#allocation3 + $0x10] sm:$0xff]
    %v4000 = vld [vmem:[#allocation3 + $0x18] sm:$0xff]
    %v4001 = vld [vmem:[#allocation3 + $0x20] sm:$0xff]
    %v4002 = vld [vmem:[#allocation3 + $0x28] sm:$0xff]
    %v4003 = vld [vmem:[#allocation3 + $0x30] sm:$0xff]
    %v4004 = vld [vmem:[#allocation3 + $0x38] sm:$0xff]
    %v4005 = vld [vmem:[#allocation3 + $0x40] sm:$0xff]
    %v4006 = vld [vmem:[#allocation3 + $0x48] sm:$0xff]
    %v4007 = vld [vmem:[#allocation3 + $0x50] sm:$0xff]
    %v4008 = vld [vmem:[#allocation3 + $0x58] sm:$0xff]
    %v4009 = vld [vmem:[#allocation3 + $0x60] sm:$0xff]
    %v4010 = vld [vmem:[#allocation3 + $0x68] sm:$0xff]
    %v4011 = vld [vmem:[#allocation3 + $0x70] sm:$0xff]
    %v4012 = vld [vmem:[#allocation3 + $0x78] sm:$0xff]
    %s4013 = scalar_lea.vmem %s4, 192
    %v4014 = vld [vmem:[%s4013] sm:$0xff]
    %v4015 = vld [vmem:[%s4013 + $0x8] sm:$0xff]
    %v4016 = vld [vmem:[%s4013 + $0x10] sm:$0xff]
    %v4017 = vld [vmem:[%s4013 + $0x18] sm:$0xff]
    %v4018 = vld [vmem:[%s4013 + $0x20] sm:$0xff]
    %v4019 = vld [vmem:[%s4013 + $0x28] sm:$0xff]
    %v4020 = vld [vmem:[%s4013 + $0x30] sm:$0xff]
    %v4021 = vld [vmem:[%s4013 + $0x38] sm:$0xff]
    %v4022 = vld [vmem:[%s4013 + $0x40] sm:$0xff]
    %v4023 = vld [vmem:[%s4013 + $0x48] sm:$0xff]
    %v4024 = vld [vmem:[%s4013 + $0x50] sm:$0xff]
    %v4025 = vld [vmem:[%s4013 + $0x58] sm:$0xff]
    %s4026 = scalar_lea.vmem %s5, 2
    %v4027 = vld [vmem:[%s4026] sm:$0x1]
    %v4029 = vlaneseq
    %v4030 = vshrl.u32 %v4029, 7
    %v4031 = vsub.s32 0, %v4030
    %v4032 = vrot.slane %v4027, %v4031
    %v4035 = vsel %vm1084, %v3997, 0
    %v4038 = vsel %vm1084, %v3998, 0
    %v4041 = vsel %vm1084, %v3999, 0
    %v4044 = vsel %vm1084, %v4000, 0
    %v4047 = vsel %vm1084, %v4001, 0
    %v4050 = vsel %vm1084, %v4002, 0
    %v4053 = vsel %vm1084, %v4003, 0
    %v4056 = vsel %vm1084, %v4004, 0
    %v4059 = vsel %vm1084, %v4005, 0
    %v4062 = vsel %vm1084, %v4006, 0
    %v4065 = vsel %vm1084, %v4007, 0
    %v4068 = vsel %vm1084, %v4008, 0
    %v4071 = vsel %vm1084, %v4009, 0
    %v4074 = vsel %vm1084, %v4010, 0
    %v4077 = vsel %vm1084, %v4011, 0
    %v4080 = vsel %vm1084, %v4012, 0
    %4082 = vmatprep.subr.mxu0 0.0
    %4083 = vmatpush1.msra.mxu0 %v4014
    %4084 = vmatprep.subr.mxu0 0.0
    %4085 = vmatpush1.msra.mxu0 %v4015
    %4086 = vmatprep.subr.mxu0 0.0
    %4087 = vmatpush1.msra.mxu0 %v4016
    %4088 = vmatprep.subr.mxu0 0.0
    %4089 = vmatpush1.msra.mxu0 %v4017
    %4090 = vmatprep.subr.mxu0 0.0
    %4091 = vmatpush1.msra.mxu0 %v4018
    %4092 = vmatprep.subr.mxu0 0.0
    %4093 = vmatpush1.msra.mxu0 %v4019
    %4094 = vmatprep.subr.mxu0 0.0
    %4095 = vmatpush1.msra.mxu0 %v4020
    %4096 = vmatprep.subr.mxu0 0.0
    %4097 = vmatpush1.msra.mxu0 %v4021
    %4098 = vmatprep.subr.mxu0 0.0
    %4099 = vmatpush1.msra.mxu0 %v4022
    %4100 = vmatprep.subr.mxu0 0.0
    %4101 = vmatpush1.msra.mxu0 %v4023
    %4102 = vmatprep.subr.mxu0 0.0
    %4103 = vmatpush1.msra.mxu0 %v4024
    %4104 = vmatprep.subr.mxu0 0.0
    %4105 = vmatpush1.msra.mxu0 %v4025
    %4106 = vmatprep.subr.mxu0 0.0
    %4107 = vmatpush1.msra.mxu0 0.0
    %4108 = vmatprep.subr.mxu0 0.0
    %4109 = vmatpush1.msra.mxu0 0.0
    %4110 = vmatprep.subr.mxu0 0.0
    %4111 = vmatpush1.msra.mxu0 0.0
    %4112 = vmatprep.subr.mxu0 0.0
    %4113 = vmatpush1.msra.mxu0 0.0
    %4114 = vmatprep.subr.mxu0 0.0
    %4115 = vmatpush1.msra.mxu0 0.0
    %4116 = vmatprep.subr.mxu0 0.0
    %4117 = vmatpush1.msra.mxu0 0.0
    %4118 = vmatprep.subr.mxu0 0.0
    %4119 = vmatpush1.msra.mxu0 0.0
    %4120 = vmatprep.subr.mxu0 0.0
    %4121 = vmatpush1.msra.mxu0 0.0
    %4122 = vmatprep.subr.mxu0 0.0
    %4123 = vmatpush1.msra.mxu0 0.0
    %4124 = vmatprep.subr.mxu0 0.0
    %4125 = vmatpush1.msra.mxu0 0.0
    %4126 = vmatprep.subr.mxu0 0.0
    %4127 = vmatpush1.msra.mxu0 0.0
    %4128 = vmatprep.subr.mxu0 0.0
    %4129 = vmatpush1.msra.mxu0 0.0
    %4130 = vmatprep.subr.mxu0 0.0
    %4131 = vmatpush1.msra.mxu0 0.0
    %4132 = vmatprep.subr.mxu0 0.0
    %4133 = vmatpush1.msra.mxu0 0.0
    %4134 = vmatprep.subr.mxu0 0.0
    %4135 = vmatpush1.msra.mxu0 0.0
    %4136 = vmatprep.subr.mxu0 0.0
    %4137 = vmatpush1.msra.mxu0 0.0
    %4138 = vmatprep.subr.mxu0 0.0
    %4139 = vmatpush1.msra.mxu0 0.0
    %4140 = vmatprep.subr.mxu0 0.0
    %4141 = vmatpush1.msra.mxu0 0.0
    %4142 = vmatprep.subr.mxu0 0.0
    %4143 = vmatpush1.msra.mxu0 0.0
    %4144 = vmatprep.subr.mxu0 0.0
    %4145 = vmatpush1.msra.mxu0 0.0
    %4146 = vmatprep.mubr.f32.mxu0 0.0
    %4147 = vmatmul.mubr.f32.gmra.mrb[0].mxu0 %v4035
    %v4148 = vpop.f32.mrb[0].mxu0
    %v4149 = vadd.f32 %v4032, %v4148
    %v4150 = vpop.f32.mrb[0].mxu0
    %4151 = vmatprep.mubr.f32.mxu0 0.0
    %4152 = vmatmul.mubr.f32.gmra.mrb[0].mxu0 %v4038
    %v4153 = vpop.f32.mrb[0].mxu0
    %v4154 = vadd.f32 %v4032, %v4153
    %v4155 = vpop.f32.mrb[0].mxu0
    %4156 = vmatprep.mubr.f32.mxu0 0.0
    %4157 = vmatmul.mubr.f32.gmra.mrb[0].mxu0 %v4041
    %v4158 = vpop.f32.mrb[0].mxu0
    %v4159 = vadd.f32 %v4032, %v4158
    %v4160 = vpop.f32.mrb[0].mxu0
    %4161 = vmatprep.mubr.f32.mxu0 0.0
    %4162 = vmatmul.mubr.f32.gmra.mrb[0].mxu0 %v4044
    %v4163 = vpop.f32.mrb[0].mxu0
    %v4164 = vadd.f32 %v4032, %v4163
    %v4165 = vpop.f32.mrb[0].mxu0
    %4166 = vmatprep.mubr.f32.mxu0 0.0
    %4167 = vmatmul.mubr.f32.gmra.mrb[0].mxu0 %v4047
    %v4168 = vpop.f32.mrb[0].mxu0
    %v4169 = vadd.f32 %v4032, %v4168
    %v4170 = vpop.f32.mrb[0].mxu0
    %4171 = vmatprep.mubr.f32.mxu0 0.0
    %4172 = vmatmul.mubr.f32.gmra.mrb[0].mxu0 %v4050
    %v4173 = vpop.f32.mrb[0].mxu0
    %v4174 = vadd.f32 %v4032, %v4173
    %v4175 = vpop.f32.mrb[0].mxu0
    %4176 = vmatprep.mubr.f32.mxu0 0.0
    %4177 = vmatmul.mubr.f32.gmra.mrb[0].mxu0 %v4053
    %v4178 = vpop.f32.mrb[0].mxu0
    %v4179 = vadd.f32 %v4032, %v4178
    %v4180 = vpop.f32.mrb[0].mxu0
    %4181 = vmatprep.mubr.f32.mxu0 0.0
    %4182 = vmatmul.mubr.f32.gmra.mrb[0].mxu0 %v4056
    %v4183 = vpop.f32.mrb[0].mxu0
    %v4184 = vadd.f32 %v4032, %v4183
    %v4185 = vpop.f32.mrb[0].mxu0
    %4186 = vmatprep.mubr.f32.mxu0 0.0
    %4187 = vmatmul.mubr.f32.gmra.mrb[0].mxu0 %v4059
    %v4188 = vpop.f32.mrb[0].mxu0
    %v4189 = vadd.f32 %v4032, %v4188
    %v4190 = vpop.f32.mrb[0].mxu0
    %4191 = vmatprep.mubr.f32.mxu0 0.0
    %4192 = vmatmul.mubr.f32.gmra.mrb[0].mxu0 %v4062
    %v4193 = vpop.f32.mrb[0].mxu0
    %v4194 = vadd.f32 %v4032, %v4193
    %v4195 = vpop.f32.mrb[0].mxu0
    %4196 = vmatprep.mubr.f32.mxu0 0.0
    %4197 = vmatmul.mubr.f32.gmra.mrb[0].mxu0 %v4065
    %v4198 = vpop.f32.mrb[0].mxu0
    %v4199 = vadd.f32 %v4032, %v4198
    %v4200 = vpop.f32.mrb[0].mxu0
    %4201 = vmatprep.mubr.f32.mxu0 0.0
    %4202 = vmatmul.mubr.f32.gmra.mrb[0].mxu0 %v4068
    %v4203 = vpop.f32.mrb[0].mxu0
    %v4204 = vadd.f32 %v4032, %v4203
    %v4205 = vpop.f32.mrb[0].mxu0
    %4206 = vmatprep.mubr.f32.mxu0 0.0
    %4207 = vmatmul.mubr.f32.gmra.mrb[0].mxu0 %v4071
    %v4208 = vpop.f32.mrb[0].mxu0
    %v4209 = vadd.f32 %v4032, %v4208
    %v4210 = vpop.f32.mrb[0].mxu0
    %4211 = vmatprep.mubr.f32.mxu0 0.0
    %4212 = vmatmul.mubr.f32.gmra.mrb[0].mxu0 %v4074
    %v4213 = vpop.f32.mrb[0].mxu0
    %v4214 = vadd.f32 %v4032, %v4213
    %v4215 = vpop.f32.mrb[0].mxu0
    %4216 = vmatprep.mubr.f32.mxu0 0.0
    %4217 = vmatmul.mubr.f32.gmra.mrb[0].mxu0 %v4077
    %v4218 = vpop.f32.mrb[0].mxu0
    %v4219 = vadd.f32 %v4032, %v4218
    %v4220 = vpop.f32.mrb[0].mxu0
    %4221 = vmatprep.mubr.f32.mxu0 0.0
    %4222 = vmatmul.mubr.f32.gmra.mrb[0].mxu0 %v4080
    %v4223 = vpop.f32.mrb[0].mxu0
    %v4224 = vadd.f32 %v4032, %v4223
    %v4225 = vpop.f32.mrb[0].mxu0
    %4226 = vdwg.mxu0
    %v4227 = vadd.f32 %v4149, %v3225
    %v4228 = vadd.f32 %v4154, %v3226
    %v4229 = vadd.f32 %v4159, %v3227
    %v4230 = vadd.f32 %v4164, %v3228
    %v4231 = vadd.f32 %v4169, %v3229
    %v4232 = vadd.f32 %v4174, %v3230
    %v4233 = vadd.f32 %v4179, %v3231
    %v4234 = vadd.f32 %v4184, %v3232
    %v4235 = vadd.f32 %v4189, %v3233
    %v4236 = vadd.f32 %v4194, %v3234
    %v4237 = vadd.f32 %v4199, %v3235
    %v4238 = vadd.f32 %v4204, %v3236
    %v4239 = vadd.f32 %v4209, %v3237
    %v4240 = vadd.f32 %v4214, %v3238
    %v4241 = vadd.f32 %v4219, %v3239
    %v4242 = vadd.f32 %v4224, %v3240
    %v4243 = vmul.f32 %v4227, 0.70710677
    %v4244 = vmul.f32 %v4228, 0.70710677
    %v4245 = vmul.f32 %v4229, 0.70710677
    %v4246 = vmul.f32 %v4230, 0.70710677
    %v4247 = vmul.f32 %v4231, 0.70710677
    %v4248 = vmul.f32 %v4232, 0.70710677
    %v4249 = vmul.f32 %v4233, 0.70710677
    %v4250 = vmul.f32 %v4234, 0.70710677
    %v4251 = vmul.f32 %v4235, 0.70710677
    %v4252 = vmul.f32 %v4236, 0.70710677
    %v4253 = vmul.f32 %v4237, 0.70710677
    %v4254 = vmul.f32 %v4238, 0.70710677
    %v4255 = vmul.f32 %v4239, 0.70710677
    %v4256 = vmul.f32 %v4240, 0.70710677
    %v4257 = vmul.f32 %v4241, 0.70710677
    %v4258 = vmul.f32 %v4242, 0.70710677
    %s4259 = scalar_lea.vmem %s6, 32
    %v4260 = vld [vmem:[%s4259] sm:$0xff]
    %v4261 = vld [vmem:[%s4259 + $0x8] sm:$0xff]
    %s4262 = scalar_lea.vmem %s7, 2
    %v4263 = vld [vmem:[%s4262] sm:$0x1]
    %v4265 = vlaneseq
    %v4266 = vshrl.u32 %v4265, 7
    %v4267 = vsub.s32 0, %v4266
    %v4268 = vrot.slane %v4263, %v4267
    %v4271 = vsel %vm273, %v4243, 0
    %v4274 = vsel %vm273, %v4244, 0
    %v4277 = vsel %vm273, %v4245, 0
    %v4280 = vsel %vm273, %v4246, 0
    %v4283 = vsel %vm273, %v4247, 0
    %v4286 = vsel %vm273, %v4248, 0
    %v4289 = vsel %vm273, %v4249, 0
    %v4292 = vsel %vm273, %v4250, 0
    %v4295 = vsel %vm273, %v4251, 0
    %v4298 = vsel %vm273, %v4252, 0
    %v4301 = vsel %vm273, %v4253, 0
    %v4304 = vsel %vm273, %v4254, 0
    %v4307 = vsel %vm273, %v4255, 0
    %v4310 = vsel %vm273, %v4256, 0
    %v4313 = vsel %vm273, %v4257, 0
    %v4316 = vsel %vm273, %v4258, 0
    %4318 = vmatprep.subr.mxu0 0.0
    %4319 = vmatpush1.msra.mxu0 %v4260
    %4320 = vmatprep.subr.mxu0 0.0
    %4321 = vmatpush1.msra.mxu0 %v4261
    %4322 = vmatprep.subr.mxu0 0.0
    %4323 = vmatpush1.msra.mxu0 0.0
    %4324 = vmatprep.subr.mxu0 0.0
    %4325 = vmatpush1.msra.mxu0 0.0
    %4326 = vmatprep.subr.mxu0 0.0
    %4327 = vmatpush1.msra.mxu0 0.0
    %4328 = vmatprep.subr.mxu0 0.0
    %4329 = vmatpush1.msra.mxu0 0.0
    %4330 = vmatprep.subr.mxu0 0.0
    %4331 = vmatpush1.msra.mxu0 0.0
    %4332 = vmatprep.subr.mxu0 0.0
    %4333 = vmatpush1.msra.mxu0 0.0
    %4334 = vmatprep.subr.mxu0 0.0
    %4335 = vmatpush1.msra.mxu0 0.0
    %4336 = vmatprep.subr.mxu0 0.0
    %4337 = vmatpush1.msra.mxu0 0.0
    %4338 = vmatprep.subr.mxu0 0.0
    %4339 = vmatpush1.msra.mxu0 0.0
    %4340 = vmatprep.subr.mxu0 0.0
    %4341 = vmatpush1.msra.mxu0 0.0
    %4342 = vmatprep.subr.mxu0 0.0
    %4343 = vmatpush1.msra.mxu0 0.0
    %4344 = vmatprep.subr.mxu0 0.0
    %4345 = vmatpush1.msra.mxu0 0.0
    %4346 = vmatprep.subr.mxu0 0.0
    %4347 = vmatpush1.msra.mxu0 0.0
    %4348 = vmatprep.subr.mxu0 0.0
    %4349 = vmatpush1.msra.mxu0 0.0
    %4350 = vmatprep.subr.mxu0 0.0
    %4351 = vmatpush1.msra.mxu0 0.0
    %4352 = vmatprep.subr.mxu0 0.0
    %4353 = vmatpush1.msra.mxu0 0.0
    %4354 = vmatprep.subr.mxu0 0.0
    %4355 = vmatpush1.msra.mxu0 0.0
    %4356 = vmatprep.subr.mxu0 0.0
    %4357 = vmatpush1.msra.mxu0 0.0
    %4358 = vmatprep.subr.mxu0 0.0
    %4359 = vmatpush1.msra.mxu0 0.0
    %4360 = vmatprep.subr.mxu0 0.0
    %4361 = vmatpush1.msra.mxu0 0.0
    %4362 = vmatprep.subr.mxu0 0.0
    %4363 = vmatpush1.msra.mxu0 0.0
    %4364 = vmatprep.subr.mxu0 0.0
    %4365 = vmatpush1.msra.mxu0 0.0
    %4366 = vmatprep.subr.mxu0 0.0
    %4367 = vmatpush1.msra.mxu0 0.0
    %4368 = vmatprep.subr.mxu0 0.0
    %4369 = vmatpush1.msra.mxu0 0.0
    %4370 = vmatprep.subr.mxu0 0.0
    %4371 = vmatpush1.msra.mxu0 0.0
    %4372 = vmatprep.subr.mxu0 0.0
    %4373 = vmatpush1.msra.mxu0 0.0
    %4374 = vmatprep.subr.mxu0 0.0
    %4375 = vmatpush1.msra.mxu0 0.0
    %4376 = vmatprep.subr.mxu0 0.0
    %4377 = vmatpush1.msra.mxu0 0.0
    %4378 = vmatprep.subr.mxu0 0.0
    %4379 = vmatpush1.msra.mxu0 0.0
    %4380 = vmatprep.subr.mxu0 0.0
    %4381 = vmatpush1.msra.mxu0 0.0
    %4382 = vmatprep.mubr.f32.mxu0 0.0
    %4383 = vmatmul.mubr.f32.gmra.mrb[0].mxu0 %v4271
    %v4384 = vpop.f32.mrb[0].mxu0
    %v4385 = vadd.f32 %v4268, %v4384
    %v4386 = vpop.f32.mrb[0].mxu0
    %4387 = vmatprep.mubr.f32.mxu0 0.0
    %4388 = vmatmul.mubr.f32.gmra.mrb[0].mxu0 %v4274
    %v4389 = vpop.f32.mrb[0].mxu0
    %v4390 = vadd.f32 %v4268, %v4389
    %v4391 = vpop.f32.mrb[0].mxu0
    %4392 = vmatprep.mubr.f32.mxu0 0.0
    %4393 = vmatmul.mubr.f32.gmra.mrb[0].mxu0 %v4277
    %v4394 = vpop.f32.mrb[0].mxu0
    %v4395 = vadd.f32 %v4268, %v4394
    %v4396 = vpop.f32.mrb[0].mxu0
    %4397 = vmatprep.mubr.f32.mxu0 0.0
    %4398 = vmatmul.mubr.f32.gmra.mrb[0].mxu0 %v4280
    %v4399 = vpop.f32.mrb[0].mxu0
    %v4400 = vadd.f32 %v4268, %v4399
    %v4401 = vpop.f32.mrb[0].mxu0
    %4402 = vmatprep.mubr.f32.mxu0 0.0
    %4403 = vmatmul.mubr.f32.gmra.mrb[0].mxu0 %v4283
    %v4404 = vpop.f32.mrb[0].mxu0
    %v4405 = vadd.f32 %v4268, %v4404
    %v4406 = vpop.f32.mrb[0].mxu0
    %4407 = vmatprep.mubr.f32.mxu0 0.0
    %4408 = vmatmul.mubr.f32.gmra.mrb[0].mxu0 %v4286
    %v4409 = vpop.f32.mrb[0].mxu0
    %v4410 = vadd.f32 %v4268, %v4409
    %v4411 = vpop.f32.mrb[0].mxu0
    %4412 = vmatprep.mubr.f32.mxu0 0.0
    %4413 = vmatmul.mubr.f32.gmra.mrb[0].mxu0 %v4289
    %v4414 = vpop.f32.mrb[0].mxu0
    %v4415 = vadd.f32 %v4268, %v4414
    %v4416 = vpop.f32.mrb[0].mxu0
    %4417 = vmatprep.mubr.f32.mxu0 0.0
    %4418 = vmatmul.mubr.f32.gmra.mrb[0].mxu0 %v4292
    %v4419 = vpop.f32.mrb[0].mxu0
    %v4420 = vadd.f32 %v4268, %v4419
    %v4421 = vpop.f32.mrb[0].mxu0
    %4422 = vmatprep.mubr.f32.mxu0 0.0
    %4423 = vmatmul.mubr.f32.gmra.mrb[0].mxu0 %v4295
    %v4424 = vpop.f32.mrb[0].mxu0
    %v4425 = vadd.f32 %v4268, %v4424
    %v4426 = vpop.f32.mrb[0].mxu0
    %4427 = vmatprep.mubr.f32.mxu0 0.0
    %4428 = vmatmul.mubr.f32.gmra.mrb[0].mxu0 %v4298
    %v4429 = vpop.f32.mrb[0].mxu0
    %v4430 = vadd.f32 %v4268, %v4429
    %v4431 = vpop.f32.mrb[0].mxu0
    %4432 = vmatprep.mubr.f32.mxu0 0.0
    %4433 = vmatmul.mubr.f32.gmra.mrb[0].mxu0 %v4301
    %v4434 = vpop.f32.mrb[0].mxu0
    %v4435 = vadd.f32 %v4268, %v4434
    %v4436 = vpop.f32.mrb[0].mxu0
    %4437 = vmatprep.mubr.f32.mxu0 0.0
    %4438 = vmatmul.mubr.f32.gmra.mrb[0].mxu0 %v4304
    %v4439 = vpop.f32.mrb[0].mxu0
    %v4440 = vadd.f32 %v4268, %v4439
    %v4441 = vpop.f32.mrb[0].mxu0
    %4442 = vmatprep.mubr.f32.mxu0 0.0
    %4443 = vmatmul.mubr.f32.gmra.mrb[0].mxu0 %v4307
    %v4444 = vpop.f32.mrb[0].mxu0
    %v4445 = vadd.f32 %v4268, %v4444
    %v4446 = vpop.f32.mrb[0].mxu0
    %4447 = vmatprep.mubr.f32.mxu0 0.0
    %4448 = vmatmul.mubr.f32.gmra.mrb[0].mxu0 %v4310
    %v4449 = vpop.f32.mrb[0].mxu0
    %v4450 = vadd.f32 %v4268, %v4449
    %v4451 = vpop.f32.mrb[0].mxu0
    %4452 = vmatprep.mubr.f32.mxu0 0.0
    %4453 = vmatmul.mubr.f32.gmra.mrb[0].mxu0 %v4313
    %v4454 = vpop.f32.mrb[0].mxu0
    %v4455 = vadd.f32 %v4268, %v4454
    %v4456 = vpop.f32.mrb[0].mxu0
    %4457 = vmatprep.mubr.f32.mxu0 0.0
    %4458 = vmatmul.mubr.f32.gmra.mrb[0].mxu0 %v4316
    %v4459 = vpop.f32.mrb[0].mxu0
    %v4460 = vadd.f32 %v4268, %v4459
    %v4461 = vpop.f32.mrb[0].mxu0
    %4462 = vdwg.mxu0
    %v4463 = vmax.f32 %v4385, 0.0
    %v4464 = vmax.f32 %v4390, 0.0
    %v4465 = vmax.f32 %v4395, 0.0
    %v4466 = vmax.f32 %v4400, 0.0
    %v4467 = vmax.f32 %v4405, 0.0
    %v4468 = vmax.f32 %v4410, 0.0
    %v4469 = vmax.f32 %v4415, 0.0
    %v4470 = vmax.f32 %v4420, 0.0
    %v4471 = vmax.f32 %v4425, 0.0
    %v4472 = vmax.f32 %v4430, 0.0
    %v4473 = vmax.f32 %v4435, 0.0
    %v4474 = vmax.f32 %v4440, 0.0
    %v4475 = vmax.f32 %v4445, 0.0
    %v4476 = vmax.f32 %v4450, 0.0
    %v4477 = vmax.f32 %v4455, 0.0
    %v4478 = vmax.f32 %v4460, 0.0
    %s4479 = scalar_lea.vmem %s8, 64
    %v4480 = vld [vmem:[%s4479] sm:$0xff]
    %v4481 = vld [vmem:[%s4479 + $0x8] sm:$0xff]
    %v4482 = vld [vmem:[%s4479 + $0x10] sm:$0xff]
    %v4483 = vld [vmem:[%s4479 + $0x18] sm:$0xff]
    %s4484 = scalar_lea.vmem %s9, 2
    %v4485 = vld [vmem:[%s4484] sm:$0x1]
    %v4487 = vlaneseq
    %v4488 = vshrl.u32 %v4487, 7
    %v4489 = vsub.s32 0, %v4488
    %v4490 = vrot.slane %v4485, %v4489
    %v4493 = vsel %vm63, %v4463, 0
    %v4496 = vsel %vm63, %v4464, 0
    %v4499 = vsel %vm63, %v4465, 0
    %v4502 = vsel %vm63, %v4466, 0
    %v4505 = vsel %vm63, %v4467, 0
    %v4508 = vsel %vm63, %v4468, 0
    %v4511 = vsel %vm63, %v4469, 0
    %v4514 = vsel %vm63, %v4470, 0
    %v4517 = vsel %vm63, %v4471, 0
    %v4520 = vsel %vm63, %v4472, 0
    %v4523 = vsel %vm63, %v4473, 0
    %v4526 = vsel %vm63, %v4474, 0
    %v4529 = vsel %vm63, %v4475, 0
    %v4532 = vsel %vm63, %v4476, 0
    %v4535 = vsel %vm63, %v4477, 0
    %v4538 = vsel %vm63, %v4478, 0
    %4540 = vmatprep.subr.mxu0 0.0
    %4541 = vmatpush1.msra.mxu0 %v4480
    %4542 = vmatprep.subr.mxu0 0.0
    %4543 = vmatpush1.msra.mxu0 %v4481
    %4544 = vmatprep.subr.mxu0 0.0
    %4545 = vmatpush1.msra.mxu0 %v4482
    %4546 = vmatprep.subr.mxu0 0.0
    %4547 = vmatpush1.msra.mxu0 %v4483
    %4548 = vmatprep.subr.mxu0 0.0
    %4549 = vmatpush1.msra.mxu0 0.0
    %4550 = vmatprep.subr.mxu0 0.0
    %4551 = vmatpush1.msra.mxu0 0.0
    %4552 = vmatprep.subr.mxu0 0.0
    %4553 = vmatpush1.msra.mxu0 0.0
    %4554 = vmatprep.subr.mxu0 0.0
    %4555 = vmatpush1.msra.mxu0 0.0
    %4556 = vmatprep.subr.mxu0 0.0
    %4557 = vmatpush1.msra.mxu0 0.0
    %4558 = vmatprep.subr.mxu0 0.0
    %4559 = vmatpush1.msra.mxu0 0.0
    %4560 = vmatprep.subr.mxu0 0.0
    %4561 = vmatpush1.msra.mxu0 0.0
    %4562 = vmatprep.subr.mxu0 0.0
    %4563 = vmatpush1.msra.mxu0 0.0
    %4564 = vmatprep.subr.mxu0 0.0
    %4565 = vmatpush1.msra.mxu0 0.0
    %4566 = vmatprep.subr.mxu0 0.0
    %4567 = vmatpush1.msra.mxu0 0.0
    %4568 = vmatprep.subr.mxu0 0.0
    %4569 = vmatpush1.msra.mxu0 0.0
    %4570 = vmatprep.subr.mxu0 0.0
    %4571 = vmatpush1.msra.mxu0 0.0
    %4572 = vmatprep.subr.mxu0 0.0
    %4573 = vmatpush1.msra.mxu0 0.0
    %4574 = vmatprep.subr.mxu0 0.0
    %4575 = vmatpush1.msra.mxu0 0.0
    %4576 = vmatprep.subr.mxu0 0.0
    %4577 = vmatpush1.msra.mxu0 0.0
    %4578 = vmatprep.subr.mxu0 0.0
    %4579 = vmatpush1.msra.mxu0 0.0
    %4580 = vmatprep.subr.mxu0 0.0
    %4581 = vmatpush1.msra.mxu0 0.0
    %4582 = vmatprep.subr.mxu0 0.0
    %4583 = vmatpush1.msra.mxu0 0.0
    %4584 = vmatprep.subr.mxu0 0.0
    %4585 = vmatpush1.msra.mxu0 0.0
    %4586 = vmatprep.subr.mxu0 0.0
    %4587 = vmatpush1.msra.mxu0 0.0
    %4588 = vmatprep.subr.mxu0 0.0
    %4589 = vmatpush1.msra.mxu0 0.0
    %4590 = vmatprep.subr.mxu0 0.0
    %4591 = vmatpush1.msra.mxu0 0.0
    %4592 = vmatprep.subr.mxu0 0.0
    %4593 = vmatpush1.msra.mxu0 0.0
    %4594 = vmatprep.subr.mxu0 0.0
    %4595 = vmatpush1.msra.mxu0 0.0
    %4596 = vmatprep.subr.mxu0 0.0
    %4597 = vmatpush1.msra.mxu0 0.0
    %4598 = vmatprep.subr.mxu0 0.0
    %4599 = vmatpush1.msra.mxu0 0.0
    %4600 = vmatprep.subr.mxu0 0.0
    %4601 = vmatpush1.msra.mxu0 0.0
    %4602 = vmatprep.subr.mxu0 0.0
    %4603 = vmatpush1.msra.mxu0 0.0
    %4604 = vmatprep.mubr.f32.mxu0 0.0
    %4605 = vmatmul.mubr.f32.gmra.mrb[0].mxu0 %v4493
    %v4606 = vpop.f32.mrb[0].mxu0
    %v4607 = vadd.f32 %v4490, %v4606
    %v4608 = vpop.f32.mrb[0].mxu0
    %4609 = vmatprep.mubr.f32.mxu0 0.0
    %4610 = vmatmul.mubr.f32.gmra.mrb[0].mxu0 %v4496
    %v4611 = vpop.f32.mrb[0].mxu0
    %v4612 = vadd.f32 %v4490, %v4611
    %v4613 = vpop.f32.mrb[0].mxu0
    %4614 = vmatprep.mubr.f32.mxu0 0.0
    %4615 = vmatmul.mubr.f32.gmra.mrb[0].mxu0 %v4499
    %v4616 = vpop.f32.mrb[0].mxu0
    %v4617 = vadd.f32 %v4490, %v4616
    %v4618 = vpop.f32.mrb[0].mxu0
    %4619 = vmatprep.mubr.f32.mxu0 0.0
    %4620 = vmatmul.mubr.f32.gmra.mrb[0].mxu0 %v4502
    %v4621 = vpop.f32.mrb[0].mxu0
    %v4622 = vadd.f32 %v4490, %v4621
    %v4623 = vpop.f32.mrb[0].mxu0
    %4624 = vmatprep.mubr.f32.mxu0 0.0
    %4625 = vmatmul.mubr.f32.gmra.mrb[0].mxu0 %v4505
    %v4626 = vpop.f32.mrb[0].mxu0
    %v4627 = vadd.f32 %v4490, %v4626
    %v4628 = vpop.f32.mrb[0].mxu0
    %4629 = vmatprep.mubr.f32.mxu0 0.0
    %4630 = vmatmul.mubr.f32.gmra.mrb[0].mxu0 %v4508
    %v4631 = vpop.f32.mrb[0].mxu0
    %v4632 = vadd.f32 %v4490, %v4631
    %v4633 = vpop.f32.mrb[0].mxu0
    %4634 = vmatprep.mubr.f32.mxu0 0.0
    %4635 = vmatmul.mubr.f32.gmra.mrb[0].mxu0 %v4511
    %v4636 = vpop.f32.mrb[0].mxu0
    %v4637 = vadd.f32 %v4490, %v4636
    %v4638 = vpop.f32.mrb[0].mxu0
    %4639 = vmatprep.mubr.f32.mxu0 0.0
    %4640 = vmatmul.mubr.f32.gmra.mrb[0].mxu0 %v4514
    %v4641 = vpop.f32.mrb[0].mxu0
    %v4642 = vadd.f32 %v4490, %v4641
    %v4643 = vpop.f32.mrb[0].mxu0
    %4644 = vmatprep.mubr.f32.mxu0 0.0
    %4645 = vmatmul.mubr.f32.gmra.mrb[0].mxu0 %v4517
    %v4646 = vpop.f32.mrb[0].mxu0
    %v4647 = vadd.f32 %v4490, %v4646
    %v4648 = vpop.f32.mrb[0].mxu0
    %4649 = vmatprep.mubr.f32.mxu0 0.0
    %4650 = vmatmul.mubr.f32.gmra.mrb[0].mxu0 %v4520
    %v4651 = vpop.f32.mrb[0].mxu0
    %v4652 = vadd.f32 %v4490, %v4651
    %v4653 = vpop.f32.mrb[0].mxu0
    %4654 = vmatprep.mubr.f32.mxu0 0.0
    %4655 = vmatmul.mubr.f32.gmra.mrb[0].mxu0 %v4523
    %v4656 = vpop.f32.mrb[0].mxu0
    %v4657 = vadd.f32 %v4490, %v4656
    %v4658 = vpop.f32.mrb[0].mxu0
    %4659 = vmatprep.mubr.f32.mxu0 0.0
    %4660 = vmatmul.mubr.f32.gmra.mrb[0].mxu0 %v4526
    %v4661 = vpop.f32.mrb[0].mxu0
    %v4662 = vadd.f32 %v4490, %v4661
    %v4663 = vpop.f32.mrb[0].mxu0
    %4664 = vmatprep.mubr.f32.mxu0 0.0
    %4665 = vmatmul.mubr.f32.gmra.mrb[0].mxu0 %v4529
    %v4666 = vpop.f32.mrb[0].mxu0
    %v4667 = vadd.f32 %v4490, %v4666
    %v4668 = vpop.f32.mrb[0].mxu0
    %4669 = vmatprep.mubr.f32.mxu0 0.0
    %4670 = vmatmul.mubr.f32.gmra.mrb[0].mxu0 %v4532
    %v4671 = vpop.f32.mrb[0].mxu0
    %v4672 = vadd.f32 %v4490, %v4671
    %v4673 = vpop.f32.mrb[0].mxu0
    %4674 = vmatprep.mubr.f32.mxu0 0.0
    %4675 = vmatmul.mubr.f32.gmra.mrb[0].mxu0 %v4535
    %v4676 = vpop.f32.mrb[0].mxu0
    %v4677 = vadd.f32 %v4490, %v4676
    %v4678 = vpop.f32.mrb[0].mxu0
    %4679 = vmatprep.mubr.f32.mxu0 0.0
    %4680 = vmatmul.mubr.f32.gmra.mrb[0].mxu0 %v4538
    %v4681 = vpop.f32.mrb[0].mxu0
    %v4682 = vadd.f32 %v4490, %v4681
    %v4683 = vpop.f32.mrb[0].mxu0
    %4684 = vdwg.mxu0
    %v4685 = vadd.f32 %v4607, %v4243
    %v4686 = vadd.f32 %v4612, %v4244
    %v4687 = vadd.f32 %v4617, %v4245
    %v4688 = vadd.f32 %v4622, %v4246
    %v4689 = vadd.f32 %v4627, %v4247
    %v4690 = vadd.f32 %v4632, %v4248
    %v4691 = vadd.f32 %v4637, %v4249
    %v4692 = vadd.f32 %v4642, %v4250
    %v4693 = vadd.f32 %v4647, %v4251
    %v4694 = vadd.f32 %v4652, %v4252
    %v4695 = vadd.f32 %v4657, %v4253
    %v4696 = vadd.f32 %v4662, %v4254
    %v4697 = vadd.f32 %v4667, %v4255
    %v4698 = vadd.f32 %v4672, %v4256
    %v4699 = vadd.f32 %v4677, %v4257
    %v4700 = vadd.f32 %v4682, %v4258
    %v4701 = vmul.f32 %v4685, 0.70710677
    %v4702 = vmul.f32 %v4686, 0.70710677
    %v4703 = vmul.f32 %v4687, 0.70710677
    %v4704 = vmul.f32 %v4688, 0.70710677
    %v4705 = vmul.f32 %v4689, 0.70710677
    %v4706 = vmul.f32 %v4690, 0.70710677
    %v4707 = vmul.f32 %v4691, 0.70710677
    %v4708 = vmul.f32 %v4692, 0.70710677
    %v4709 = vmul.f32 %v4693, 0.70710677
    %v4710 = vmul.f32 %v4694, 0.70710677
    %v4711 = vmul.f32 %v4695, 0.70710677
    %v4712 = vmul.f32 %v4696, 0.70710677
    %v4713 = vmul.f32 %v4697, 0.70710677
    %v4714 = vmul.f32 %v4698, 0.70710677
    %v4715 = vmul.f32 %v4699, 0.70710677
    %v4716 = vmul.f32 %v4700, 0.70710677
    %v4717 = vmul.f32 %v4701, 0.25
    %v4718 = vmul.f32 %v4702, 0.25
    %v4719 = vmul.f32 %v4703, 0.25
    %v4720 = vmul.f32 %v4704, 0.25
    %v4721 = vmul.f32 %v4705, 0.25
    %v4722 = vmul.f32 %v4706, 0.25
    %v4723 = vmul.f32 %v4707, 0.25
    %v4724 = vmul.f32 %v4708, 0.25
    %v4725 = vmul.f32 %v4709, 0.25
    %v4726 = vmul.f32 %v4710, 0.25
    %v4727 = vmul.f32 %v4711, 0.25
    %v4728 = vmul.f32 %v4712, 0.25
    %v4729 = vmul.f32 %v4713, 0.25
    %v4730 = vmul.f32 %v4714, 0.25
    %v4731 = vmul.f32 %v4715, 0.25
    %v4732 = vmul.f32 %v4716, 0.25
    %v4733 = vadd.f32 %v3257, %v4717
    %v4734 = vadd.f32 %v3258, %v4718
    %v4735 = vadd.f32 %v3259, %v4719
    %v4736 = vadd.f32 %v3260, %v4720
    %v4737 = vadd.f32 %v3261, %v4721
    %v4738 = vadd.f32 %v3262, %v4722
    %v4739 = vadd.f32 %v3263, %v4723
    %v4740 = vadd.f32 %v3264, %v4724
    %v4741 = vadd.f32 %v3265, %v4725
    %v4742 = vadd.f32 %v3266, %v4726
    %v4743 = vadd.f32 %v3267, %v4727
    %v4744 = vadd.f32 %v3268, %v4728
    %v4745 = vadd.f32 %v3269, %v4729
    %v4746 = vadd.f32 %v3270, %v4730
    %v4747 = vadd.f32 %v3271, %v4731
    %v4748 = vadd.f32 %v3272, %v4732
    %4749 = vst.msk [vmem:[#allocation4] sm:$0xff] %vm273, %v4733
    %4750 = vst.msk [vmem:[#allocation4 + $0x8] sm:$0xff] %vm273, %v4734
    %4751 = vst.msk [vmem:[#allocation4 + $0x10] sm:$0xff] %vm273, %v4735
    %4752 = vst.msk [vmem:[#allocation4 + $0x18] sm:$0xff] %vm273, %v4736
    %4753 = vst.msk [vmem:[#allocation4 + $0x20] sm:$0xff] %vm273, %v4737
    %4754 = vst.msk [vmem:[#allocation4 + $0x28] sm:$0xff] %vm273, %v4738
    %4755 = vst.msk [vmem:[#allocation4 + $0x30] sm:$0xff] %vm273, %v4739
    %4756 = vst.msk [vmem:[#allocation4 + $0x38] sm:$0xff] %vm273, %v4740
    %4757 = vst.msk [vmem:[#allocation4 + $0x40] sm:$0xff] %vm273, %v4741
    %4758 = vst.msk [vmem:[#allocation4 + $0x48] sm:$0xff] %vm273, %v4742
    %4759 = vst.msk [vmem:[#allocation4 + $0x50] sm:$0xff] %vm273, %v4743
    %4760 = vst.msk [vmem:[#allocation4 + $0x58] sm:$0xff] %vm273, %v4744
    %4761 = vst.msk [vmem:[#allocation4 + $0x60] sm:$0xff] %vm273, %v4745
    %4762 = vst.msk [vmem:[#allocation4 + $0x68] sm:$0xff] %vm273, %v4746
    %4763 = vst.msk [vmem:[#allocation4 + $0x70] sm:$0xff] %vm273, %v4747
    %4764 = vst.msk [vmem:[#allocation4 + $0x78] sm:$0xff] %vm273, %v4748
    // Predicated region
    $region42: #{_lambda_.1} parent=1 // pred_check
      _
    $region43: #{_lambda_.1} parent=1 // pred_check_branch
      %4766 = sbr.rel (0) target = $region45
    $region44: #{_lambda_.1} parent=1 // pred_region
      %s4768 = ssub.s32 2048, 2048
      %4769 = vsyncadd [#allocation5], %s4768
      %s4770 = sshll.u32 [#allocation4], 4
      %s4771 = int_to_ptr.vmem [resolvable:$true] %s4770
      %4776 = dma.vmem_to_hbm [thread:$0]  %s4771, 2048, %s10, [#allocation5], 128, 128, 8
    $region45: #{_lambda_.1} parent=1 // pred_fallthru
      _
    // Predicated region
    $region46: #{_lambda_.1} parent=1 // pred_check
      _
    $region47: #{_lambda_.1} parent=1 // pred_check_branch
      %4778 = sbr.rel (0) target = $region49
    $region48: #{_lambda_.1} parent=1 // pred_region
      %4779 = dma.done [#allocation5], 2048
    $region49: #{_lambda_.1} parent=1 // pred_fallthru
      _
    %4780 = vsyncpa [#allocation5], 1

</llo_original>
